<compile_context>
chip_gen: v7x
topology: tpu7x:2x2x1
jax: 0.10.0
libtpu: 0.0.40
codegen_flags: <defaults>
</compile_context>

<pallas_src>
import functools

import jax
import jax.numpy as jnp
from jax.experimental import pallas as pl
from jax.experimental.pallas import tpu as pltpu

EPS = 1e-5
_VMEM_LIMIT = 32 * 1024 * 1024  # safe on v5e/v6e (128 MiB phys) and v7x (64 MiB)


def _cparams(n_axes=1):
    return pltpu.CompilerParams(
        dimension_semantics=("parallel",) * n_axes,
        vmem_limit_bytes=_VMEM_LIMIT)


def _round_up(a, b):
    return (a + b - 1) // b * b


def _pick_tm(m_core, cap=512):
    """Row tile for the slab conv kernels: a multiple of 64, at most `cap`."""
    return min(cap, _round_up(m_core, 64))


class _Geom:
    """Padded-slab geometry for one (batch, H, W) feature-map resolution.

    A slab flattens a zero-padded NHWC tensor (N, H+2, Wp, C) into rows
    (N*(H+2)*Wp, C) with Wp = round_up(W+2, 8), so a stride-1 3x3 conv becomes
    nine row-shifted matmuls whose dy shifts are sublane aligned.
    """

    def __init__(self, n, h, w):
        self.n, self.h, self.w = n, h, w
        self.hp = h + 2
        self.wp = _round_up(w + 2, 8)
        self.m_core = n * self.hp * self.wp


def _valid_mask(geom, lead, total):
    """(total, 1) f32 mask: 1.0 at rows that hold valid (non-padding) pixels."""
    m2d = jnp.zeros((geom.hp, geom.wp), jnp.float32)
    m2d = m2d.at[1:geom.h + 1, 1:geom.w + 1].set(1.0)
    m = jnp.tile(m2d.reshape(-1), (geom.n,))
    m = jnp.pad(m, (lead, total - lead - geom.m_core))
    return m.reshape(total, 1)


def _w_to_matrix(w_oihw):
    # (Cout, Cin, 3, 3) -> (3, 3, Cin, Cout) -> (9*Cin, Cout), (kh, kw, cin) rows
    cout, cin = w_oihw.shape[0], w_oihw.shape[1]
    return jnp.transpose(w_oihw, (2, 3, 1, 0)).reshape(9 * cin, cout)


# ----------------------------- Pallas kernels ------------------------------

def _conv3x3_slab_kernel(x_ref, w_ref, mask_ref, sc_ref, bi_ref, y_ref, st_ref,
                         win_ref, *, wp, cin, cout, tm, win_rows, apply_bn):
    """Stride-1 3x3 conv over the flattened, padded batch slab.

    Each grid step produces `tm` consecutive output rows.  The halo window
    (tm + 2*wp + 8 input rows) is fetched once from the resident input block;
    when `apply_bn` is set, the previous layer's BatchNorm + ReLU is applied
    to the window (and padding positions are re-zeroed via `mask_ref`) before
    the nine tap matmuls -- fusing BN1-apply into conv2 so the activation
    between the convs never round-trips through HBM.  Masked per-tile
    (sum, sum^2) BN partials are emitted alongside the bf16 conv output.
    """
    i = pl.program_id(0)
    w0 = pl.multiple_of(i * tm, 8)                     # window start (input rows)

    xwin = x_ref[pl.ds(w0, win_rows), :]               # (win_rows, cin) bf16
    if apply_bn:
        mwin = mask_ref[pl.ds(w0, win_rows), :]        # (win_rows, 1) f32
        a = jnp.maximum(xwin.astype(jnp.float32) * sc_ref[...] + bi_ref[...],
                        0.0)
        xwin = (a * mwin).astype(jnp.bfloat16)
    win_ref[...] = xwin

    acc = jnp.zeros((tm, cout), jnp.float32)
    for dy in range(3):                                # 9 taps, f32 MXU acc
        for dx in range(3):
            t = dy * 3 + dx
            xs = win_ref[dy * wp + dx:dy * wp + dx + tm, :]
            acc = acc + jnp.dot(xs, w_ref[t * cin:(t + 1) * cin, :],
                                preferred_element_type=jnp.float32)

    mo = mask_ref[pl.ds(w0 + wp + 1, tm), :]           # valid-output mask
    s = jnp.sum(acc * mo, axis=0, keepdims=True)
    ss = jnp.sum(acc * acc * mo, axis=0, keepdims=True)
    st_ref[0] = jnp.concatenate([s, ss], axis=0)

    y_ref[...] = acc.astype(y_ref.dtype)


def _matmul_stats_kernel(p_ref, w_ref, y_ref, st_ref):
    """y = patches @ W (bf16 inputs, f32 acc) plus per-tile BN partials."""
    acc = jnp.dot(p_ref[...], w_ref[...], preferred_element_type=jnp.float32)
    s = jnp.sum(acc, axis=0, keepdims=True)
    ss = jnp.sum(acc * acc, axis=0, keepdims=True)
    st_ref[0] = jnp.concatenate([s, ss], axis=0)
    y_ref[...] = acc.astype(y_ref.dtype)


def _bn_add_relu_kernel(y_ref, sc_ref, bi_ref, s_ref, o_ref):
    """BN2 apply + shortcut add + ReLU (bf16 in, f32 math, f32 out)."""
    v = (y_ref[...].astype(jnp.float32) * sc_ref[...] + bi_ref[...]
         + s_ref[...].astype(jnp.float32))
    o_ref[...] = jnp.maximum(v, 0.0).astype(o_ref.dtype)


# ----------------------------- kernel wrappers ------------------------------

def _conv3x3_slab(x_slab, w_mat, mask, scale, bias, *, wp, tm, m_out, apply_bn):
    """Batched stride-1 3x3 conv on a resident padded slab (+ BN partials)."""
    m_in, cin = x_slab.shape
    cout = w_mat.shape[1]
    win_rows = tm + 2 * wp + 8
    assert tm % 64 == 0 and m_out % tm == 0
    assert m_in >= m_out + 2 * wp + 8
    grid = m_out // tm
    kern = functools.partial(_conv3x3_slab_kernel, wp=wp, cin=cin, cout=cout,
                             tm=tm, win_rows=win_rows, apply_bn=apply_bn)
    cost = pl.CostEstimate(
        flops=2 * m_out * 9 * cin * cout, transcendentals=0,
        bytes_accessed=(x_slab.size * 2 + w_mat.size * 2 + mask.size * 4
                        + m_out * cout * 2))
    return pl.pallas_call(
        kern,
        grid=(grid,),
        in_specs=[pl.BlockSpec((m_in, cin), lambda i: (0, 0)),      # resident
                  pl.BlockSpec((9 * cin, cout), lambda i: (0, 0)),  # resident
                  pl.BlockSpec((m_in, 1), lambda i: (0, 0)),        # resident
                  pl.BlockSpec((1, cin), lambda i: (0, 0)),
                  pl.BlockSpec((1, cin), lambda i: (0, 0))],
        out_specs=(pl.BlockSpec((tm, cout), lambda i: (i, 0)),
                   pl.BlockSpec((1, 2, cout), lambda i: (i, 0, 0))),
        out_shape=(jax.ShapeDtypeStruct((m_out, cout), jnp.bfloat16),
                   jax.ShapeDtypeStruct((grid, 2, cout), jnp.float32)),
        scratch_shapes=[pltpu.VMEM((win_rows, cin), jnp.bfloat16)],
        compiler_params=_cparams(1),
        cost_estimate=cost,
    )(x_slab, w_mat, mask, scale, bias)


def _conv_im2col(patches, w_mat):
    """Tiled (M, K) @ (K, Cout) with BN partials (stride-2 conv1 fallback)."""
    m, k = patches.shape
    cout = w_mat.shape[1]
    tm = min(512, _round_up(m, 8))
    m_pad = _round_up(m, tm)
    if m_pad != m:
        patches = jnp.pad(patches, ((0, m_pad - m), (0, 0)))
    grid = m_pad // tm
    cost = pl.CostEstimate(
        flops=2 * m_pad * k * cout, transcendentals=0,
        bytes_accessed=patches.size * 2 + w_mat.size * 2 + m_pad * cout * 2)
    y, st = pl.pallas_call(
        _matmul_stats_kernel,
        grid=(grid,),
        in_specs=[pl.BlockSpec((tm, k), lambda i: (i, 0)),
                  pl.BlockSpec((k, cout), lambda i: (0, 0))],
        out_specs=(pl.BlockSpec((tm, cout), lambda i: (i, 0)),
                   pl.BlockSpec((1, 2, cout), lambda i: (i, 0, 0))),
        out_shape=(jax.ShapeDtypeStruct((m_pad, cout), jnp.bfloat16),
                   jax.ShapeDtypeStruct((grid, 2, cout), jnp.float32)),
        compiler_params=_cparams(1),
        cost_estimate=cost,
    )(patches, w_mat)
    return y[:m], st


def _bn_add_relu(y, scale, bias, short, *, tm):
    """out = relu(y*scale + bias + short), tiled over slab rows."""
    m, c = y.shape
    assert m % tm == 0
    grid = m // tm
    row = pl.BlockSpec((tm, c), lambda i: (i, 0))
    vec = pl.BlockSpec((1, c), lambda i: (0, 0))
    return pl.pallas_call(
        _bn_add_relu_kernel,
        grid=(grid,),
        in_specs=[row, vec, vec, row],
        out_specs=row,
        out_shape=jax.ShapeDtypeStruct((m, c), jnp.float32),
        compiler_params=_cparams(1),
    )(y, scale.reshape(1, -1).astype(jnp.float32),
      bias.reshape(1, -1).astype(jnp.float32), short)


# ----------------------------- JAX-side glue --------------------------------

def _im2col_s2(x_nhwc):
    """3x3, stride-2, pad-1 im2col (only for the downsampling conv1)."""
    n, h, w, c = x_nhwc.shape
    ho, wo = h // 2, w // 2
    xp = jnp.pad(x_nhwc, ((0, 0), (1, 1), (1, 1), (0, 0)))
    cols = []
    for dy in range(3):
        for dx in range(3):
            cols.append(xp[:, dy:dy + 2 * ho - 1:2, dx:dx + 2 * wo - 1:2, :])
    return jnp.concatenate(cols, axis=-1).reshape(n * ho * wo, 9 * c)


def _bn_scale_bias(stats, count, gamma, beta):
    """Reduce per-tile (sum, sum^2) partials -> train-mode BN (scale, bias)."""
    s = jnp.sum(stats[:, 0, :], axis=0)
    ss = jnp.sum(stats[:, 1, :], axis=0)
    mean = s / count
    var = jnp.maximum(ss / count - mean * mean, 0.0)
    scale = gamma.reshape(-1) * jax.lax.rsqrt(var + EPS)
    bias = beta.reshape(-1) - mean * scale
    return scale.astype(jnp.float32), bias.astype(jnp.float32)


def basic_block_forward(x_nchw, params, *, in_planes, planes, stride):
    """Pallas BasicBlock.forward (option 'A' shortcut, batch-stats BN)."""
    n, cin, h, w = x_nchw.shape
    assert cin == in_planes and h % stride == 0 and w % stride == 0
    x_nhwc = jnp.transpose(x_nchw, (0, 2, 3, 1)).astype(jnp.float32)

    w1 = _w_to_matrix(params["w1"]).astype(jnp.bfloat16)
    w2 = _w_to_matrix(params["w2"]).astype(jnp.bfloat16)

    ho, wo = h // stride, w // stride
    g = _Geom(n, ho, wo)                 # slab geometry at the output resolution
    tm = _pick_tm(g.m_core)
    m2 = _round_up(g.m_core, tm)         # rows covered by conv2 / bn2 grids
    lead1 = g.wp + 1                     # rows before slab row 0 in y1
    count = n * ho * wo                  # valid pixels per channel (BN count)

    # ---------------- conv1 + BN1 partial stats ----------------------------
    if stride == 1:
        m1 = _round_up(m2 + 2 * g.wp + 8, tm)     # y1 rows (written by conv1 grid)
        lead0 = 2 * (g.wp + 1)
        m0 = _round_up(m1 + 2 * g.wp + 8, 8)
        xp = jnp.pad(x_nhwc, ((0, 0), (1, 1), (1, g.wp - w - 1), (0, 0)))
        x0 = jnp.pad(xp.reshape(g.m_core, cin),
                     ((lead0, m0 - lead0 - g.m_core), (0, 0))).astype(jnp.bfloat16)
        mask0 = _valid_mask(g, lead0, m0)
        one = jnp.ones((1, cin), jnp.float32)
        zero = jnp.zeros((1, cin), jnp.float32)
        y1, st1 = _conv3x3_slab(x0, w1, mask0, one, zero, wp=g.wp, tm=tm,
                                m_out=m1, apply_bn=False)
    else:
        # TODO(synk): replace this tiny XLA-side im2col with in-kernel
        #             stride-2 tap reads.
        m1 = _round_up(m2 + 2 * g.wp + 8, 8)
        patches = _im2col_s2(x_nhwc.astype(jnp.bfloat16))
        y1d, st1 = _conv_im2col(patches, w1)
        y1s = y1d.reshape(n, ho, wo, planes)
        y1s = jnp.pad(y1s, ((0, 0), (1, 1), (1, g.wp - wo - 1), (0, 0)))
        y1 = jnp.pad(y1s.reshape(g.m_core, planes),
                     ((lead1, m1 - lead1 - g.m_core), (0, 0)))
    scale1, bias1 = _bn_scale_bias(st1, count, params["g1"], params["b1"])

    # -------- conv2 with fused BN1-apply + ReLU prologue + BN2 stats --------
    mask1 = _valid_mask(g, lead1, m1)
    y2, st2 = _conv3x3_slab(y1, w2, mask1, scale1.reshape(1, -1),
                            bias1.reshape(1, -1), wp=g.wp, tm=tm,
                            m_out=m2, apply_bn=True)
    scale2, bias2 = _bn_scale_bias(st2, count, params["g2"], params["b2"])

    # ---------------- option 'A' shortcut in the output slab layout ---------
    if stride != 1 or in_planes != planes:
        sc = x_nhwc[:, ::2, ::2, :]
        padc = planes // 4
        sc = jnp.pad(sc, ((0, 0), (0, 0), (0, 0), (padc, padc)))
    else:
        sc = x_nhwc
    scp = jnp.pad(sc, ((0, 0), (1, 1), (1, g.wp - wo - 1), (0, 0)))
    short = jnp.pad(scp.reshape(g.m_core, planes),
                    ((0, m2 - g.m_core), (0, 0))).astype(jnp.bfloat16)

    # ---------------- BN2 apply + shortcut add + ReLU -----------------------
    out2 = _bn_add_relu(y2, scale2, bias2, short, tm=tm)     # (m2, planes) f32

    # ---------------- slab -> NCHW ------------------------------------------
    out = out2[:g.m_core].reshape(n, g.hp, g.wp, planes)[:, 1:ho + 1, 1:wo + 1, :]
    return jnp.transpose(out, (0, 3, 1, 2))


# ----------------------------- reference (plain JAX) ------------------------

def _reference_forward(x, params, *, in_planes, planes, stride):
    def conv(x, w, s):
        dn = jax.lax.conv_dimension_numbers(x.shape, w.shape,
                                            ("NCHW", "OIHW", "NCHW"))
        return jax.lax.conv_general_dilated(x, w, (s, s), ((1, 1), (1, 1)),
                                            dimension_numbers=dn)

    def bn(y, g, b):
        mean = y.mean(axis=(0, 2, 3), keepdims=True)
        var = jnp.square(y - mean).mean(axis=(0, 2, 3), keepdims=True)
        return ((y - mean) * jax.lax.rsqrt(var + EPS)
                * g.reshape(1, -1, 1, 1) + b.reshape(1, -1, 1, 1))

    out = jnp.maximum(bn(conv(x, params["w1"], stride),
                         params["g1"], params["b1"]), 0.0)
    out = bn(conv(out, params["w2"], 1), params["g2"], params["b2"])
    if stride != 1 or in_planes != planes:
        sc = x[:, :, ::2, ::2]
        pad = planes // 4
        sc = jnp.pad(sc, ((0, 0), (pad, pad), (0, 0), (0, 0)))
    else:
        sc = x
    return jnp.maximum(out + sc, 0.0)


# ----------------------------- main -----------------------------------------

if __name__ == "__main__":
    key = jax.random.PRNGKey(0)

    def make_params(k, in_planes, planes):
        k1, k2, kg1, kb1, kg2, kb2 = jax.random.split(k, 6)
        return {
            "w1": 0.1 * jax.random.normal(k1, (planes, in_planes, 3, 3),
                                          jnp.float32),
            "w2": 0.1 * jax.random.normal(k2, (planes, planes, 3, 3),
                                          jnp.float32),
            "g1": 1.0 + 0.1 * jax.random.normal(kg1, (1, planes), jnp.float32),
            "b1": 0.1 * jax.random.normal(kb1, (1, planes), jnp.float32),
            "g2": 1.0 + 0.1 * jax.random.normal(kg2, (1, planes), jnp.float32),
            "b2": 0.1 * jax.random.normal(kb2, (1, planes), jnp.float32),
        }

    n, h, w = 2, 16, 16
    configs = [
        dict(name="downsample", in_planes=16, planes=32, stride=2),
        dict(name="identity", in_planes=16, planes=16, stride=1),
    ]

    for i, cfg in enumerate(configs):
        kx, kp = jax.random.split(jax.random.fold_in(key, i))
        x = jax.random.normal(kx, (n, cfg["in_planes"], h, w), jnp.float32)
        params = make_params(kp, cfg["in_planes"], cfg["planes"])

        fwd = jax.jit(functools.partial(basic_block_forward,
                                        in_planes=cfg["in_planes"],
                                        planes=cfg["planes"],
                                        stride=cfg["stride"]))
        out = jax.block_until_ready(fwd(x, params))

        ref = _reference_forward(x, params, in_planes=cfg["in_planes"],
                                 planes=cfg["planes"], stride=cfg["stride"])
        assert out.shape == ref.shape, (out.shape, ref.shape)
        rel = jnp.linalg.norm(out - ref) / (jnp.linalg.norm(ref) + 1e-6)
        max_abs = jnp.max(jnp.abs(out - ref))
        # bf16 MXU inputs + bf16 inter-conv activation -> bf16-level tolerance
        assert rel < 3e-2 and max_abs < 0.25, (cfg["name"], float(rel),
                                               float(max_abs))

    print("KERNEL_OK")
</pallas_src>

<mosaic_0001>
module attributes {stable_mosaic.version = 11 : i64} {
  func.func @_matmul_stats_kernel(%arg0: i32, %arg1: memref<128x144xbf16, #tpu.memory_space<vmem>>, %arg2: memref<144x32xbf16, #tpu.memory_space<vmem>>, %arg3: memref<128x32xbf16, #tpu.memory_space<vmem>>, %arg4: memref<1x2x32xf32, #tpu.memory_space<vmem>>) attributes {dimension_semantics = [#tpu.dimension_semantics<parallel>], iteration_bounds = array<i64: 1>, scalar_prefetch = 0 : i64, scratch_operands = 0 : i64, tpu.core_type = #tpu.core_type<tc>, window_params = [{transform_indices = @transform_0, window_bounds = array<i64: 128, 144>}, {pipeline_mode = #tpu.pipeline_mode<synchronous>, transform_indices = @transform_1, window_bounds = array<i64: 144, 32>}, {transform_indices = @transform_2, window_bounds = array<i64: 128, 32>}, {transform_indices = @transform_3, window_bounds = array<i64: 1, 2, 32>}]} {
    %c0 = arith.constant 0 : index
    %c0_0 = arith.constant 0 : index
    %0 = vector.load %arg1[%c0, %c0_0] : memref<128x144xbf16, #tpu.memory_space<vmem>>, vector<128x144xbf16>
    %c0_1 = arith.constant 0 : index
    %c0_2 = arith.constant 0 : index
    %1 = vector.load %arg2[%c0_1, %c0_2] : memref<144x32xbf16, #tpu.memory_space<vmem>>, vector<144x32xbf16>
    %cst = arith.constant dense<0.000000e+00> : vector<128x32xf32>
    %2 = tpu.matmul %0, %1, %cst {dimension_numbers = #tpu.dot_dimension_numbers<[1], [0], [0], [1], [0, 0, 1, 1], [], []>} : vector<128x144xbf16>, vector<144x32xbf16>, vector<128x32xf32> -> vector<128x32xf32>
    %cst_3 = arith.constant dense<0.000000e+00> : vector<32xf32>
    %3 = vector.multi_reduction <add>, %2, %cst_3 [0] : vector<128x32xf32> to vector<32xf32>
    %4 = vector.shape_cast %3 : vector<32xf32> to vector<1x32xf32>
    %5 = arith.mulf %2, %2 : vector<128x32xf32>
    %cst_4 = arith.constant dense<0.000000e+00> : vector<32xf32>
    %6 = vector.multi_reduction <add>, %5, %cst_4 [0] : vector<128x32xf32> to vector<32xf32>
    %7 = vector.shape_cast %6 : vector<32xf32> to vector<1x32xf32>
    %8 = tpu.concatenate %4, %7 in 0 : vector<1x32xf32>, vector<1x32xf32> -> vector<2x32xf32>
    %c0_5 = arith.constant 0 : index
    %c0_6 = arith.constant 0 : index
    %c0_7 = arith.constant 0 : index
    %9 = vector.load %arg4[%c0_5, %c0_6, %c0_7] : memref<1x2x32xf32, #tpu.memory_space<vmem>>, vector<1x2x32xf32>
    %10 = vector.shape_cast %9 : vector<1x2x32xf32> to vector<2x32xf32>
    %11 = vector.shape_cast %8 : vector<2x32xf32> to vector<1x2x32xf32>
    tpu.vector_store %arg4[%c0_5, %c0_6, %c0_7], %11 {strides = array<i32>} : memref<1x2x32xf32, #tpu.memory_space<vmem>>, vector<1x2x32xf32>,
    %12 = arith.truncf %2 : vector<128x32xf32> to vector<128x32xbf16>
    %c0_8 = arith.constant 0 : index
    %c0_9 = arith.constant 0 : index
    %13 = vector.load %arg3[%c0_8, %c0_9] : memref<128x32xbf16, #tpu.memory_space<vmem>>, vector<128x32xbf16>
    tpu.vector_store %arg3[%c0_8, %c0_9], %12 {strides = array<i32>} : memref<128x32xbf16, #tpu.memory_space<vmem>>, vector<128x32xbf16>,
    return
  }
  func.func @transform_0(%arg0: i32) -> (i32, i32) {
    %c0_i32 = arith.constant 0 : i32
    %c0_i32_0 = arith.constant 0 : i32
    return %arg0, %c0_i32 : i32, i32
  }
  func.func @transform_1(%arg0: i32) -> (i32, i32) {
    %c0_i32 = arith.constant 0 : i32
    %c0_i32_0 = arith.constant 0 : i32
    %c0_i32_1 = arith.constant 0 : i32
    return %c0_i32, %c0_i32_0 : i32, i32
  }
  func.func @transform_2(%arg0: i32) -> (i32, i32) {
    %c0_i32 = arith.constant 0 : i32
    %c0_i32_0 = arith.constant 0 : i32
    return %arg0, %c0_i32 : i32, i32
  }
  func.func @transform_3(%arg0: i32) -> (i32, i32, i32) {
    %c0_i32 = arith.constant 0 : i32
    %c0_i32_0 = arith.constant 0 : i32
    %c0_i32_1 = arith.constant 0 : i32
    return %arg0, %c0_i32, %c0_i32_0 : i32, i32, i32
  }
}

module attributes {stable_mosaic.version = 11 : i64} {
  func.func @_conv3x3_slab_kernel(%arg0: i32, %arg1: memref<360x32xbf16, #tpu.memory_space<vmem>>, %arg2: memref<288x32xbf16, #tpu.memory_space<vmem>>, %arg3: memref<360x1xf32, #tpu.memory_space<vmem>>, %arg4: memref<1x32xf32, #tpu.memory_space<vmem>>, %arg5: memref<1x32xf32, #tpu.memory_space<vmem>>, %arg6: memref<320x32xbf16, #tpu.memory_space<vmem>>, %arg7: memref<1x2x32xf32, #tpu.memory_space<vmem>>, %arg8: memref<360x32xbf16, #tpu.memory_space<vmem>>) attributes {dimension_semantics = [#tpu.dimension_semantics<parallel>], iteration_bounds = array<i64: 1>, scalar_prefetch = 0 : i64, scratch_operands = 1 : i64, tpu.core_type = #tpu.core_type<tc>, window_params = [{pipeline_mode = #tpu.pipeline_mode<synchronous>, transform_indices = @transform_0, window_bounds = array<i64: 360, 32>}, {pipeline_mode = #tpu.pipeline_mode<synchronous>, transform_indices = @transform_1, window_bounds = array<i64: 288, 32>}, {pipeline_mode = #tpu.pipeline_mode<synchronous>, transform_indices = @transform_2, window_bounds = array<i64: 360, 1>}, {pipeline_mode = #tpu.pipeline_mode<synchronous>, transform_indices = @transform_3, window_bounds = array<i64: 1, 32>}, {pipeline_mode = #tpu.pipeline_mode<synchronous>, transform_indices = @transform_4, window_bounds = array<i64: 1, 32>}, {transform_indices = @transform_5, window_bounds = array<i64: 320, 32>}, {transform_indices = @transform_6, window_bounds = array<i64: 1, 2, 32>}]} {
    %c320_i32 = arith.constant 320 : i32
    %0 = arith.muli %arg0, %c320_i32 : i32
    %1 = tpu.assume_multiple %0, 8 : i32
    %2 = arith.index_cast %1 : i32 to index
    %c0 = arith.constant 0 : index
    %3 = vector.load %arg1[%2, %c0] : memref<360x32xbf16, #tpu.memory_space<vmem>>, vector<360x32xbf16>
    %4 = arith.index_cast %1 : i32 to index
    %c0_0 = arith.constant 0 : index
    %5 = vector.load %arg3[%4, %c0_0] : memref<360x1xf32, #tpu.memory_space<vmem>>, vector<360x1xf32>
    %6 = arith.extf %3 : vector<360x32xbf16> to vector<360x32xf32>
    %c0_1 = arith.constant 0 : index
    %c0_2 = arith.constant 0 : index
    %7 = vector.load %arg4[%c0_1, %c0_2] : memref<1x32xf32, #tpu.memory_space<vmem>>, vector<1x32xf32>
    %8 = vector.broadcast %7 : vector<1x32xf32> to vector<360x32xf32>
    %9 = arith.mulf %6, %8 : vector<360x32xf32>
    %c0_3 = arith.constant 0 : index
    %c0_4 = arith.constant 0 : index
    %10 = vector.load %arg5[%c0_3, %c0_4] : memref<1x32xf32, #tpu.memory_space<vmem>>, vector<1x32xf32>
    %11 = vector.broadcast %10 : vector<1x32xf32> to vector<360x32xf32>
    %12 = arith.addf %9, %11 : vector<360x32xf32>
    %cst = arith.constant 0.000000e+00 : f32
    %13 = vector.broadcast %cst : f32 to vector<360x32xf32>
    %14 = arith.maximumf %12, %13 : vector<360x32xf32>
    %15 = vector.broadcast %5 : vector<360x1xf32> to vector<360x32xf32>
    %16 = arith.mulf %14, %15 : vector<360x32xf32>
    %17 = arith.truncf %16 : vector<360x32xf32> to vector<360x32xbf16>
    %c0_5 = arith.constant 0 : index
    %c0_6 = arith.constant 0 : index
    %18 = vector.load %arg8[%c0_5, %c0_6] : memref<360x32xbf16, #tpu.memory_space<vmem>>, vector<360x32xbf16>
    tpu.vector_store %arg8[%c0_5, %c0_6], %17 {strides = array<i32>} : memref<360x32xbf16, #tpu.memory_space<vmem>>, vector<360x32xbf16>,
    %cst_7 = arith.constant 0.000000e+00 : f32
    %19 = vector.broadcast %cst_7 : f32 to vector<320x32xf32>
    %c0_8 = arith.constant 0 : index
    %c0_9 = arith.constant 0 : index
    %20 = vector.load %arg8[%c0_8, %c0_9] : memref<360x32xbf16, #tpu.memory_space<vmem>>, vector<320x32xbf16>
    %c0_10 = arith.constant 0 : index
    %c0_11 = arith.constant 0 : index
    %21 = vector.load %arg2[%c0_10, %c0_11] : memref<288x32xbf16, #tpu.memory_space<vmem>>, vector<32x32xbf16>
    %cst_12 = arith.constant dense<0.000000e+00> : vector<320x32xf32>
    %22 = tpu.matmul %20, %21, %cst_12 {dimension_numbers = #tpu.dot_dimension_numbers<[1], [0], [0], [1], [0, 0, 1, 1], [], []>} : vector<320x32xbf16>, vector<32x32xbf16>, vector<320x32xf32> -> vector<320x32xf32>
    %23 = arith.addf %19, %22 : vector<320x32xf32>
    %c1 = arith.constant 1 : index
    %c0_13 = arith.constant 0 : index
    %24 = vector.load %arg8[%c1, %c0_13] : memref<360x32xbf16, #tpu.memory_space<vmem>>, vector<320x32xbf16>
    %c32 = arith.constant 32 : index
    %c0_14 = arith.constant 0 : index
    %25 = vector.load %arg2[%c32, %c0_14] : memref<288x32xbf16, #tpu.memory_space<vmem>>, vector<32x32xbf16>
    %cst_15 = arith.constant dense<0.000000e+00> : vector<320x32xf32>
    %26 = tpu.matmul %24, %25, %cst_15 {dimension_numbers = #tpu.dot_dimension_numbers<[1], [0], [0], [1], [0, 0, 1, 1], [], []>} : vector<320x32xbf16>, vector<32x32xbf16>, vector<320x32xf32> -> vector<320x32xf32>
    %27 = arith.addf %23, %26 : vector<320x32xf32>
    %c2 = arith.constant 2 : index
    %c0_16 = arith.constant 0 : index
    %28 = vector.load %arg8[%c2, %c0_16] : memref<360x32xbf16, #tpu.memory_space<vmem>>, vector<320x32xbf16>
    %c64 = arith.constant 64 : index
    %c0_17 = arith.constant 0 : index
    %29 = vector.load %arg2[%c64, %c0_17] : memref<288x32xbf16, #tpu.memory_space<vmem>>, vector<32x32xbf16>
    %cst_18 = arith.constant dense<0.000000e+00> : vector<320x32xf32>
    %30 = tpu.matmul %28, %29, %cst_18 {dimension_numbers = #tpu.dot_dimension_numbers<[1], [0], [0], [1], [0, 0, 1, 1], [], []>} : vector<320x32xbf16>, vector<32x32xbf16>, vector<320x32xf32> -> vector<320x32xf32>
    %31 = arith.addf %27, %30 : vector<320x32xf32>
    %c16 = arith.constant 16 : index
    %c0_19 = arith.constant 0 : index
    %32 = vector.load %arg8[%c16, %c0_19] : memref<360x32xbf16, #tpu.memory_space<vmem>>, vector<320x32xbf16>
    %c96 = arith.constant 96 : index
    %c0_20 = arith.constant 0 : index
    %33 = vector.load %arg2[%c96, %c0_20] : memref<288x32xbf16, #tpu.memory_space<vmem>>, vector<32x32xbf16>
    %cst_21 = arith.constant dense<0.000000e+00> : vector<320x32xf32>
    %34 = tpu.matmul %32, %33, %cst_21 {dimension_numbers = #tpu.dot_dimension_numbers<[1], [0], [0], [1], [0, 0, 1, 1], [], []>} : vector<320x32xbf16>, vector<32x32xbf16>, vector<320x32xf32> -> vector<320x32xf32>
    %35 = arith.addf %31, %34 : vector<320x32xf32>
    %c17 = arith.constant 17 : index
    %c0_22 = arith.constant 0 : index
    %36 = vector.load %arg8[%c17, %c0_22] : memref<360x32xbf16, #tpu.memory_space<vmem>>, vector<320x32xbf16>
    %c128 = arith.constant 128 : index
    %c0_23 = arith.constant 0 : index
    %37 = vector.load %arg2[%c128, %c0_23] : memref<288x32xbf16, #tpu.memory_space<vmem>>, vector<32x32xbf16>
    %cst_24 = arith.constant dense<0.000000e+00> : vector<320x32xf32>
    %38 = tpu.matmul %36, %37, %cst_24 {dimension_numbers = #tpu.dot_dimension_numbers<[1], [0], [0], [1], [0, 0, 1, 1], [], []>} : vector<320x32xbf16>, vector<32x32xbf16>, vector<320x32xf32> -> vector<320x32xf32>
    %39 = arith.addf %35, %38 : vector<320x32xf32>
    %c18 = arith.constant 18 : index
    %c0_25 = arith.constant 0 : index
    %40 = vector.load %arg8[%c18, %c0_25] : memref<360x32xbf16, #tpu.memory_space<vmem>>, vector<320x32xbf16>
    %c160 = arith.constant 160 : index
    %c0_26 = arith.constant 0 : index
    %41 = vector.load %arg2[%c160, %c0_26] : memref<288x32xbf16, #tpu.memory_space<vmem>>, vector<32x32xbf16>
    %cst_27 = arith.constant dense<0.000000e+00> : vector<320x32xf32>
    %42 = tpu.matmul %40, %41, %cst_27 {dimension_numbers = #tpu.dot_dimension_numbers<[1], [0], [0], [1], [0, 0, 1, 1], [], []>} : vector<320x32xbf16>, vector<32x32xbf16>, vector<320x32xf32> -> vector<320x32xf32>
    %43 = arith.addf %39, %42 : vector<320x32xf32>
    %c32_28 = arith.constant 32 : index
    %c0_29 = arith.constant 0 : index
    %44 = vector.load %arg8[%c32_28, %c0_29] : memref<360x32xbf16, #tpu.memory_space<vmem>>, vector<320x32xbf16>
    %c192 = arith.constant 192 : index
    %c0_30 = arith.constant 0 : index
    %45 = vector.load %arg2[%c192, %c0_30] : memref<288x32xbf16, #tpu.memory_space<vmem>>, vector<32x32xbf16>
    %cst_31 = arith.constant dense<0.000000e+00> : vector<320x32xf32>
    %46 = tpu.matmul %44, %45, %cst_31 {dimension_numbers = #tpu.dot_dimension_numbers<[1], [0], [0], [1], [0, 0, 1, 1], [], []>} : vector<320x32xbf16>, vector<32x32xbf16>, vector<320x32xf32> -> vector<320x32xf32>
    %47 = arith.addf %43, %46 : vector<320x32xf32>
    %c33 = arith.constant 33 : index
    %c0_32 = arith.constant 0 : index
    %48 = vector.load %arg8[%c33, %c0_32] : memref<360x32xbf16, #tpu.memory_space<vmem>>, vector<320x32xbf16>
    %c224 = arith.constant 224 : index
    %c0_33 = arith.constant 0 : index
    %49 = vector.load %arg2[%c224, %c0_33] : memref<288x32xbf16, #tpu.memory_space<vmem>>, vector<32x32xbf16>
    %cst_34 = arith.constant dense<0.000000e+00> : vector<320x32xf32>
    %50 = tpu.matmul %48, %49, %cst_34 {dimension_numbers = #tpu.dot_dimension_numbers<[1], [0], [0], [1], [0, 0, 1, 1], [], []>} : vector<320x32xbf16>, vector<32x32xbf16>, vector<320x32xf32> -> vector<320x32xf32>
    %51 = arith.addf %47, %50 : vector<320x32xf32>
    %c34 = arith.constant 34 : index
    %c0_35 = arith.constant 0 : index
    %52 = vector.load %arg8[%c34, %c0_35] : memref<360x32xbf16, #tpu.memory_space<vmem>>, vector<320x32xbf16>
    %c256 = arith.constant 256 : index
    %c0_36 = arith.constant 0 : index
    %53 = vector.load %arg2[%c256, %c0_36] : memref<288x32xbf16, #tpu.memory_space<vmem>>, vector<32x32xbf16>
    %cst_37 = arith.constant dense<0.000000e+00> : vector<320x32xf32>
    %54 = tpu.matmul %52, %53, %cst_37 {dimension_numbers = #tpu.dot_dimension_numbers<[1], [0], [0], [1], [0, 0, 1, 1], [], []>} : vector<320x32xbf16>, vector<32x32xbf16>, vector<320x32xf32> -> vector<320x32xf32>
    %55 = arith.addf %51, %54 : vector<320x32xf32>
    %c16_i32 = arith.constant 16 : i32
    %56 = arith.addi %1, %c16_i32 : i32
    %c1_i32 = arith.constant 1 : i32
    %57 = arith.addi %56, %c1_i32 : i32
    %58 = arith.index_cast %57 : i32 to index
    %c0_38 = arith.constant 0 : index
    %59 = vector.load %arg3[%58, %c0_38] : memref<360x1xf32, #tpu.memory_space<vmem>>, vector<320x1xf32>
    %60 = vector.broadcast %59 : vector<320x1xf32> to vector<320x32xf32>
    %61 = arith.mulf %55, %60 : vector<320x32xf32>
    %cst_39 = arith.constant dense<0.000000e+00> : vector<32xf32>
    %62 = vector.multi_reduction <add>, %61, %cst_39 [0] : vector<320x32xf32> to vector<32xf32>
    %63 = vector.shape_cast %62 : vector<32xf32> to vector<1x32xf32>
    %64 = arith.mulf %55, %55 : vector<320x32xf32>
    %65 = vector.broadcast %59 : vector<320x1xf32> to vector<320x32xf32>
    %66 = arith.mulf %64, %65 : vector<320x32xf32>
    %cst_40 = arith.constant dense<0.000000e+00> : vector<32xf32>
    %67 = vector.multi_reduction <add>, %66, %cst_40 [0] : vector<320x32xf32> to vector<32xf32>
    %68 = vector.shape_cast %67 : vector<32xf32> to vector<1x32xf32>
    %69 = tpu.concatenate %63, %68 in 0 : vector<1x32xf32>, vector<1x32xf32> -> vector<2x32xf32>
    %c0_41 = arith.constant 0 : index
    %c0_42 = arith.constant 0 : index
    %c0_43 = arith.constant 0 : index
    %70 = vector.load %arg7[%c0_41, %c0_42, %c0_43] : memref<1x2x32xf32, #tpu.memory_space<vmem>>, vector<1x2x32xf32>
    %71 = vector.shape_cast %70 : vector<1x2x32xf32> to vector<2x32xf32>
    %72 = vector.shape_cast %69 : vector<2x32xf32> to vector<1x2x32xf32>
    tpu.vector_store %arg7[%c0_41, %c0_42, %c0_43], %72 {strides = array<i32>} : memref<1x2x32xf32, #tpu.memory_space<vmem>>, vector<1x2x32xf32>,
    %73 = arith.truncf %55 : vector<320x32xf32> to vector<320x32xbf16>
    %c0_44 = arith.constant 0 : index
    %c0_45 = arith.constant 0 : index
    %74 = vector.load %arg6[%c0_44, %c0_45] : memref<320x32xbf16, #tpu.memory_space<vmem>>, vector<320x32xbf16>
    tpu.vector_store %arg6[%c0_44, %c0_45], %73 {strides = array<i32>} : memref<320x32xbf16, #tpu.memory_space<vmem>>, vector<320x32xbf16>,
    return
  }
  func.func @transform_0(%arg0: i32) -> (i32, i32) {
    %c0_i32 = arith.constant 0 : i32
    %c0_i32_0 = arith.constant 0 : i32
    %c0_i32_1 = arith.constant 0 : i32
    return %c0_i32, %c0_i32_0 : i32, i32
  }
  func.func @transform_1(%arg0: i32) -> (i32, i32) {
    %c0_i32 = arith.constant 0 : i32
    %c0_i32_0 = arith.constant 0 : i32
    %c0_i32_1 = arith.constant 0 : i32
    return %c0_i32, %c0_i32_0 : i32, i32
  }
  func.func @transform_2(%arg0: i32) -> (i32, i32) {
    %c0_i32 = arith.constant 0 : i32
    %c0_i32_0 = arith.constant 0 : i32
    %c0_i32_1 = arith.constant 0 : i32
    return %c0_i32, %c0_i32_0 : i32, i32
  }
  func.func @transform_3(%arg0: i32) -> (i32, i32) {
    %c0_i32 = arith.constant 0 : i32
    %c0_i32_0 = arith.constant 0 : i32
    %c0_i32_1 = arith.constant 0 : i32
    return %c0_i32, %c0_i32_0 : i32, i32
  }
  func.func @transform_4(%arg0: i32) -> (i32, i32) {
    %c0_i32 = arith.constant 0 : i32
    %c0_i32_0 = arith.constant 0 : i32
    %c0_i32_1 = arith.constant 0 : i32
    return %c0_i32, %c0_i32_0 : i32, i32
  }
  func.func @transform_5(%arg0: i32) -> (i32, i32) {
    %c0_i32 = arith.constant 0 : i32
    %c0_i32_0 = arith.constant 0 : i32
    return %arg0, %c0_i32 : i32, i32
  }
  func.func @transform_6(%arg0: i32) -> (i32, i32, i32) {
    %c0_i32 = arith.constant 0 : i32
    %c0_i32_0 = arith.constant 0 : i32
    %c0_i32_1 = arith.constant 0 : i32
    return %arg0, %c0_i32, %c0_i32_0 : i32, i32, i32
  }
}

module attributes {stable_mosaic.version = 11 : i64} {
  func.func @_bn_add_relu_kernel(%arg0: i32, %arg1: memref<320x32xbf16, #tpu.memory_space<vmem>>, %arg2: memref<1x32xf32, #tpu.memory_space<vmem>>, %arg3: memref<1x32xf32, #tpu.memory_space<vmem>>, %arg4: memref<320x32xbf16, #tpu.memory_space<vmem>>, %arg5: memref<320x32xf32, #tpu.memory_space<vmem>>) attributes {dimension_semantics = [#tpu.dimension_semantics<parallel>], iteration_bounds = array<i64: 1>, scalar_prefetch = 0 : i64, scratch_operands = 0 : i64, tpu.core_type = #tpu.core_type<tc>, window_params = [{transform_indices = @transform_0, window_bounds = array<i64: 320, 32>}, {pipeline_mode = #tpu.pipeline_mode<synchronous>, transform_indices = @transform_1, window_bounds = array<i64: 1, 32>}, {pipeline_mode = #tpu.pipeline_mode<synchronous>, transform_indices = @transform_2, window_bounds = array<i64: 1, 32>}, {transform_indices = @transform_3, window_bounds = array<i64: 320, 32>}, {transform_indices = @transform_4, window_bounds = array<i64: 320, 32>}]} {
    %c0 = arith.constant 0 : index
    %c0_0 = arith.constant 0 : index
    %0 = vector.load %arg1[%c0, %c0_0] : memref<320x32xbf16, #tpu.memory_space<vmem>>, vector<320x32xbf16>
    %1 = arith.extf %0 : vector<320x32xbf16> to vector<320x32xf32>
    %c0_1 = arith.constant 0 : index
    %c0_2 = arith.constant 0 : index
    %2 = vector.load %arg2[%c0_1, %c0_2] : memref<1x32xf32, #tpu.memory_space<vmem>>, vector<1x32xf32>
    %3 = vector.broadcast %2 : vector<1x32xf32> to vector<320x32xf32>
    %4 = arith.mulf %1, %3 : vector<320x32xf32>
    %c0_3 = arith.constant 0 : index
    %c0_4 = arith.constant 0 : index
    %5 = vector.load %arg3[%c0_3, %c0_4] : memref<1x32xf32, #tpu.memory_space<vmem>>, vector<1x32xf32>
    %6 = vector.broadcast %5 : vector<1x32xf32> to vector<320x32xf32>
    %7 = arith.addf %4, %6 : vector<320x32xf32>
    %c0_5 = arith.constant 0 : index
    %c0_6 = arith.constant 0 : index
    %8 = vector.load %arg4[%c0_5, %c0_6] : memref<320x32xbf16, #tpu.memory_space<vmem>>, vector<320x32xbf16>
    %9 = arith.extf %8 : vector<320x32xbf16> to vector<320x32xf32>
    %10 = arith.addf %7, %9 : vector<320x32xf32>
    %cst = arith.constant 0.000000e+00 : f32
    %11 = vector.broadcast %cst : f32 to vector<320x32xf32>
    %12 = arith.maximumf %10, %11 : vector<320x32xf32>
    %c0_7 = arith.constant 0 : index
    %c0_8 = arith.constant 0 : index
    %13 = vector.load %arg5[%c0_7, %c0_8] : memref<320x32xf32, #tpu.memory_space<vmem>>, vector<320x32xf32>
    tpu.vector_store %arg5[%c0_7, %c0_8], %12 {strides = array<i32>} : memref<320x32xf32, #tpu.memory_space<vmem>>, vector<320x32xf32>,
    return
  }
  func.func @transform_0(%arg0: i32) -> (i32, i32) {
    %c0_i32 = arith.constant 0 : i32
    %c0_i32_0 = arith.constant 0 : i32
    return %arg0, %c0_i32 : i32, i32
  }
  func.func @transform_1(%arg0: i32) -> (i32, i32) {
    %c0_i32 = arith.constant 0 : i32
    %c0_i32_0 = arith.constant 0 : i32
    %c0_i32_1 = arith.constant 0 : i32
    return %c0_i32, %c0_i32_0 : i32, i32
  }
  func.func @transform_2(%arg0: i32) -> (i32, i32) {
    %c0_i32 = arith.constant 0 : i32
    %c0_i32_0 = arith.constant 0 : i32
    %c0_i32_1 = arith.constant 0 : i32
    return %c0_i32, %c0_i32_0 : i32, i32
  }
  func.func @transform_3(%arg0: i32) -> (i32, i32) {
    %c0_i32 = arith.constant 0 : i32
    %c0_i32_0 = arith.constant 0 : i32
    return %arg0, %c0_i32 : i32, i32
  }
  func.func @transform_4(%arg0: i32) -> (i32, i32) {
    %c0_i32 = arith.constant 0 : i32
    %c0_i32_0 = arith.constant 0 : i32
    return %arg0, %c0_i32 : i32, i32
  }
}

</mosaic_0001>

<llo_original>
// kernel: tile.5
$region0: #{tile.5}
  %s0 = inlined_call_operand.vmem [shape: f32[10,16], index: 0, kind: input, shape index: {}]
  %s1 = inlined_call_operand.vmem [shape: f32[160], index: 1, kind: output, shape index: {}]
  $region1: #{tile.5} parent=0
    #allocation0 [shape = 'u8[4096]{0}', space=vmem, size = 0x1000, scoped, tag = 'scoped mem for output reshape']
    %s2 = smov 3
    %v3 = vld [vmem:[%s0] ss:$8 sm:%s2]
    %vm4 = vcmask 130048
    %5 = vst.msk [vmem:[#allocation0] sm:$0x3] %vm4, %v3
    %s6 = scalar_lea.vmem %s0, 7
    %v7 = vld [vmem:[%s6] sm:$0x1]
    %8 = vrot.lane.b32.xlu0 %v7, 112
    %v9 = vpop.permute.xlu0 %8
    %vm10 = vcmask 1048448
    %11 = vst.msk [vmem:[#allocation0] sm:$0x1] %vm10, %v9
    %s12 = scalar_lea.vmem %s0, 6
    %v13 = vld [vmem:[%s12] sm:$0x1]
    %14 = vrot.lane.b32.xlu0 %v13, 96
    %v15 = vpop.permute.xlu0 %14
    %vm16 = vcmask 917248
    %17 = vst.msk [vmem:[#allocation0] sm:$0x1] %vm16, %v15
    %s18 = scalar_lea.vmem %s0, 5
    %v19 = vld [vmem:[%s18] sm:$0x1]
    %20 = vrot.lane.b32.xlu0 %v19, 80
    %v21 = vpop.permute.xlu0 %20
    %vm22 = vcmask 786048
    %23 = vst.msk [vmem:[#allocation0] sm:$0x1] %vm22, %v21
    %s24 = scalar_lea.vmem %s0, 4
    %v25 = vld [vmem:[%s24] sm:$0x1]
    %26 = vrot.lane.b32.xlu0 %v25, 64
    %v27 = vpop.permute.xlu0 %26
    %vm28 = vcmask 654848
    %29 = vst.msk [vmem:[#allocation0] sm:$0x1] %vm28, %v27
    %s30 = scalar_lea.vmem %s0, 3
    %v31 = vld [vmem:[%s30] sm:$0x1]
    %32 = vrot.lane.b32.xlu0 %v31, 48
    %v33 = vpop.permute.xlu0 %32
    %vm34 = vcmask 523648
    %35 = vst.msk [vmem:[#allocation0] sm:$0x1] %vm34, %v33
    %s36 = scalar_lea.vmem %s0, 2
    %v37 = vld [vmem:[%s36] sm:$0x1]
    %38 = vrot.lane.b32.xlu0 %v37, 32
    %v39 = vpop.permute.xlu0 %38
    %vm40 = vcmask 392448
    %41 = vst.msk [vmem:[#allocation0] sm:$0x1] %vm40, %v39
    %s42 = scalar_lea.vmem %s0, 1
    %s43 = smov 3
    %v44 = vld [vmem:[%s42] ss:$8 sm:%s43]
    %45 = vrot.lane.b32.xlu0 %v44, 16
    %v46 = vpop.permute.xlu0 %45
    %vm47 = vcmask 261248
    %48 = vst.msk [vmem:[#allocation0] sm:$0x3] %vm47, %v46
    %s50 = sshllo.u32 0, 2
    %v52 = vld [vmem:[#allocation0] sm:%s50]
    %s53 = sshllo.u32 0, 2
    %54 = vst [vmem:[%s1] sm:%s53] %v52

// kernel: tile.6
$region0: #{tile.6}
  #allocation0 [shape = 's32[1]{0}', space=sflag, size = 0x4, scoped, tag = 'scoped memory for tile.6']
  %s0 = inlined_call_operand.vmem [shape: f32[160], index: 0, kind: input, shape index: {}]
  %s1 = inlined_call_operand.vmem [shape: f32[2,160], index: 1, kind: output, shape index: {}]
  // Predicated region
  $region2: #{tile.6} parent=0 // pred_check
    _
  $region3: #{tile.6} parent=0 // pred_check_branch
    %3 = sbr.rel (0) target = $region5
  $region4: #{tile.6} parent=0 // pred_region
    _
  $region5: #{tile.6} parent=0 // pred_fallthru
    _
  %v4 = vld [vmem:[%s0] ss:$0 sm:$0xff]
  %5 = vst [vmem:[%s1] sm:$0x3] %v4
  %s6 = scalar_lea.vmem %s0, 1
  %v7 = vld [vmem:[%s6] ss:$0 sm:$0xff]
  %s8 = scalar_lea.vmem %s1, 2
  %9 = vst [vmem:[%s8] sm:$0x3] %v7

// kernel: tile.7
$region0: #{tile.7}
  %s0 = inlined_call_operand.vmem [shape: f32[2,160], index: 0, kind: input, shape index: {}]
  %s1 = inlined_call_operand.vmem [shape: f32[320], index: 1, kind: output, shape index: {}]
  $region1: #{tile.7} parent=0
    #allocation0 [shape = 'u8[4096]{0}', space=vmem, size = 0x1000, scoped, tag = 'scoped mem for output reshape']
    #allocation1 [shape = 'u8[8192]{0}', space=vmem, size = 0x2000, scoped, tag = 'scoped mem for input reshape']
    %s3 = sshllo.u32 0, 2
    %s4 = scalar_lea.vmem %s0, 2
    %v5 = vld [vmem:[%s4] sm:%s3]
    %s6 = scalar_lea.vmem [#allocation1], 8
    %7 = vst [vmem:[%s6] sm:%s3] %v5
    %v8 = vld [vmem:[%s0] sm:%s3]
    %9 = vst [vmem:[#allocation1] sm:%s3] %v8
    %s10 = scalar_lea.vmem [#allocation1], 8
    %v11 = vld [vmem:[%s10] sm:$0x1]
    %vm12 = vcmask 261120
    %s13 = scalar_lea.vmem [#allocation0], 1
    %14 = vst.msk [vmem:[%s13] sm:$0x1] %vm12, %v11
    %v15 = vld [vmem:[#allocation1] sm:$0x1]
    %16 = vst [vmem:[#allocation0] sm:$0x1] %v15
    %s17 = scalar_lea.vmem [#allocation1], 1
    %v18 = vld [vmem:[%s17] sm:$0x1]
    %s19 = scalar_lea.vmem [#allocation1], 9
    %v20 = vld [vmem:[%s19] sm:$0x1]
    %vm21 = vcmask 785408
    %v22 = vsel %vm21, %v20, %v18
    %23 = vrot.lane.b32.xlu0 %v22, 32
    %v24 = vpop.permute.xlu0 %23
    %vm25 = vcmask 261120
    %s26 = scalar_lea.vmem [#allocation0], 2
    %27 = vst.msk [vmem:[%s26] sm:$0x1] %vm25, %v24
    %vm28 = vcmask 523520
    %s29 = scalar_lea.vmem [#allocation0], 2
    %30 = vst.msk [vmem:[%s29] sm:$0x1] %vm28, %v24
    %s31 = scalar_lea.vmem [#allocation1], 1
    %v32 = vld [vmem:[%s31] sm:$0x1]
    %33 = vrot.lane.b32.xlu0 %v32, 32
    %v34 = vpop.permute.xlu0 %33
    %vm35 = vcmask 1047808
    %s36 = scalar_lea.vmem [#allocation0], 1
    %37 = vst.msk [vmem:[%s36] sm:$0x1] %vm35, %v34
    %s39 = sshllo.u32 0, 4
    %v41 = vld [vmem:[#allocation0] sm:%s39]
    %s42 = sshllo.u32 0, 4
    %43 = vst [vmem:[%s1] sm:%s42] %v41

// kernel: basic_block_forward.3
$region0: #{basic_block_forward.3}
  #allocation0 [shape = 'u32[]', space=smem, size = 0x4, offset = 0x4, fixed_abs, tag = 'smem constant byte address 0x4 - core index']
  #allocation1 [shape = 'u32[144,128]{1,0:T(1,128)}', space=vmem, size = 0x12000, scoped, tag = 'internal scratch']
  %s0 = inlined_call_operand.vmem [shape: bf16[128,144], index: 0, kind: input, shape index: {}]
  %s1 = inlined_call_operand.vmem [shape: bf16[144,32], index: 1, kind: input, shape index: {}]
  %s2 = inlined_call_operand.vmem [shape: bf16[128,32], index: 2, kind: output, shape index: {0}]
  %s3 = inlined_call_operand.vmem [shape: f32[1,2,32], index: 3, kind: output, shape index: {1}]
  %4 = xla_tuple %s2, %s3
  %s5 = sld [smem:[#allocation0]]
  $region26: #{basic_block_forward.3} parent=0
    _
  %s7 = ssub.s32 1, %s5
  %s8 = scalar_select 0, %s7, %s5
  // Predicated region
  $region2: #{basic_block_forward.3} parent=0 // pred_check
    _
  $region3: #{basic_block_forward.3} parent=0 // pred_check_branch
    %10 = sbr.rel (0) target = $region5
  $region4: #{basic_block_forward.3} parent=0 // pred_region
    _
  $region5: #{basic_block_forward.3} parent=0 // pred_fallthru
    _
  // Predicated region
  $region6: #{basic_block_forward.3} parent=0 // pred_check
    _
  $region7: #{basic_block_forward.3} parent=0 // pred_check_branch
    %12 = sbr.rel (0) target = $region9
  $region8: #{basic_block_forward.3} parent=0 // pred_region
    _
  $region9: #{basic_block_forward.3} parent=0 // pred_fallthru
    _
  %v14 = vld [vmem:[%s0] sm:$0xff]
  %v15 = vld [vmem:[%s0 + $0x8] sm:$0xff]
  %v16 = vld [vmem:[%s0 + $0x10] sm:$0xff]
  %v17 = vld [vmem:[%s0 + $0x18] sm:$0xff]
  %v18 = vld [vmem:[%s0 + $0x20] sm:$0xff]
  %v19 = vld [vmem:[%s0 + $0x28] sm:$0xff]
  %v20 = vld [vmem:[%s0 + $0x30] sm:$0xff]
  %v21 = vld [vmem:[%s0 + $0x38] sm:$0xff]
  %v22 = vld [vmem:[%s0 + $0x40] sm:$0xff]
  %v23 = vld [vmem:[%s0 + $0x48] sm:$0xff]
  %v24 = vld [vmem:[%s0 + $0x50] sm:$0xff]
  %v25 = vld [vmem:[%s0 + $0x58] sm:$0xff]
  %v26 = vld [vmem:[%s0 + $0x60] sm:$0xff]
  %v27 = vld [vmem:[%s0 + $0x68] sm:$0xff]
  %v28 = vld [vmem:[%s0 + $0x70] sm:$0xff]
  %v29 = vld [vmem:[%s0 + $0x78] sm:$0xff]
  %v30 = vld [vmem:[%s1] sm:$0xf]
  %v31 = vld [vmem:[%s1 + $0x4] sm:$0xf]
  %v32 = vld [vmem:[%s1 + $0x8] sm:$0xf]
  %v33 = vld [vmem:[%s1 + $0xc] sm:$0xf]
  %v34 = vld [vmem:[%s1 + $0x10] sm:$0xf]
  %v35 = vld [vmem:[%s1 + $0x14] sm:$0xf]
  %v36 = vld [vmem:[%s1 + $0x18] sm:$0xf]
  %v37 = vld [vmem:[%s1 + $0x1c] sm:$0xf]
  %v38 = vld [vmem:[%s1 + $0x20] sm:$0xf]
  %v39 = vld [vmem:[%s1 + $0x24] sm:$0xf]
  %v40 = vld [vmem:[%s1 + $0x28] sm:$0xf]
  %v41 = vld [vmem:[%s1 + $0x2c] sm:$0xf]
  %v42 = vld [vmem:[%s1 + $0x30] sm:$0xf]
  %v43 = vld [vmem:[%s1 + $0x34] sm:$0xf]
  %v44 = vld [vmem:[%s1 + $0x38] sm:$0xf]
  %v45 = vld [vmem:[%s1 + $0x3c] sm:$0xf]
  %v46 = vld [vmem:[%s1 + $0x40] sm:$0xf]
  %v47 = vld [vmem:[%s1 + $0x44] sm:$0xf]
  %v64 = vunpack.c.l.b16 %v14
  %v65 = vunpack.c.h.b16 %v14
  %v66 = vunpack.c.l.b16 %v15
  %v67 = vunpack.c.h.b16 %v15
  %v68 = vunpack.c.l.b16 %v16
  %v69 = vunpack.c.h.b16 %v16
  %v70 = vunpack.c.l.b16 %v17
  %v71 = vunpack.c.h.b16 %v17
  %v72 = vunpack.c.l.b16 %v18
  %v73 = vunpack.c.h.b16 %v18
  %v74 = vunpack.c.l.b16 %v19
  %v75 = vunpack.c.h.b16 %v19
  %v76 = vunpack.c.l.b16 %v20
  %v77 = vunpack.c.h.b16 %v20
  %v78 = vunpack.c.l.b16 %v21
  %v79 = vunpack.c.h.b16 %v21
  %v80 = vunpack.c.l.b16 %v22
  %v81 = vunpack.c.h.b16 %v22
  %v82 = vunpack.c.l.b16 %v23
  %v83 = vunpack.c.h.b16 %v23
  %v84 = vunpack.c.l.b16 %v24
  %v85 = vunpack.c.h.b16 %v24
  %v86 = vunpack.c.l.b16 %v25
  %v87 = vunpack.c.h.b16 %v25
  %v88 = vunpack.c.l.b16 %v26
  %v89 = vunpack.c.h.b16 %v26
  %v90 = vunpack.c.l.b16 %v27
  %v91 = vunpack.c.h.b16 %v27
  %v92 = vunpack.c.l.b16 %v28
  %v93 = vunpack.c.h.b16 %v28
  %v94 = vunpack.c.l.b16 %v29
  %v95 = vunpack.c.h.b16 %v29
  %v96 = vpack.c.b16 %v66, %v64
  %v97 = vpack.c.b16 %v67, %v65
  %v98 = vpack.c.b16 %v70, %v68
  %v99 = vpack.c.b16 %v71, %v69
  %v100 = vpack.c.b16 %v74, %v72
  %v101 = vpack.c.b16 %v75, %v73
  %v102 = vpack.c.b16 %v78, %v76
  %v103 = vpack.c.b16 %v79, %v77
  %v104 = vpack.c.b16 %v82, %v80
  %v105 = vpack.c.b16 %v83, %v81
  %v106 = vpack.c.b16 %v86, %v84
  %v107 = vpack.c.b16 %v87, %v85
  %v108 = vpack.c.b16 %v90, %v88
  %v109 = vpack.c.b16 %v91, %v89
  %v110 = vpack.c.b16 %v94, %v92
  %v111 = vpack.c.b16 %v95, %v93
  %v138 = vunpack.c.l.b16 %v30
  %v139 = vunpack.c.l.b16 %v31
  %v140 = vunpack.c.l.b16 %v32
  %v141 = vunpack.c.l.b16 %v33
  %v142 = vunpack.c.l.b16 %v34
  %v143 = vunpack.c.l.b16 %v35
  %v144 = vunpack.c.l.b16 %v36
  %v145 = vunpack.c.l.b16 %v37
  %v146 = vunpack.c.l.b16 %v38
  %v147 = vunpack.c.l.b16 %v39
  %v148 = vunpack.c.l.b16 %v40
  %v149 = vunpack.c.l.b16 %v41
  %v150 = vunpack.c.l.b16 %v42
  %v151 = vunpack.c.l.b16 %v43
  %v152 = vunpack.c.l.b16 %v44
  %v153 = vunpack.c.l.b16 %v45
  %v154 = vunpack.c.l.b16 %v46
  %v155 = vunpack.c.l.b16 %v47
  %v156 = vpack.c.b16 %v139, %v138
  %v157 = vpack.c.b16 %v141, %v140
  %v158 = vpack.c.b16 %v143, %v142
  %v159 = vpack.c.b16 %v145, %v144
  %v160 = vpack.c.b16 %v147, %v146
  %v161 = vpack.c.b16 %v149, %v148
  %v162 = vpack.c.b16 %v151, %v150
  %v163 = vpack.c.b16 %v153, %v152
  %v164 = vpack.c.b16 %v155, %v154
  %vm174 = vcmask 130048
  %v176 = vsel %vm174, %v97, 0
  %v179 = vsel %vm174, %v99, 0
  %v182 = vsel %vm174, %v101, 0
  %v185 = vsel %vm174, %v103, 0
  %v188 = vsel %vm174, %v105, 0
  %v191 = vsel %vm174, %v107, 0
  %v194 = vsel %vm174, %v109, 0
  %v197 = vsel %vm174, %v111, 0
  %199 = vmatprep.subr.bf16.mxu0 0
  %200 = vmatpush1.bf16.msra.mxu0 %v156
  %201 = vmatprep.subr.bf16.mxu0 0
  %202 = vmatpush1.bf16.msra.mxu0 %v157
  %203 = vmatprep.subr.bf16.mxu0 0
  %204 = vmatpush1.bf16.msra.mxu0 %v158
  %205 = vmatprep.subr.bf16.mxu0 0
  %206 = vmatpush1.bf16.msra.mxu0 %v159
  %207 = vmatprep.subr.bf16.mxu0 0
  %208 = vmatpush1.bf16.msra.mxu0 %v160
  %209 = vmatprep.subr.bf16.mxu0 0
  %210 = vmatpush1.bf16.msra.mxu0 %v161
  %211 = vmatprep.subr.bf16.mxu0 0
  %212 = vmatpush1.bf16.msra.mxu0 %v162
  %213 = vmatprep.subr.bf16.mxu0 0
  %214 = vmatpush1.bf16.msra.mxu0 %v163
  %215 = vmatprep.subr.bf16.mxu0 0
  %216 = vmatpush1.bf16.msra.mxu0 %v164
  %217 = vmatprep.subr.bf16.mxu0 0
  %218 = vmatpush1.bf16.msra.mxu0 0
  %219 = vmatprep.subr.bf16.mxu0 0
  %220 = vmatpush1.bf16.msra.mxu0 0
  %221 = vmatprep.subr.bf16.mxu0 0
  %222 = vmatpush1.bf16.msra.mxu0 0
  %223 = vmatprep.subr.bf16.mxu0 0
  %224 = vmatpush1.bf16.msra.mxu0 0
  %225 = vmatprep.subr.bf16.mxu0 0
  %226 = vmatpush1.bf16.msra.mxu0 0
  %227 = vmatprep.subr.bf16.mxu0 0
  %228 = vmatpush1.bf16.msra.mxu0 0
  %229 = vmatprep.subr.bf16.mxu0 0
  %230 = vmatpush1.bf16.msra.mxu0 0
  %231 = vmatprep.mubr.bf16.mxu0 %v176
  %232 = vmatmul.mubr.bf16.gmra.mrb[0].mxu0 %v96
  %v233 = vpop.f32.mrb[0].mxu0
  %v234 = vadd.f32 0.0, %v233
  %v235 = vpop.f32.mrb[0].mxu0
  %v236 = vpop.f32.mrb[0].mxu0
  %v237 = vadd.f32 0.0, %v236
  %v238 = vpop.f32.mrb[0].mxu0
  %239 = vmatprep.mubr.bf16.mxu0 %v179
  %240 = vmatmul.mubr.bf16.gmra.mrb[0].mxu0 %v98
  %v241 = vpop.f32.mrb[0].mxu0
  %v242 = vadd.f32 0.0, %v241
  %v243 = vpop.f32.mrb[0].mxu0
  %v244 = vpop.f32.mrb[0].mxu0
  %v245 = vadd.f32 0.0, %v244
  %v246 = vpop.f32.mrb[0].mxu0
  %247 = vmatprep.mubr.bf16.mxu0 %v182
  %248 = vmatmul.mubr.bf16.gmra.mrb[0].mxu0 %v100
  %v249 = vpop.f32.mrb[0].mxu0
  %v250 = vadd.f32 0.0, %v249
  %v251 = vpop.f32.mrb[0].mxu0
  %v252 = vpop.f32.mrb[0].mxu0
  %v253 = vadd.f32 0.0, %v252
  %v254 = vpop.f32.mrb[0].mxu0
  %255 = vmatprep.mubr.bf16.mxu0 %v185
  %256 = vmatmul.mubr.bf16.gmra.mrb[0].mxu0 %v102
  %v257 = vpop.f32.mrb[0].mxu0
  %v258 = vadd.f32 0.0, %v257
  %v259 = vpop.f32.mrb[0].mxu0
  %v260 = vpop.f32.mrb[0].mxu0
  %v261 = vadd.f32 0.0, %v260
  %v262 = vpop.f32.mrb[0].mxu0
  %263 = vmatprep.mubr.bf16.mxu0 %v188
  %264 = vmatmul.mubr.bf16.gmra.mrb[0].mxu0 %v104
  %v265 = vpop.f32.mrb[0].mxu0
  %v266 = vadd.f32 0.0, %v265
  %v267 = vpop.f32.mrb[0].mxu0
  %v268 = vpop.f32.mrb[0].mxu0
  %v269 = vadd.f32 0.0, %v268
  %v270 = vpop.f32.mrb[0].mxu0
  %271 = vmatprep.mubr.bf16.mxu0 %v191
  %272 = vmatmul.mubr.bf16.gmra.mrb[0].mxu0 %v106
  %v273 = vpop.f32.mrb[0].mxu0
  %v274 = vadd.f32 0.0, %v273
  %v275 = vpop.f32.mrb[0].mxu0
  %v276 = vpop.f32.mrb[0].mxu0
  %v277 = vadd.f32 0.0, %v276
  %v278 = vpop.f32.mrb[0].mxu0
  %279 = vmatprep.mubr.bf16.mxu0 %v194
  %280 = vmatmul.mubr.bf16.gmra.mrb[0].mxu0 %v108
  %v281 = vpop.f32.mrb[0].mxu0
  %v282 = vadd.f32 0.0, %v281
  %v283 = vpop.f32.mrb[0].mxu0
  %v284 = vpop.f32.mrb[0].mxu0
  %v285 = vadd.f32 0.0, %v284
  %v286 = vpop.f32.mrb[0].mxu0
  %287 = vmatprep.mubr.bf16.mxu0 %v197
  %288 = vmatmul.mubr.bf16.gmra.mrb[0].mxu0 %v110
  %v289 = vpop.f32.mrb[0].mxu0
  %v290 = vadd.f32 0.0, %v289
  %v291 = vpop.f32.mrb[0].mxu0
  %v292 = vpop.f32.mrb[0].mxu0
  %v293 = vadd.f32 0.0, %v292
  %v294 = vpop.f32.mrb[0].mxu0
  %295 = vdwg.mxu0
  %vm296 = vcmask 261120
  %v297 = vsel %vm296, %v234, 0.0
  %v298 = vsel %vm296, %v237, 0.0
  %v299 = vadd.f32 %v297, %v298
  %v300 = vsel %vm296, %v242, 0.0
  %v301 = vadd.f32 %v299, %v300
  %v302 = vsel %vm296, %v245, 0.0
  %v303 = vadd.f32 %v301, %v302
  %v304 = vsel %vm296, %v250, 0.0
  %v305 = vadd.f32 %v303, %v304
  %v306 = vsel %vm296, %v253, 0.0
  %v307 = vadd.f32 %v305, %v306
  %v308 = vsel %vm296, %v258, 0.0
  %v309 = vadd.f32 %v307, %v308
  %v310 = vsel %vm296, %v261, 0.0
  %v311 = vadd.f32 %v309, %v310
  %v312 = vsel %vm296, %v266, 0.0
  %v313 = vadd.f32 %v311, %v312
  %v314 = vsel %vm296, %v269, 0.0
  %v315 = vadd.f32 %v313, %v314
  %v316 = vsel %vm296, %v274, 0.0
  %v317 = vadd.f32 %v315, %v316
  %v318 = vsel %vm296, %v277, 0.0
  %v319 = vadd.f32 %v317, %v318
  %v320 = vsel %vm296, %v282, 0.0
  %v321 = vadd.f32 %v319, %v320
  %v322 = vsel %vm296, %v285, 0.0
  %v323 = vadd.f32 %v321, %v322
  %v324 = vsel %vm296, %v290, 0.0
  %v325 = vadd.f32 %v323, %v324
  %v326 = vsel %vm296, %v293, 0.0
  %v327 = vadd.f32 %v325, %v326
  %v328 = vrot.slane %v327, 4
  %v329 = vadd.f32 %v327, %v328
  %v330 = vrot.slane %v329, 2
  %v331 = vadd.f32 %v329, %v330
  %v332 = vrot.slane %v331, 1
  %v333 = vadd.f32 %v331, %v332
  %v334 = vmul.f32 %v234, %v234
  %v335 = vmul.f32 %v237, %v237
  %v336 = vmul.f32 %v242, %v242
  %v337 = vmul.f32 %v245, %v245
  %v338 = vmul.f32 %v250, %v250
  %v339 = vmul.f32 %v253, %v253
  %v340 = vmul.f32 %v258, %v258
  %v341 = vmul.f32 %v261, %v261
  %v342 = vmul.f32 %v266, %v266
  %v343 = vmul.f32 %v269, %v269
  %v344 = vmul.f32 %v274, %v274
  %v345 = vmul.f32 %v277, %v277
  %v346 = vmul.f32 %v282, %v282
  %v347 = vmul.f32 %v285, %v285
  %v348 = vmul.f32 %v290, %v290
  %v349 = vmul.f32 %v293, %v293
  %v350 = vsel %vm296, %v334, 0.0
  %v351 = vsel %vm296, %v335, 0.0
  %v352 = vadd.f32 %v350, %v351
  %v353 = vsel %vm296, %v336, 0.0
  %v354 = vadd.f32 %v352, %v353
  %v355 = vsel %vm296, %v337, 0.0
  %v356 = vadd.f32 %v354, %v355
  %v357 = vsel %vm296, %v338, 0.0
  %v358 = vadd.f32 %v356, %v357
  %v359 = vsel %vm296, %v339, 0.0
  %v360 = vadd.f32 %v358, %v359
  %v361 = vsel %vm296, %v340, 0.0
  %v362 = vadd.f32 %v360, %v361
  %v363 = vsel %vm296, %v341, 0.0
  %v364 = vadd.f32 %v362, %v363
  %v365 = vsel %vm296, %v342, 0.0
  %v366 = vadd.f32 %v364, %v365
  %v367 = vsel %vm296, %v343, 0.0
  %v368 = vadd.f32 %v366, %v367
  %v369 = vsel %vm296, %v344, 0.0
  %v370 = vadd.f32 %v368, %v369
  %v371 = vsel %vm296, %v345, 0.0
  %v372 = vadd.f32 %v370, %v371
  %v373 = vsel %vm296, %v346, 0.0
  %v374 = vadd.f32 %v372, %v373
  %v375 = vsel %vm296, %v347, 0.0
  %v376 = vadd.f32 %v374, %v375
  %v377 = vsel %vm296, %v348, 0.0
  %v378 = vadd.f32 %v376, %v377
  %v379 = vsel %vm296, %v349, 0.0
  %v380 = vadd.f32 %v378, %v379
  %v381 = vrot.slane %v380, 4
  %v382 = vadd.f32 %v380, %v381
  %v383 = vrot.slane %v382, 2
  %v384 = vadd.f32 %v382, %v383
  %v385 = vrot.slane %v384, 1
  %v386 = vadd.f32 %v384, %v385
  %vm387 = vcmask 1040384
  %v388 = vsel %vm387, %v333, %v386
  %vm389 = vcmask 254976
  %390 = vst.msk [vmem:[%s3] sm:$0x3] %vm389, %v388
  %v391 = vpack.c.bf16 %v237, %v234
  %v392 = vpack.c.bf16 %v245, %v242
  %v393 = vpack.c.bf16 %v253, %v250
  %v394 = vpack.c.bf16 %v261, %v258
  %v395 = vpack.c.bf16 %v269, %v266
  %v396 = vpack.c.bf16 %v277, %v274
  %v397 = vpack.c.bf16 %v285, %v282
  %v398 = vpack.c.bf16 %v293, %v290
  %v407 = vunpack.c.l.b16 %v391
  %v408 = vunpack.c.h.b16 %v391
  %v409 = vunpack.c.l.b16 %v392
  %v410 = vunpack.c.h.b16 %v392
  %v411 = vunpack.c.l.b16 %v393
  %v412 = vunpack.c.h.b16 %v393
  %v413 = vunpack.c.l.b16 %v394
  %v414 = vunpack.c.h.b16 %v394
  %v415 = vunpack.c.l.b16 %v395
  %v416 = vunpack.c.h.b16 %v395
  %v417 = vunpack.c.l.b16 %v396
  %v418 = vunpack.c.h.b16 %v396
  %v419 = vunpack.c.l.b16 %v397
  %v420 = vunpack.c.h.b16 %v397
  %v421 = vunpack.c.l.b16 %v398
  %v422 = vunpack.c.h.b16 %v398
  %v423 = vpack.c.b16 %v407, %v407
  %v424 = vpack.c.b16 %v408, %v408
  %v425 = vpack.c.b16 %v409, %v409
  %v426 = vpack.c.b16 %v410, %v410
  %v427 = vpack.c.b16 %v411, %v411
  %v428 = vpack.c.b16 %v412, %v412
  %v429 = vpack.c.b16 %v413, %v413
  %v430 = vpack.c.b16 %v414, %v414
  %v431 = vpack.c.b16 %v415, %v415
  %v432 = vpack.c.b16 %v416, %v416
  %v433 = vpack.c.b16 %v417, %v417
  %v434 = vpack.c.b16 %v418, %v418
  %v435 = vpack.c.b16 %v419, %v419
  %v436 = vpack.c.b16 %v420, %v420
  %v437 = vpack.c.b16 %v421, %v421
  %v438 = vpack.c.b16 %v422, %v422
  %vm455 = vcmask 257024
  %456 = vst.msk [vmem:[%s2] sm:$0xf] %vm455, %v423
  %457 = vst.msk [vmem:[%s2 + $0x4] sm:$0xf] %vm455, %v424
  %458 = vst.msk [vmem:[%s2 + $0x8] sm:$0xf] %vm455, %v425
  %459 = vst.msk [vmem:[%s2 + $0xc] sm:$0xf] %vm455, %v426
  %460 = vst.msk [vmem:[%s2 + $0x10] sm:$0xf] %vm455, %v427
  %461 = vst.msk [vmem:[%s2 + $0x14] sm:$0xf] %vm455, %v428
  %462 = vst.msk [vmem:[%s2 + $0x18] sm:$0xf] %vm455, %v429
  %463 = vst.msk [vmem:[%s2 + $0x1c] sm:$0xf] %vm455, %v430
  %464 = vst.msk [vmem:[%s2 + $0x20] sm:$0xf] %vm455, %v431
  %465 = vst.msk [vmem:[%s2 + $0x24] sm:$0xf] %vm455, %v432
  %466 = vst.msk [vmem:[%s2 + $0x28] sm:$0xf] %vm455, %v433
  %467 = vst.msk [vmem:[%s2 + $0x2c] sm:$0xf] %vm455, %v434
  %468 = vst.msk [vmem:[%s2 + $0x30] sm:$0xf] %vm455, %v435
  %469 = vst.msk [vmem:[%s2 + $0x34] sm:$0xf] %vm455, %v436
  %470 = vst.msk [vmem:[%s2 + $0x38] sm:$0xf] %vm455, %v437
  %471 = vst.msk [vmem:[%s2 + $0x3c] sm:$0xf] %vm455, %v438
  // Predicated region
  $region10: #{basic_block_forward.3} parent=0 // pred_check
    _
  $region11: #{basic_block_forward.3} parent=0 // pred_check_branch
    %473 = sbr.rel (0) target = $region13
  $region12: #{basic_block_forward.3} parent=0 // pred_region
    _
  $region13: #{basic_block_forward.3} parent=0 // pred_fallthru
    _
  // Predicated region
  $region14: #{basic_block_forward.3} parent=0 // pred_check
    _
  $region15: #{basic_block_forward.3} parent=0 // pred_check_branch
    %475 = sbr.rel (0) target = $region17
  $region16: #{basic_block_forward.3} parent=0 // pred_region
    _
  $region17: #{basic_block_forward.3} parent=0 // pred_fallthru
    _
  // Predicated region
  $region18: #{basic_block_forward.3} parent=0 // pred_check
    _
  $region19: #{basic_block_forward.3} parent=0 // pred_check_branch
    %477 = sbr.rel (0) target = $region21
  $region20: #{basic_block_forward.3} parent=0 // pred_region
    _
  $region21: #{basic_block_forward.3} parent=0 // pred_fallthru
    _
  // Predicated region
  $region22: #{basic_block_forward.3} parent=0 // pred_check
    _
  $region23: #{basic_block_forward.3} parent=0 // pred_check_branch
    %479 = sbr.rel (0) target = $region25
  $region24: #{basic_block_forward.3} parent=0 // pred_region
    _
  $region25: #{basic_block_forward.3} parent=0 // pred_fallthru
    _

// kernel: basic_block_forward.5
$region0: #{basic_block_forward.5}
  #allocation0 [shape = 'u32[]', space=smem, size = 0x4, offset = 0x4, fixed_abs, tag = 'smem constant byte address 0x4 - core index']
  #allocation1 [shape = 'u32[144,128]{1,0:T(1,128)}', space=vmem, size = 0x12000, scoped, tag = 'internal scratch']
  %s0 = inlined_call_operand.vmem [shape: bf16[320,32], index: 0, kind: input, shape index: {}]
  %s1 = inlined_call_operand.vmem [shape: f32[1,32], index: 1, kind: input, shape index: {}]
  %s2 = inlined_call_operand.vmem [shape: f32[1,32], index: 2, kind: input, shape index: {}]
  %s3 = inlined_call_operand.vmem [shape: bf16[320,32], index: 3, kind: input, shape index: {}]
  %s4 = inlined_call_operand.vmem [shape: f32[320,32], index: 4, kind: output, shape index: {}]
  %s5 = sld [smem:[#allocation0]]
  $region26: #{basic_block_forward.5} parent=0
    _
  %s7 = ssub.s32 1, %s5
  %s8 = scalar_select 0, %s7, %s5
  // Predicated region
  $region2: #{basic_block_forward.5} parent=0 // pred_check
    _
  $region3: #{basic_block_forward.5} parent=0 // pred_check_branch
    %10 = sbr.rel (0) target = $region5
  $region4: #{basic_block_forward.5} parent=0 // pred_region
    _
  $region5: #{basic_block_forward.5} parent=0 // pred_fallthru
    _
  // Predicated region
  $region6: #{basic_block_forward.5} parent=0 // pred_check
    _
  $region7: #{basic_block_forward.5} parent=0 // pred_check_branch
    %12 = sbr.rel (0) target = $region9
  $region8: #{basic_block_forward.5} parent=0 // pred_region
    _
  $region9: #{basic_block_forward.5} parent=0 // pred_fallthru
    _
  // Predicated region
  $region10: #{basic_block_forward.5} parent=0 // pred_check
    _
  $region11: #{basic_block_forward.5} parent=0 // pred_check_branch
    %14 = sbr.rel (0) target = $region13
  $region12: #{basic_block_forward.5} parent=0 // pred_region
    _
  $region13: #{basic_block_forward.5} parent=0 // pred_fallthru
    _
  // Predicated region
  $region14: #{basic_block_forward.5} parent=0 // pred_check
    _
  $region15: #{basic_block_forward.5} parent=0 // pred_check_branch
    %16 = sbr.rel (0) target = $region17
  $region16: #{basic_block_forward.5} parent=0 // pred_region
    _
  $region17: #{basic_block_forward.5} parent=0 // pred_fallthru
    _
  %v17 = vld [vmem:[%s0] sm:$0xf]
  %v18 = vld [vmem:[%s0 + $0x4] sm:$0xf]
  %v19 = vld [vmem:[%s0 + $0x8] sm:$0xf]
  %v20 = vld [vmem:[%s0 + $0xc] sm:$0xf]
  %v21 = vld [vmem:[%s0 + $0x10] sm:$0xf]
  %v22 = vld [vmem:[%s0 + $0x14] sm:$0xf]
  %v23 = vld [vmem:[%s0 + $0x18] sm:$0xf]
  %v24 = vld [vmem:[%s0 + $0x1c] sm:$0xf]
  %v25 = vld [vmem:[%s0 + $0x20] sm:$0xf]
  %v26 = vld [vmem:[%s0 + $0x24] sm:$0xf]
  %v27 = vld [vmem:[%s0 + $0x28] sm:$0xf]
  %v28 = vld [vmem:[%s0 + $0x2c] sm:$0xf]
  %v29 = vld [vmem:[%s0 + $0x30] sm:$0xf]
  %v30 = vld [vmem:[%s0 + $0x34] sm:$0xf]
  %v31 = vld [vmem:[%s0 + $0x38] sm:$0xf]
  %v32 = vld [vmem:[%s0 + $0x3c] sm:$0xf]
  %v33 = vld [vmem:[%s0 + $0x40] sm:$0xf]
  %v34 = vld [vmem:[%s0 + $0x44] sm:$0xf]
  %v35 = vld [vmem:[%s0 + $0x48] sm:$0xf]
  %v36 = vld [vmem:[%s0 + $0x4c] sm:$0xf]
  %v37 = vld [vmem:[%s0 + $0x50] sm:$0xf]
  %v38 = vld [vmem:[%s0 + $0x54] sm:$0xf]
  %v39 = vld [vmem:[%s0 + $0x58] sm:$0xf]
  %v40 = vld [vmem:[%s0 + $0x5c] sm:$0xf]
  %v41 = vld [vmem:[%s0 + $0x60] sm:$0xf]
  %v42 = vld [vmem:[%s0 + $0x64] sm:$0xf]
  %v43 = vld [vmem:[%s0 + $0x68] sm:$0xf]
  %v44 = vld [vmem:[%s0 + $0x6c] sm:$0xf]
  %v45 = vld [vmem:[%s0 + $0x70] sm:$0xf]
  %v46 = vld [vmem:[%s0 + $0x74] sm:$0xf]
  %v47 = vld [vmem:[%s0 + $0x78] sm:$0xf]
  %v48 = vld [vmem:[%s0 + $0x7c] sm:$0xf]
  %v49 = vld [vmem:[%s0 + $0x80] sm:$0xf]
  %v50 = vld [vmem:[%s0 + $0x84] sm:$0xf]
  %v51 = vld [vmem:[%s0 + $0x88] sm:$0xf]
  %v52 = vld [vmem:[%s0 + $0x8c] sm:$0xf]
  %v53 = vld [vmem:[%s0 + $0x90] sm:$0xf]
  %v54 = vld [vmem:[%s0 + $0x94] sm:$0xf]
  %v55 = vld [vmem:[%s0 + $0x98] sm:$0xf]
  %v56 = vld [vmem:[%s0 + $0x9c] sm:$0xf]
  %v57 = vunpack.c.l.bf16 %v17
  %v58 = vunpack.c.l.bf16 %v18
  %v59 = vunpack.c.l.bf16 %v19
  %v60 = vunpack.c.l.bf16 %v20
  %v61 = vunpack.c.l.bf16 %v21
  %v62 = vunpack.c.l.bf16 %v22
  %v63 = vunpack.c.l.bf16 %v23
  %v64 = vunpack.c.l.bf16 %v24
  %v65 = vunpack.c.l.bf16 %v25
  %v66 = vunpack.c.l.bf16 %v26
  %v67 = vunpack.c.l.bf16 %v27
  %v68 = vunpack.c.l.bf16 %v28
  %v69 = vunpack.c.l.bf16 %v29
  %v70 = vunpack.c.l.bf16 %v30
  %v71 = vunpack.c.l.bf16 %v31
  %v72 = vunpack.c.l.bf16 %v32
  %v73 = vunpack.c.l.bf16 %v33
  %v74 = vunpack.c.l.bf16 %v34
  %v75 = vunpack.c.l.bf16 %v35
  %v76 = vunpack.c.l.bf16 %v36
  %v77 = vunpack.c.l.bf16 %v37
  %v78 = vunpack.c.l.bf16 %v38
  %v79 = vunpack.c.l.bf16 %v39
  %v80 = vunpack.c.l.bf16 %v40
  %v81 = vunpack.c.l.bf16 %v41
  %v82 = vunpack.c.l.bf16 %v42
  %v83 = vunpack.c.l.bf16 %v43
  %v84 = vunpack.c.l.bf16 %v44
  %v85 = vunpack.c.l.bf16 %v45
  %v86 = vunpack.c.l.bf16 %v46
  %v87 = vunpack.c.l.bf16 %v47
  %v88 = vunpack.c.l.bf16 %v48
  %v89 = vunpack.c.l.bf16 %v49
  %v90 = vunpack.c.l.bf16 %v50
  %v91 = vunpack.c.l.bf16 %v51
  %v92 = vunpack.c.l.bf16 %v52
  %v93 = vunpack.c.l.bf16 %v53
  %v94 = vunpack.c.l.bf16 %v54
  %v95 = vunpack.c.l.bf16 %v55
  %v96 = vunpack.c.l.bf16 %v56
  %v97 = vld [vmem:[%s1] sm:$0x1]
  %v99 = vlaneseq
  %v100 = vshrl.u32 %v99, 7
  %v101 = vsub.s32 0, %v100
  %v102 = vrot.slane %v97, %v101
  %v104 = vmul.f32 %v57, %v102
  %v105 = vmul.f32 %v58, %v102
  %v106 = vmul.f32 %v59, %v102
  %v107 = vmul.f32 %v60, %v102
  %v108 = vmul.f32 %v61, %v102
  %v109 = vmul.f32 %v62, %v102
  %v110 = vmul.f32 %v63, %v102
  %v111 = vmul.f32 %v64, %v102
  %v112 = vmul.f32 %v65, %v102
  %v113 = vmul.f32 %v66, %v102
  %v114 = vmul.f32 %v67, %v102
  %v115 = vmul.f32 %v68, %v102
  %v116 = vmul.f32 %v69, %v102
  %v117 = vmul.f32 %v70, %v102
  %v118 = vmul.f32 %v71, %v102
  %v119 = vmul.f32 %v72, %v102
  %v120 = vmul.f32 %v73, %v102
  %v121 = vmul.f32 %v74, %v102
  %v122 = vmul.f32 %v75, %v102
  %v123 = vmul.f32 %v76, %v102
  %v124 = vmul.f32 %v77, %v102
  %v125 = vmul.f32 %v78, %v102
  %v126 = vmul.f32 %v79, %v102
  %v127 = vmul.f32 %v80, %v102
  %v128 = vmul.f32 %v81, %v102
  %v129 = vmul.f32 %v82, %v102
  %v130 = vmul.f32 %v83, %v102
  %v131 = vmul.f32 %v84, %v102
  %v132 = vmul.f32 %v85, %v102
  %v133 = vmul.f32 %v86, %v102
  %v134 = vmul.f32 %v87, %v102
  %v135 = vmul.f32 %v88, %v102
  %v136 = vmul.f32 %v89, %v102
  %v137 = vmul.f32 %v90, %v102
  %v138 = vmul.f32 %v91, %v102
  %v139 = vmul.f32 %v92, %v102
  %v140 = vmul.f32 %v93, %v102
  %v141 = vmul.f32 %v94, %v102
  %v142 = vmul.f32 %v95, %v102
  %v143 = vmul.f32 %v96, %v102
  %v144 = vld [vmem:[%s2] sm:$0x1]
  %v146 = vlaneseq
  %v147 = vshrl.u32 %v146, 7
  %v148 = vsub.s32 0, %v147
  %v149 = vrot.slane %v144, %v148
  %v151 = vadd.f32 %v104, %v149
  %v152 = vadd.f32 %v105, %v149
  %v153 = vadd.f32 %v106, %v149
  %v154 = vadd.f32 %v107, %v149
  %v155 = vadd.f32 %v108, %v149
  %v156 = vadd.f32 %v109, %v149
  %v157 = vadd.f32 %v110, %v149
  %v158 = vadd.f32 %v111, %v149
  %v159 = vadd.f32 %v112, %v149
  %v160 = vadd.f32 %v113, %v149
  %v161 = vadd.f32 %v114, %v149
  %v162 = vadd.f32 %v115, %v149
  %v163 = vadd.f32 %v116, %v149
  %v164 = vadd.f32 %v117, %v149
  %v165 = vadd.f32 %v118, %v149
  %v166 = vadd.f32 %v119, %v149
  %v167 = vadd.f32 %v120, %v149
  %v168 = vadd.f32 %v121, %v149
  %v169 = vadd.f32 %v122, %v149
  %v170 = vadd.f32 %v123, %v149
  %v171 = vadd.f32 %v124, %v149
  %v172 = vadd.f32 %v125, %v149
  %v173 = vadd.f32 %v126, %v149
  %v174 = vadd.f32 %v127, %v149
  %v175 = vadd.f32 %v128, %v149
  %v176 = vadd.f32 %v129, %v149
  %v177 = vadd.f32 %v130, %v149
  %v178 = vadd.f32 %v131, %v149
  %v179 = vadd.f32 %v132, %v149
  %v180 = vadd.f32 %v133, %v149
  %v181 = vadd.f32 %v134, %v149
  %v182 = vadd.f32 %v135, %v149
  %v183 = vadd.f32 %v136, %v149
  %v184 = vadd.f32 %v137, %v149
  %v185 = vadd.f32 %v138, %v149
  %v186 = vadd.f32 %v139, %v149
  %v187 = vadd.f32 %v140, %v149
  %v188 = vadd.f32 %v141, %v149
  %v189 = vadd.f32 %v142, %v149
  %v190 = vadd.f32 %v143, %v149
  %v191 = vld [vmem:[%s3] sm:$0xf]
  %v192 = vld [vmem:[%s3 + $0x4] sm:$0xf]
  %v193 = vld [vmem:[%s3 + $0x8] sm:$0xf]
  %v194 = vld [vmem:[%s3 + $0xc] sm:$0xf]
  %v195 = vld [vmem:[%s3 + $0x10] sm:$0xf]
  %v196 = vld [vmem:[%s3 + $0x14] sm:$0xf]
  %v197 = vld [vmem:[%s3 + $0x18] sm:$0xf]
  %v198 = vld [vmem:[%s3 + $0x1c] sm:$0xf]
  %v199 = vld [vmem:[%s3 + $0x20] sm:$0xf]
  %v200 = vld [vmem:[%s3 + $0x24] sm:$0xf]
  %v201 = vld [vmem:[%s3 + $0x28] sm:$0xf]
  %v202 = vld [vmem:[%s3 + $0x2c] sm:$0xf]
  %v203 = vld [vmem:[%s3 + $0x30] sm:$0xf]
  %v204 = vld [vmem:[%s3 + $0x34] sm:$0xf]
  %v205 = vld [vmem:[%s3 + $0x38] sm:$0xf]
  %v206 = vld [vmem:[%s3 + $0x3c] sm:$0xf]
  %v207 = vld [vmem:[%s3 + $0x40] sm:$0xf]
  %v208 = vld [vmem:[%s3 + $0x44] sm:$0xf]
  %v209 = vld [vmem:[%s3 + $0x48] sm:$0xf]
  %v210 = vld [vmem:[%s3 + $0x4c] sm:$0xf]
  %v211 = vld [vmem:[%s3 + $0x50] sm:$0xf]
  %v212 = vld [vmem:[%s3 + $0x54] sm:$0xf]
  %v213 = vld [vmem:[%s3 + $0x58] sm:$0xf]
  %v214 = vld [vmem:[%s3 + $0x5c] sm:$0xf]
  %v215 = vld [vmem:[%s3 + $0x60] sm:$0xf]
  %v216 = vld [vmem:[%s3 + $0x64] sm:$0xf]
  %v217 = vld [vmem:[%s3 + $0x68] sm:$0xf]
  %v218 = vld [vmem:[%s3 + $0x6c] sm:$0xf]
  %v219 = vld [vmem:[%s3 + $0x70] sm:$0xf]
  %v220 = vld [vmem:[%s3 + $0x74] sm:$0xf]
  %v221 = vld [vmem:[%s3 + $0x78] sm:$0xf]
  %v222 = vld [vmem:[%s3 + $0x7c] sm:$0xf]
  %v223 = vld [vmem:[%s3 + $0x80] sm:$0xf]
  %v224 = vld [vmem:[%s3 + $0x84] sm:$0xf]
  %v225 = vld [vmem:[%s3 + $0x88] sm:$0xf]
  %v226 = vld [vmem:[%s3 + $0x8c] sm:$0xf]
  %v227 = vld [vmem:[%s3 + $0x90] sm:$0xf]
  %v228 = vld [vmem:[%s3 + $0x94] sm:$0xf]
  %v229 = vld [vmem:[%s3 + $0x98] sm:$0xf]
  %v230 = vld [vmem:[%s3 + $0x9c] sm:$0xf]
  %v231 = vunpack.c.l.bf16 %v191
  %v232 = vunpack.c.l.bf16 %v192
  %v233 = vunpack.c.l.bf16 %v193
  %v234 = vunpack.c.l.bf16 %v194
  %v235 = vunpack.c.l.bf16 %v195
  %v236 = vunpack.c.l.bf16 %v196
  %v237 = vunpack.c.l.bf16 %v197
  %v238 = vunpack.c.l.bf16 %v198
  %v239 = vunpack.c.l.bf16 %v199
  %v240 = vunpack.c.l.bf16 %v200
  %v241 = vunpack.c.l.bf16 %v201
  %v242 = vunpack.c.l.bf16 %v202
  %v243 = vunpack.c.l.bf16 %v203
  %v244 = vunpack.c.l.bf16 %v204
  %v245 = vunpack.c.l.bf16 %v205
  %v246 = vunpack.c.l.bf16 %v206
  %v247 = vunpack.c.l.bf16 %v207
  %v248 = vunpack.c.l.bf16 %v208
  %v249 = vunpack.c.l.bf16 %v209
  %v250 = vunpack.c.l.bf16 %v210
  %v251 = vunpack.c.l.bf16 %v211
  %v252 = vunpack.c.l.bf16 %v212
  %v253 = vunpack.c.l.bf16 %v213
  %v254 = vunpack.c.l.bf16 %v214
  %v255 = vunpack.c.l.bf16 %v215
  %v256 = vunpack.c.l.bf16 %v216
  %v257 = vunpack.c.l.bf16 %v217
  %v258 = vunpack.c.l.bf16 %v218
  %v259 = vunpack.c.l.bf16 %v219
  %v260 = vunpack.c.l.bf16 %v220
  %v261 = vunpack.c.l.bf16 %v221
  %v262 = vunpack.c.l.bf16 %v222
  %v263 = vunpack.c.l.bf16 %v223
  %v264 = vunpack.c.l.bf16 %v224
  %v265 = vunpack.c.l.bf16 %v225
  %v266 = vunpack.c.l.bf16 %v226
  %v267 = vunpack.c.l.bf16 %v227
  %v268 = vunpack.c.l.bf16 %v228
  %v269 = vunpack.c.l.bf16 %v229
  %v270 = vunpack.c.l.bf16 %v230
  %v271 = vadd.f32 %v151, %v231
  %v272 = vadd.f32 %v152, %v232
  %v273 = vadd.f32 %v153, %v233
  %v274 = vadd.f32 %v154, %v234
  %v275 = vadd.f32 %v155, %v235
  %v276 = vadd.f32 %v156, %v236
  %v277 = vadd.f32 %v157, %v237
  %v278 = vadd.f32 %v158, %v238
  %v279 = vadd.f32 %v159, %v239
  %v280 = vadd.f32 %v160, %v240
  %v281 = vadd.f32 %v161, %v241
  %v282 = vadd.f32 %v162, %v242
  %v283 = vadd.f32 %v163, %v243
  %v284 = vadd.f32 %v164, %v244
  %v285 = vadd.f32 %v165, %v245
  %v286 = vadd.f32 %v166, %v246
  %v287 = vadd.f32 %v167, %v247
  %v288 = vadd.f32 %v168, %v248
  %v289 = vadd.f32 %v169, %v249
  %v290 = vadd.f32 %v170, %v250
  %v291 = vadd.f32 %v171, %v251
  %v292 = vadd.f32 %v172, %v252
  %v293 = vadd.f32 %v173, %v253
  %v294 = vadd.f32 %v174, %v254
  %v295 = vadd.f32 %v175, %v255
  %v296 = vadd.f32 %v176, %v256
  %v297 = vadd.f32 %v177, %v257
  %v298 = vadd.f32 %v178, %v258
  %v299 = vadd.f32 %v179, %v259
  %v300 = vadd.f32 %v180, %v260
  %v301 = vadd.f32 %v181, %v261
  %v302 = vadd.f32 %v182, %v262
  %v303 = vadd.f32 %v183, %v263
  %v304 = vadd.f32 %v184, %v264
  %v305 = vadd.f32 %v185, %v265
  %v306 = vadd.f32 %v186, %v266
  %v307 = vadd.f32 %v187, %v267
  %v308 = vadd.f32 %v188, %v268
  %v309 = vadd.f32 %v189, %v269
  %v310 = vadd.f32 %v190, %v270
  %v311 = vmax.f32 %v271, 0.0
  %v312 = vmax.f32 %v272, 0.0
  %v313 = vmax.f32 %v273, 0.0
  %v314 = vmax.f32 %v274, 0.0
  %v315 = vmax.f32 %v275, 0.0
  %v316 = vmax.f32 %v276, 0.0
  %v317 = vmax.f32 %v277, 0.0
  %v318 = vmax.f32 %v278, 0.0
  %v319 = vmax.f32 %v279, 0.0
  %v320 = vmax.f32 %v280, 0.0
  %v321 = vmax.f32 %v281, 0.0
  %v322 = vmax.f32 %v282, 0.0
  %v323 = vmax.f32 %v283, 0.0
  %v324 = vmax.f32 %v284, 0.0
  %v325 = vmax.f32 %v285, 0.0
  %v326 = vmax.f32 %v286, 0.0
  %v327 = vmax.f32 %v287, 0.0
  %v328 = vmax.f32 %v288, 0.0
  %v329 = vmax.f32 %v289, 0.0
  %v330 = vmax.f32 %v290, 0.0
  %v331 = vmax.f32 %v291, 0.0
  %v332 = vmax.f32 %v292, 0.0
  %v333 = vmax.f32 %v293, 0.0
  %v334 = vmax.f32 %v294, 0.0
  %v335 = vmax.f32 %v295, 0.0
  %v336 = vmax.f32 %v296, 0.0
  %v337 = vmax.f32 %v297, 0.0
  %v338 = vmax.f32 %v298, 0.0
  %v339 = vmax.f32 %v299, 0.0
  %v340 = vmax.f32 %v300, 0.0
  %v341 = vmax.f32 %v301, 0.0
  %v342 = vmax.f32 %v302, 0.0
  %v343 = vmax.f32 %v303, 0.0
  %v344 = vmax.f32 %v304, 0.0
  %v345 = vmax.f32 %v305, 0.0
  %v346 = vmax.f32 %v306, 0.0
  %v347 = vmax.f32 %v307, 0.0
  %v348 = vmax.f32 %v308, 0.0
  %v349 = vmax.f32 %v309, 0.0
  %v350 = vmax.f32 %v310, 0.0
  %vm351 = vcmask 261120
  %352 = vst.msk [vmem:[%s4] sm:$0xff] %vm351, %v311
  %353 = vst.msk [vmem:[%s4 + $0x8] sm:$0xff] %vm351, %v312
  %354 = vst.msk [vmem:[%s4 + $0x10] sm:$0xff] %vm351, %v313
  %355 = vst.msk [vmem:[%s4 + $0x18] sm:$0xff] %vm351, %v314
  %356 = vst.msk [vmem:[%s4 + $0x20] sm:$0xff] %vm351, %v315
  %357 = vst.msk [vmem:[%s4 + $0x28] sm:$0xff] %vm351, %v316
  %358 = vst.msk [vmem:[%s4 + $0x30] sm:$0xff] %vm351, %v317
  %359 = vst.msk [vmem:[%s4 + $0x38] sm:$0xff] %vm351, %v318
  %360 = vst.msk [vmem:[%s4 + $0x40] sm:$0xff] %vm351, %v319
  %361 = vst.msk [vmem:[%s4 + $0x48] sm:$0xff] %vm351, %v320
  %362 = vst.msk [vmem:[%s4 + $0x50] sm:$0xff] %vm351, %v321
  %363 = vst.msk [vmem:[%s4 + $0x58] sm:$0xff] %vm351, %v322
  %364 = vst.msk [vmem:[%s4 + $0x60] sm:$0xff] %vm351, %v323
  %365 = vst.msk [vmem:[%s4 + $0x68] sm:$0xff] %vm351, %v324
  %366 = vst.msk [vmem:[%s4 + $0x70] sm:$0xff] %vm351, %v325
  %367 = vst.msk [vmem:[%s4 + $0x78] sm:$0xff] %vm351, %v326
  %368 = vst.msk [vmem:[%s4 + $0x80] sm:$0xff] %vm351, %v327
  %369 = vst.msk [vmem:[%s4 + $0x88] sm:$0xff] %vm351, %v328
  %370 = vst.msk [vmem:[%s4 + $0x90] sm:$0xff] %vm351, %v329
  %371 = vst.msk [vmem:[%s4 + $0x98] sm:$0xff] %vm351, %v330
  %372 = vst.msk [vmem:[%s4 + $0xa0] sm:$0xff] %vm351, %v331
  %373 = vst.msk [vmem:[%s4 + $0xa8] sm:$0xff] %vm351, %v332
  %374 = vst.msk [vmem:[%s4 + $0xb0] sm:$0xff] %vm351, %v333
  %375 = vst.msk [vmem:[%s4 + $0xb8] sm:$0xff] %vm351, %v334
  %376 = vst.msk [vmem:[%s4 + $0xc0] sm:$0xff] %vm351, %v335
  %377 = vst.msk [vmem:[%s4 + $0xc8] sm:$0xff] %vm351, %v336
  %378 = vst.msk [vmem:[%s4 + $0xd0] sm:$0xff] %vm351, %v337
  %379 = vst.msk [vmem:[%s4 + $0xd8] sm:$0xff] %vm351, %v338
  %380 = vst.msk [vmem:[%s4 + $0xe0] sm:$0xff] %vm351, %v339
  %381 = vst.msk [vmem:[%s4 + $0xe8] sm:$0xff] %vm351, %v340
  %382 = vst.msk [vmem:[%s4 + $0xf0] sm:$0xff] %vm351, %v341
  %383 = vst.msk [vmem:[%s4 + $0xf8] sm:$0xff] %vm351, %v342
  %384 = vst.msk [vmem:[%s4 + $0x100] sm:$0xff] %vm351, %v343
  %385 = vst.msk [vmem:[%s4 + $0x108] sm:$0xff] %vm351, %v344
  %386 = vst.msk [vmem:[%s4 + $0x110] sm:$0xff] %vm351, %v345
  %387 = vst.msk [vmem:[%s4 + $0x118] sm:$0xff] %vm351, %v346
  %388 = vst.msk [vmem:[%s4 + $0x120] sm:$0xff] %vm351, %v347
  %389 = vst.msk [vmem:[%s4 + $0x128] sm:$0xff] %vm351, %v348
  %390 = vst.msk [vmem:[%s4 + $0x130] sm:$0xff] %vm351, %v349
  %391 = vst.msk [vmem:[%s4 + $0x138] sm:$0xff] %vm351, %v350
  // Predicated region
  $region18: #{basic_block_forward.5} parent=0 // pred_check
    _
  $region19: #{basic_block_forward.5} parent=0 // pred_check_branch
    %393 = sbr.rel (0) target = $region21
  $region20: #{basic_block_forward.5} parent=0 // pred_region
    _
  $region21: #{basic_block_forward.5} parent=0 // pred_fallthru
    _
  // Predicated region
  $region22: #{basic_block_forward.5} parent=0 // pred_check
    _
  $region23: #{basic_block_forward.5} parent=0 // pred_check_branch
    %395 = sbr.rel (0) target = $region25
  $region24: #{basic_block_forward.5} parent=0 // pred_region
    _
  $region25: #{basic_block_forward.5} parent=0 // pred_fallthru
    _

// kernel: basic_block_forward.4
$region0: #{basic_block_forward.4}
  #allocation0 [shape = 'u32[]', space=smem, size = 0x4, offset = 0x4, fixed_abs, tag = 'smem constant byte address 0x4 - core index']
  #allocation1 [shape = 'u32[144,128]{1,0:T(1,128)}', space=vmem, size = 0x12000, scoped, tag = 'internal scratch']
  #allocation2 [shape = 'bf16[360,32]{1,0:T(8,128)(2,1)}', space=vmem, size = 0x16800, scoped, tag = 'scratch operand']
  %s0 = inlined_call_operand.vmem [shape: bf16[360,32], index: 0, kind: input, shape index: {}]
  %s1 = inlined_call_operand.vmem [shape: bf16[288,32], index: 1, kind: input, shape index: {}]
  %s2 = inlined_call_operand.vmem [shape: f32[360,1], index: 2, kind: input, shape index: {}]
  %s3 = inlined_call_operand.vmem [shape: f32[1,32], index: 3, kind: input, shape index: {}]
  %s4 = inlined_call_operand.vmem [shape: f32[1,32], index: 4, kind: input, shape index: {}]
  %s5 = inlined_call_operand.vmem [shape: bf16[320,32], index: 5, kind: output, shape index: {0}]
  %s6 = inlined_call_operand.vmem [shape: f32[1,2,32], index: 6, kind: output, shape index: {1}]
  %7 = xla_tuple %s5, %s6
  %s8 = sld [smem:[#allocation0]]
  $region38: #{basic_block_forward.4} parent=0
    _
  %s10 = ssub.s32 1, %s8
  %s11 = scalar_select 0, %s10, %s8
  // Predicated region
  $region2: #{basic_block_forward.4} parent=0 // pred_check
    _
  $region3: #{basic_block_forward.4} parent=0 // pred_check_branch
    %13 = sbr.rel (0) target = $region5
  $region4: #{basic_block_forward.4} parent=0 // pred_region
    _
  $region5: #{basic_block_forward.4} parent=0 // pred_fallthru
    _
  // Predicated region
  $region6: #{basic_block_forward.4} parent=0 // pred_check
    _
  $region7: #{basic_block_forward.4} parent=0 // pred_check_branch
    %15 = sbr.rel (0) target = $region9
  $region8: #{basic_block_forward.4} parent=0 // pred_region
    _
  $region9: #{basic_block_forward.4} parent=0 // pred_fallthru
    _
  // Predicated region
  $region10: #{basic_block_forward.4} parent=0 // pred_check
    _
  $region11: #{basic_block_forward.4} parent=0 // pred_check_branch
    %17 = sbr.rel (0) target = $region13
  $region12: #{basic_block_forward.4} parent=0 // pred_region
    _
  $region13: #{basic_block_forward.4} parent=0 // pred_fallthru
    _
  // Predicated region
  $region14: #{basic_block_forward.4} parent=0 // pred_check
    _
  $region15: #{basic_block_forward.4} parent=0 // pred_check_branch
    %19 = sbr.rel (0) target = $region17
  $region16: #{basic_block_forward.4} parent=0 // pred_region
    _
  $region17: #{basic_block_forward.4} parent=0 // pred_fallthru
    _
  // Predicated region
  $region18: #{basic_block_forward.4} parent=0 // pred_check
    _
  $region19: #{basic_block_forward.4} parent=0 // pred_check_branch
    %21 = sbr.rel (0) target = $region21
  $region20: #{basic_block_forward.4} parent=0 // pred_region
    _
  $region21: #{basic_block_forward.4} parent=0 // pred_fallthru
    _
  %s23 = smul.u32 0, 320
  %s24 = sshra.s32 %s23, 3
  %s25 = sand.u32 %s23, 7
  %s26 = smul.addr %s24, 4
  %s27 = scalar_lea.vmem %s0, %s26
  %v28 = vld [vmem:[%s27] sm:$0xf]
  %v29 = vld [vmem:[%s27 + $0x4] sm:$0xf]
  %v30 = vld [vmem:[%s27 + $0x8] sm:$0xf]
  %v31 = vld [vmem:[%s27 + $0xc] sm:$0xf]
  %v32 = vld [vmem:[%s27 + $0x10] sm:$0xf]
  %v33 = vld [vmem:[%s27 + $0x14] sm:$0xf]
  %v34 = vld [vmem:[%s27 + $0x18] sm:$0xf]
  %v35 = vld [vmem:[%s27 + $0x1c] sm:$0xf]
  %v36 = vld [vmem:[%s27 + $0x20] sm:$0xf]
  %v37 = vld [vmem:[%s27 + $0x24] sm:$0xf]
  %v38 = vld [vmem:[%s27 + $0x28] sm:$0xf]
  %v39 = vld [vmem:[%s27 + $0x2c] sm:$0xf]
  %v40 = vld [vmem:[%s27 + $0x30] sm:$0xf]
  %v41 = vld [vmem:[%s27 + $0x34] sm:$0xf]
  %v42 = vld [vmem:[%s27 + $0x38] sm:$0xf]
  %v43 = vld [vmem:[%s27 + $0x3c] sm:$0xf]
  %v44 = vld [vmem:[%s27 + $0x40] sm:$0xf]
  %v45 = vld [vmem:[%s27 + $0x44] sm:$0xf]
  %v46 = vld [vmem:[%s27 + $0x48] sm:$0xf]
  %v47 = vld [vmem:[%s27 + $0x4c] sm:$0xf]
  %v48 = vld [vmem:[%s27 + $0x50] sm:$0xf]
  %v49 = vld [vmem:[%s27 + $0x54] sm:$0xf]
  %v50 = vld [vmem:[%s27 + $0x58] sm:$0xf]
  %v51 = vld [vmem:[%s27 + $0x5c] sm:$0xf]
  %v52 = vld [vmem:[%s27 + $0x60] sm:$0xf]
  %v53 = vld [vmem:[%s27 + $0x64] sm:$0xf]
  %v54 = vld [vmem:[%s27 + $0x68] sm:$0xf]
  %v55 = vld [vmem:[%s27 + $0x6c] sm:$0xf]
  %v56 = vld [vmem:[%s27 + $0x70] sm:$0xf]
  %v57 = vld [vmem:[%s27 + $0x74] sm:$0xf]
  %v58 = vld [vmem:[%s27 + $0x78] sm:$0xf]
  %v59 = vld [vmem:[%s27 + $0x7c] sm:$0xf]
  %v60 = vld [vmem:[%s27 + $0x80] sm:$0xf]
  %v61 = vld [vmem:[%s27 + $0x84] sm:$0xf]
  %v62 = vld [vmem:[%s27 + $0x88] sm:$0xf]
  %v63 = vld [vmem:[%s27 + $0x8c] sm:$0xf]
  %v64 = vld [vmem:[%s27 + $0x90] sm:$0xf]
  %v65 = vld [vmem:[%s27 + $0x94] sm:$0xf]
  %v66 = vld [vmem:[%s27 + $0x98] sm:$0xf]
  %v67 = vld [vmem:[%s27 + $0x9c] sm:$0xf]
  %v68 = vld [vmem:[%s27 + $0xa0] sm:$0xf]
  %v69 = vld [vmem:[%s27 + $0xa4] sm:$0xf]
  %v70 = vld [vmem:[%s27 + $0xa8] sm:$0xf]
  %v71 = vld [vmem:[%s27 + $0xac] sm:$0xf]
  %v72 = vld [vmem:[%s27 + $0xb0] sm:$0xf]
  %s73 = scalar_lea.vmem %s2, %s23
  %v74 = vld [vmem:[%s73] sm:$0xff]
  %v75 = vld [vmem:[%s73 + $0x8] sm:$0xff]
  %v76 = vld [vmem:[%s73 + $0x10] sm:$0xff]
  %v77 = vld [vmem:[%s73 + $0x18] sm:$0xff]
  %v78 = vld [vmem:[%s73 + $0x20] sm:$0xff]
  %v79 = vld [vmem:[%s73 + $0x28] sm:$0xff]
  %v80 = vld [vmem:[%s73 + $0x30] sm:$0xff]
  %v81 = vld [vmem:[%s73 + $0x38] sm:$0xff]
  %v82 = vld [vmem:[%s73 + $0x40] sm:$0xff]
  %v83 = vld [vmem:[%s73 + $0x48] sm:$0xff]
  %v84 = vld [vmem:[%s73 + $0x50] sm:$0xff]
  %v85 = vld [vmem:[%s73 + $0x58] sm:$0xff]
  %v86 = vld [vmem:[%s73 + $0x60] sm:$0xff]
  %v87 = vld [vmem:[%s73 + $0x68] sm:$0xff]
  %v88 = vld [vmem:[%s73 + $0x70] sm:$0xff]
  %v89 = vld [vmem:[%s73 + $0x78] sm:$0xff]
  %v90 = vld [vmem:[%s73 + $0x80] sm:$0xff]
  %v91 = vld [vmem:[%s73 + $0x88] sm:$0xff]
  %v92 = vld [vmem:[%s73 + $0x90] sm:$0xff]
  %v93 = vld [vmem:[%s73 + $0x98] sm:$0xff]
  %v94 = vld [vmem:[%s73 + $0xa0] sm:$0xff]
  %v95 = vld [vmem:[%s73 + $0xa8] sm:$0xff]
  %v96 = vld [vmem:[%s73 + $0xb0] sm:$0xff]
  %v97 = vld [vmem:[%s73 + $0xb8] sm:$0xff]
  %v98 = vld [vmem:[%s73 + $0xc0] sm:$0xff]
  %v99 = vld [vmem:[%s73 + $0xc8] sm:$0xff]
  %v100 = vld [vmem:[%s73 + $0xd0] sm:$0xff]
  %v101 = vld [vmem:[%s73 + $0xd8] sm:$0xff]
  %v102 = vld [vmem:[%s73 + $0xe0] sm:$0xff]
  %v103 = vld [vmem:[%s73 + $0xe8] sm:$0xff]
  %v104 = vld [vmem:[%s73 + $0xf0] sm:$0xff]
  %v105 = vld [vmem:[%s73 + $0xf8] sm:$0xff]
  %v106 = vld [vmem:[%s73 + $0x100] sm:$0xff]
  %v107 = vld [vmem:[%s73 + $0x108] sm:$0xff]
  %v108 = vld [vmem:[%s73 + $0x110] sm:$0xff]
  %v109 = vld [vmem:[%s73 + $0x118] sm:$0xff]
  %v110 = vld [vmem:[%s73 + $0x120] sm:$0xff]
  %v111 = vld [vmem:[%s73 + $0x128] sm:$0xff]
  %v112 = vld [vmem:[%s73 + $0x130] sm:$0xff]
  %v113 = vld [vmem:[%s73 + $0x138] sm:$0xff]
  %v114 = vld [vmem:[%s73 + $0x140] sm:$0xff]
  %v115 = vld [vmem:[%s73 + $0x148] sm:$0xff]
  %v116 = vld [vmem:[%s73 + $0x150] sm:$0xff]
  %v117 = vld [vmem:[%s73 + $0x158] sm:$0xff]
  %v118 = vld [vmem:[%s73 + $0x160] sm:$0xff]
  %v119 = vunpack.c.l.bf16 %v28
  %v120 = vunpack.c.l.bf16 %v29
  %v121 = vunpack.c.l.bf16 %v30
  %v122 = vunpack.c.l.bf16 %v31
  %v123 = vunpack.c.l.bf16 %v32
  %v124 = vunpack.c.l.bf16 %v33
  %v125 = vunpack.c.l.bf16 %v34
  %v126 = vunpack.c.l.bf16 %v35
  %v127 = vunpack.c.l.bf16 %v36
  %v128 = vunpack.c.l.bf16 %v37
  %v129 = vunpack.c.l.bf16 %v38
  %v130 = vunpack.c.l.bf16 %v39
  %v131 = vunpack.c.l.bf16 %v40
  %v132 = vunpack.c.l.bf16 %v41
  %v133 = vunpack.c.l.bf16 %v42
  %v134 = vunpack.c.l.bf16 %v43
  %v135 = vunpack.c.l.bf16 %v44
  %v136 = vunpack.c.l.bf16 %v45
  %v137 = vunpack.c.l.bf16 %v46
  %v138 = vunpack.c.l.bf16 %v47
  %v139 = vunpack.c.l.bf16 %v48
  %v140 = vunpack.c.l.bf16 %v49
  %v141 = vunpack.c.l.bf16 %v50
  %v142 = vunpack.c.l.bf16 %v51
  %v143 = vunpack.c.l.bf16 %v52
  %v144 = vunpack.c.l.bf16 %v53
  %v145 = vunpack.c.l.bf16 %v54
  %v146 = vunpack.c.l.bf16 %v55
  %v147 = vunpack.c.l.bf16 %v56
  %v148 = vunpack.c.l.bf16 %v57
  %v149 = vunpack.c.l.bf16 %v58
  %v150 = vunpack.c.l.bf16 %v59
  %v151 = vunpack.c.l.bf16 %v60
  %v152 = vunpack.c.l.bf16 %v61
  %v153 = vunpack.c.l.bf16 %v62
  %v154 = vunpack.c.l.bf16 %v63
  %v155 = vunpack.c.l.bf16 %v64
  %v156 = vunpack.c.l.bf16 %v65
  %v157 = vunpack.c.l.bf16 %v66
  %v158 = vunpack.c.l.bf16 %v67
  %v159 = vunpack.c.l.bf16 %v68
  %v160 = vunpack.c.l.bf16 %v69
  %v161 = vunpack.c.l.bf16 %v70
  %v162 = vunpack.c.l.bf16 %v71
  %v163 = vunpack.c.l.bf16 %v72
  %v164 = vld [vmem:[%s3] sm:$0x1]
  %v166 = vlaneseq
  %v167 = vshrl.u32 %v166, 7
  %v168 = vsub.s32 0, %v167
  %v169 = vrot.slane %v164, %v168
  %v171 = vmul.f32 %v119, %v169
  %v172 = vmul.f32 %v120, %v169
  %v173 = vmul.f32 %v121, %v169
  %v174 = vmul.f32 %v122, %v169
  %v175 = vmul.f32 %v123, %v169
  %v176 = vmul.f32 %v124, %v169
  %v177 = vmul.f32 %v125, %v169
  %v178 = vmul.f32 %v126, %v169
  %v179 = vmul.f32 %v127, %v169
  %v180 = vmul.f32 %v128, %v169
  %v181 = vmul.f32 %v129, %v169
  %v182 = vmul.f32 %v130, %v169
  %v183 = vmul.f32 %v131, %v169
  %v184 = vmul.f32 %v132, %v169
  %v185 = vmul.f32 %v133, %v169
  %v186 = vmul.f32 %v134, %v169
  %v187 = vmul.f32 %v135, %v169
  %v188 = vmul.f32 %v136, %v169
  %v189 = vmul.f32 %v137, %v169
  %v190 = vmul.f32 %v138, %v169
  %v191 = vmul.f32 %v139, %v169
  %v192 = vmul.f32 %v140, %v169
  %v193 = vmul.f32 %v141, %v169
  %v194 = vmul.f32 %v142, %v169
  %v195 = vmul.f32 %v143, %v169
  %v196 = vmul.f32 %v144, %v169
  %v197 = vmul.f32 %v145, %v169
  %v198 = vmul.f32 %v146, %v169
  %v199 = vmul.f32 %v147, %v169
  %v200 = vmul.f32 %v148, %v169
  %v201 = vmul.f32 %v149, %v169
  %v202 = vmul.f32 %v150, %v169
  %v203 = vmul.f32 %v151, %v169
  %v204 = vmul.f32 %v152, %v169
  %v205 = vmul.f32 %v153, %v169
  %v206 = vmul.f32 %v154, %v169
  %v207 = vmul.f32 %v155, %v169
  %v208 = vmul.f32 %v156, %v169
  %v209 = vmul.f32 %v157, %v169
  %v210 = vmul.f32 %v158, %v169
  %v211 = vmul.f32 %v159, %v169
  %v212 = vmul.f32 %v160, %v169
  %v213 = vmul.f32 %v161, %v169
  %v214 = vmul.f32 %v162, %v169
  %v215 = vmul.f32 %v163, %v169
  %v216 = vld [vmem:[%s4] sm:$0x1]
  %v218 = vlaneseq
  %v219 = vshrl.u32 %v218, 7
  %v220 = vsub.s32 0, %v219
  %v221 = vrot.slane %v216, %v220
  %v223 = vadd.f32 %v171, %v221
  %v224 = vadd.f32 %v172, %v221
  %v225 = vadd.f32 %v173, %v221
  %v226 = vadd.f32 %v174, %v221
  %v227 = vadd.f32 %v175, %v221
  %v228 = vadd.f32 %v176, %v221
  %v229 = vadd.f32 %v177, %v221
  %v230 = vadd.f32 %v178, %v221
  %v231 = vadd.f32 %v179, %v221
  %v232 = vadd.f32 %v180, %v221
  %v233 = vadd.f32 %v181, %v221
  %v234 = vadd.f32 %v182, %v221
  %v235 = vadd.f32 %v183, %v221
  %v236 = vadd.f32 %v184, %v221
  %v237 = vadd.f32 %v185, %v221
  %v238 = vadd.f32 %v186, %v221
  %v239 = vadd.f32 %v187, %v221
  %v240 = vadd.f32 %v188, %v221
  %v241 = vadd.f32 %v189, %v221
  %v242 = vadd.f32 %v190, %v221
  %v243 = vadd.f32 %v191, %v221
  %v244 = vadd.f32 %v192, %v221
  %v245 = vadd.f32 %v193, %v221
  %v246 = vadd.f32 %v194, %v221
  %v247 = vadd.f32 %v195, %v221
  %v248 = vadd.f32 %v196, %v221
  %v249 = vadd.f32 %v197, %v221
  %v250 = vadd.f32 %v198, %v221
  %v251 = vadd.f32 %v199, %v221
  %v252 = vadd.f32 %v200, %v221
  %v253 = vadd.f32 %v201, %v221
  %v254 = vadd.f32 %v202, %v221
  %v255 = vadd.f32 %v203, %v221
  %v256 = vadd.f32 %v204, %v221
  %v257 = vadd.f32 %v205, %v221
  %v258 = vadd.f32 %v206, %v221
  %v259 = vadd.f32 %v207, %v221
  %v260 = vadd.f32 %v208, %v221
  %v261 = vadd.f32 %v209, %v221
  %v262 = vadd.f32 %v210, %v221
  %v263 = vadd.f32 %v211, %v221
  %v264 = vadd.f32 %v212, %v221
  %v265 = vadd.f32 %v213, %v221
  %v266 = vadd.f32 %v214, %v221
  %v267 = vadd.f32 %v215, %v221
  %v268 = vmax.f32 %v223, 0.0
  %v269 = vmax.f32 %v224, 0.0
  %v270 = vmax.f32 %v225, 0.0
  %v271 = vmax.f32 %v226, 0.0
  %v272 = vmax.f32 %v227, 0.0
  %v273 = vmax.f32 %v228, 0.0
  %v274 = vmax.f32 %v229, 0.0
  %v275 = vmax.f32 %v230, 0.0
  %v276 = vmax.f32 %v231, 0.0
  %v277 = vmax.f32 %v232, 0.0
  %v278 = vmax.f32 %v233, 0.0
  %v279 = vmax.f32 %v234, 0.0
  %v280 = vmax.f32 %v235, 0.0
  %v281 = vmax.f32 %v236, 0.0
  %v282 = vmax.f32 %v237, 0.0
  %v283 = vmax.f32 %v238, 0.0
  %v284 = vmax.f32 %v239, 0.0
  %v285 = vmax.f32 %v240, 0.0
  %v286 = vmax.f32 %v241, 0.0
  %v287 = vmax.f32 %v242, 0.0
  %v288 = vmax.f32 %v243, 0.0
  %v289 = vmax.f32 %v244, 0.0
  %v290 = vmax.f32 %v245, 0.0
  %v291 = vmax.f32 %v246, 0.0
  %v292 = vmax.f32 %v247, 0.0
  %v293 = vmax.f32 %v248, 0.0
  %v294 = vmax.f32 %v249, 0.0
  %v295 = vmax.f32 %v250, 0.0
  %v296 = vmax.f32 %v251, 0.0
  %v297 = vmax.f32 %v252, 0.0
  %v298 = vmax.f32 %v253, 0.0
  %v299 = vmax.f32 %v254, 0.0
  %v300 = vmax.f32 %v255, 0.0
  %v301 = vmax.f32 %v256, 0.0
  %v302 = vmax.f32 %v257, 0.0
  %v303 = vmax.f32 %v258, 0.0
  %v304 = vmax.f32 %v259, 0.0
  %v305 = vmax.f32 %v260, 0.0
  %v306 = vmax.f32 %v261, 0.0
  %v307 = vmax.f32 %v262, 0.0
  %v308 = vmax.f32 %v263, 0.0
  %v309 = vmax.f32 %v264, 0.0
  %v310 = vmax.f32 %v265, 0.0
  %v311 = vmax.f32 %v266, 0.0
  %v312 = vmax.f32 %v267, 0.0
  %314 = vset.pattern.permute.xlu0 0
  %315 = vperm.xlu0 %314, %v74
  %v316 = vpop.permute.xlu0 %315
  %319 = vset.pattern.permute.xlu0 0
  %320 = vperm.xlu0 %319, %v75
  %v321 = vpop.permute.xlu0 %320
  %324 = vset.pattern.permute.xlu0 0
  %325 = vperm.xlu0 %324, %v76
  %v326 = vpop.permute.xlu0 %325
  %329 = vset.pattern.permute.xlu0 0
  %330 = vperm.xlu0 %329, %v77
  %v331 = vpop.permute.xlu0 %330
  %334 = vset.pattern.permute.xlu0 0
  %335 = vperm.xlu0 %334, %v78
  %v336 = vpop.permute.xlu0 %335
  %339 = vset.pattern.permute.xlu0 0
  %340 = vperm.xlu0 %339, %v79
  %v341 = vpop.permute.xlu0 %340
  %344 = vset.pattern.permute.xlu0 0
  %345 = vperm.xlu0 %344, %v80
  %v346 = vpop.permute.xlu0 %345
  %349 = vset.pattern.permute.xlu0 0
  %350 = vperm.xlu0 %349, %v81
  %v351 = vpop.permute.xlu0 %350
  %354 = vset.pattern.permute.xlu0 0
  %355 = vperm.xlu0 %354, %v82
  %v356 = vpop.permute.xlu0 %355
  %359 = vset.pattern.permute.xlu0 0
  %360 = vperm.xlu0 %359, %v83
  %v361 = vpop.permute.xlu0 %360
  %364 = vset.pattern.permute.xlu0 0
  %365 = vperm.xlu0 %364, %v84
  %v366 = vpop.permute.xlu0 %365
  %369 = vset.pattern.permute.xlu0 0
  %370 = vperm.xlu0 %369, %v85
  %v371 = vpop.permute.xlu0 %370
  %374 = vset.pattern.permute.xlu0 0
  %375 = vperm.xlu0 %374, %v86
  %v376 = vpop.permute.xlu0 %375
  %379 = vset.pattern.permute.xlu0 0
  %380 = vperm.xlu0 %379, %v87
  %v381 = vpop.permute.xlu0 %380
  %384 = vset.pattern.permute.xlu0 0
  %385 = vperm.xlu0 %384, %v88
  %v386 = vpop.permute.xlu0 %385
  %389 = vset.pattern.permute.xlu0 0
  %390 = vperm.xlu0 %389, %v89
  %v391 = vpop.permute.xlu0 %390
  %394 = vset.pattern.permute.xlu0 0
  %395 = vperm.xlu0 %394, %v90
  %v396 = vpop.permute.xlu0 %395
  %399 = vset.pattern.permute.xlu0 0
  %400 = vperm.xlu0 %399, %v91
  %v401 = vpop.permute.xlu0 %400
  %404 = vset.pattern.permute.xlu0 0
  %405 = vperm.xlu0 %404, %v92
  %v406 = vpop.permute.xlu0 %405
  %409 = vset.pattern.permute.xlu0 0
  %410 = vperm.xlu0 %409, %v93
  %v411 = vpop.permute.xlu0 %410
  %414 = vset.pattern.permute.xlu0 0
  %415 = vperm.xlu0 %414, %v94
  %v416 = vpop.permute.xlu0 %415
  %419 = vset.pattern.permute.xlu0 0
  %420 = vperm.xlu0 %419, %v95
  %v421 = vpop.permute.xlu0 %420
  %424 = vset.pattern.permute.xlu0 0
  %425 = vperm.xlu0 %424, %v96
  %v426 = vpop.permute.xlu0 %425
  %429 = vset.pattern.permute.xlu0 0
  %430 = vperm.xlu0 %429, %v97
  %v431 = vpop.permute.xlu0 %430
  %434 = vset.pattern.permute.xlu0 0
  %435 = vperm.xlu0 %434, %v98
  %v436 = vpop.permute.xlu0 %435
  %439 = vset.pattern.permute.xlu0 0
  %440 = vperm.xlu0 %439, %v99
  %v441 = vpop.permute.xlu0 %440
  %444 = vset.pattern.permute.xlu0 0
  %445 = vperm.xlu0 %444, %v100
  %v446 = vpop.permute.xlu0 %445
  %449 = vset.pattern.permute.xlu0 0
  %450 = vperm.xlu0 %449, %v101
  %v451 = vpop.permute.xlu0 %450
  %454 = vset.pattern.permute.xlu0 0
  %455 = vperm.xlu0 %454, %v102
  %v456 = vpop.permute.xlu0 %455
  %459 = vset.pattern.permute.xlu0 0
  %460 = vperm.xlu0 %459, %v103
  %v461 = vpop.permute.xlu0 %460
  %464 = vset.pattern.permute.xlu0 0
  %465 = vperm.xlu0 %464, %v104
  %v466 = vpop.permute.xlu0 %465
  %469 = vset.pattern.permute.xlu0 0
  %470 = vperm.xlu0 %469, %v105
  %v471 = vpop.permute.xlu0 %470
  %474 = vset.pattern.permute.xlu0 0
  %475 = vperm.xlu0 %474, %v106
  %v476 = vpop.permute.xlu0 %475
  %479 = vset.pattern.permute.xlu0 0
  %480 = vperm.xlu0 %479, %v107
  %v481 = vpop.permute.xlu0 %480
  %484 = vset.pattern.permute.xlu0 0
  %485 = vperm.xlu0 %484, %v108
  %v486 = vpop.permute.xlu0 %485
  %489 = vset.pattern.permute.xlu0 0
  %490 = vperm.xlu0 %489, %v109
  %v491 = vpop.permute.xlu0 %490
  %494 = vset.pattern.permute.xlu0 0
  %495 = vperm.xlu0 %494, %v110
  %v496 = vpop.permute.xlu0 %495
  %499 = vset.pattern.permute.xlu0 0
  %500 = vperm.xlu0 %499, %v111
  %v501 = vpop.permute.xlu0 %500
  %504 = vset.pattern.permute.xlu0 0
  %505 = vperm.xlu0 %504, %v112
  %v506 = vpop.permute.xlu0 %505
  %509 = vset.pattern.permute.xlu0 0
  %510 = vperm.xlu0 %509, %v113
  %v511 = vpop.permute.xlu0 %510
  %514 = vset.pattern.permute.xlu0 0
  %515 = vperm.xlu0 %514, %v114
  %v516 = vpop.permute.xlu0 %515
  %519 = vset.pattern.permute.xlu0 0
  %520 = vperm.xlu0 %519, %v115
  %v521 = vpop.permute.xlu0 %520
  %524 = vset.pattern.permute.xlu0 0
  %525 = vperm.xlu0 %524, %v116
  %v526 = vpop.permute.xlu0 %525
  %529 = vset.pattern.permute.xlu0 0
  %530 = vperm.xlu0 %529, %v117
  %v531 = vpop.permute.xlu0 %530
  %534 = vset.pattern.permute.xlu0 0
  %535 = vperm.xlu0 %534, %v118
  %v536 = vpop.permute.xlu0 %535
  %v538 = vmul.f32 %v268, %v316
  %v539 = vmul.f32 %v269, %v321
  %v540 = vmul.f32 %v270, %v326
  %v541 = vmul.f32 %v271, %v331
  %v542 = vmul.f32 %v272, %v336
  %v543 = vmul.f32 %v273, %v341
  %v544 = vmul.f32 %v274, %v346
  %v545 = vmul.f32 %v275, %v351
  %v546 = vmul.f32 %v276, %v356
  %v547 = vmul.f32 %v277, %v361
  %v548 = vmul.f32 %v278, %v366
  %v549 = vmul.f32 %v279, %v371
  %v550 = vmul.f32 %v280, %v376
  %v551 = vmul.f32 %v281, %v381
  %v552 = vmul.f32 %v282, %v386
  %v553 = vmul.f32 %v283, %v391
  %v554 = vmul.f32 %v284, %v396
  %v555 = vmul.f32 %v285, %v401
  %v556 = vmul.f32 %v286, %v406
  %v557 = vmul.f32 %v287, %v411
  %v558 = vmul.f32 %v288, %v416
  %v559 = vmul.f32 %v289, %v421
  %v560 = vmul.f32 %v290, %v426
  %v561 = vmul.f32 %v291, %v431
  %v562 = vmul.f32 %v292, %v436
  %v563 = vmul.f32 %v293, %v441
  %v564 = vmul.f32 %v294, %v446
  %v565 = vmul.f32 %v295, %v451
  %v566 = vmul.f32 %v296, %v456
  %v567 = vmul.f32 %v297, %v461
  %v568 = vmul.f32 %v298, %v466
  %v569 = vmul.f32 %v299, %v471
  %v570 = vmul.f32 %v300, %v476
  %v571 = vmul.f32 %v301, %v481
  %v572 = vmul.f32 %v302, %v486
  %v573 = vmul.f32 %v303, %v491
  %v574 = vmul.f32 %v304, %v496
  %v575 = vmul.f32 %v305, %v501
  %v576 = vmul.f32 %v306, %v506
  %v577 = vmul.f32 %v307, %v511
  %v578 = vmul.f32 %v308, %v516
  %v579 = vmul.f32 %v309, %v521
  %v580 = vmul.f32 %v310, %v526
  %v581 = vmul.f32 %v311, %v531
  %v582 = vmul.f32 %v312, %v536
  %v583 = vpack.c.bf16 %v539, %v538
  %v584 = vpack.c.bf16 %v541, %v540
  %v585 = vpack.c.bf16 %v543, %v542
  %v586 = vpack.c.bf16 %v545, %v544
  %v587 = vpack.c.bf16 %v547, %v546
  %v588 = vpack.c.bf16 %v549, %v548
  %v589 = vpack.c.bf16 %v551, %v550
  %v590 = vpack.c.bf16 %v553, %v552
  %v591 = vpack.c.bf16 %v555, %v554
  %v592 = vpack.c.bf16 %v557, %v556
  %v593 = vpack.c.bf16 %v559, %v558
  %v594 = vpack.c.bf16 %v561, %v560
  %v595 = vpack.c.bf16 %v563, %v562
  %v596 = vpack.c.bf16 %v565, %v564
  %v597 = vpack.c.bf16 %v567, %v566
  %v598 = vpack.c.bf16 %v569, %v568
  %v599 = vpack.c.bf16 %v571, %v570
  %v600 = vpack.c.bf16 %v573, %v572
  %v601 = vpack.c.bf16 %v575, %v574
  %v602 = vpack.c.bf16 %v577, %v576
  %v603 = vpack.c.bf16 %v579, %v578
  %v604 = vpack.c.bf16 %v581, %v580
  %v605 = vpack.c.bf16 %v582, %v582
  %v629 = vunpack.c.l.b16 %v583
  %v630 = vunpack.c.h.b16 %v583
  %v631 = vunpack.c.l.b16 %v584
  %v632 = vunpack.c.h.b16 %v584
  %v633 = vunpack.c.l.b16 %v585
  %v634 = vunpack.c.h.b16 %v585
  %v635 = vunpack.c.l.b16 %v586
  %v636 = vunpack.c.h.b16 %v586
  %v637 = vunpack.c.l.b16 %v587
  %v638 = vunpack.c.h.b16 %v587
  %v639 = vunpack.c.l.b16 %v588
  %v640 = vunpack.c.h.b16 %v588
  %v641 = vunpack.c.l.b16 %v589
  %v642 = vunpack.c.h.b16 %v589
  %v643 = vunpack.c.l.b16 %v590
  %v644 = vunpack.c.h.b16 %v590
  %v645 = vunpack.c.l.b16 %v591
  %v646 = vunpack.c.h.b16 %v591
  %v647 = vunpack.c.l.b16 %v592
  %v648 = vunpack.c.h.b16 %v592
  %v649 = vunpack.c.l.b16 %v593
  %v650 = vunpack.c.h.b16 %v593
  %v651 = vunpack.c.l.b16 %v594
  %v652 = vunpack.c.h.b16 %v594
  %v653 = vunpack.c.l.b16 %v595
  %v654 = vunpack.c.h.b16 %v595
  %v655 = vunpack.c.l.b16 %v596
  %v656 = vunpack.c.h.b16 %v596
  %v657 = vunpack.c.l.b16 %v597
  %v658 = vunpack.c.h.b16 %v597
  %v659 = vunpack.c.l.b16 %v598
  %v660 = vunpack.c.h.b16 %v598
  %v661 = vunpack.c.l.b16 %v599
  %v662 = vunpack.c.h.b16 %v599
  %v663 = vunpack.c.l.b16 %v600
  %v664 = vunpack.c.h.b16 %v600
  %v665 = vunpack.c.l.b16 %v601
  %v666 = vunpack.c.h.b16 %v601
  %v667 = vunpack.c.l.b16 %v602
  %v668 = vunpack.c.h.b16 %v602
  %v669 = vunpack.c.l.b16 %v603
  %v670 = vunpack.c.h.b16 %v603
  %v671 = vunpack.c.l.b16 %v604
  %v672 = vunpack.c.h.b16 %v604
  %v673 = vunpack.c.l.b16 %v605
  %v674 = vpack.c.b16 %v629, %v629
  %v675 = vpack.c.b16 %v630, %v630
  %v676 = vpack.c.b16 %v631, %v631
  %v677 = vpack.c.b16 %v632, %v632
  %v678 = vpack.c.b16 %v633, %v633
  %v679 = vpack.c.b16 %v634, %v634
  %v680 = vpack.c.b16 %v635, %v635
  %v681 = vpack.c.b16 %v636, %v636
  %v682 = vpack.c.b16 %v637, %v637
  %v683 = vpack.c.b16 %v638, %v638
  %v684 = vpack.c.b16 %v639, %v639
  %v685 = vpack.c.b16 %v640, %v640
  %v686 = vpack.c.b16 %v641, %v641
  %v687 = vpack.c.b16 %v642, %v642
  %v688 = vpack.c.b16 %v643, %v643
  %v689 = vpack.c.b16 %v644, %v644
  %v690 = vpack.c.b16 %v645, %v645
  %v691 = vpack.c.b16 %v646, %v646
  %v692 = vpack.c.b16 %v647, %v647
  %v693 = vpack.c.b16 %v648, %v648
  %v694 = vpack.c.b16 %v649, %v649
  %v695 = vpack.c.b16 %v650, %v650
  %v696 = vpack.c.b16 %v651, %v651
  %v697 = vpack.c.b16 %v652, %v652
  %v698 = vpack.c.b16 %v653, %v653
  %v699 = vpack.c.b16 %v654, %v654
  %v700 = vpack.c.b16 %v655, %v655
  %v701 = vpack.c.b16 %v656, %v656
  %v702 = vpack.c.b16 %v657, %v657
  %v703 = vpack.c.b16 %v658, %v658
  %v704 = vpack.c.b16 %v659, %v659
  %v705 = vpack.c.b16 %v660, %v660
  %v706 = vpack.c.b16 %v661, %v661
  %v707 = vpack.c.b16 %v662, %v662
  %v708 = vpack.c.b16 %v663, %v663
  %v709 = vpack.c.b16 %v664, %v664
  %v710 = vpack.c.b16 %v665, %v665
  %v711 = vpack.c.b16 %v666, %v666
  %v712 = vpack.c.b16 %v667, %v667
  %v713 = vpack.c.b16 %v668, %v668
  %v714 = vpack.c.b16 %v669, %v669
  %v715 = vpack.c.b16 %v670, %v670
  %v716 = vpack.c.b16 %v671, %v671
  %v717 = vpack.c.b16 %v672, %v672
  %v718 = vpack.c.b16 %v673, %v673
  %vm764 = vcmask 257024
  %765 = vst.msk [vmem:[#allocation2] sm:$0xf] %vm764, %v674
  %766 = vst.msk [vmem:[#allocation2 + $0x4] sm:$0xf] %vm764, %v675
  %767 = vst.msk [vmem:[#allocation2 + $0x8] sm:$0xf] %vm764, %v676
  %768 = vst.msk [vmem:[#allocation2 + $0xc] sm:$0xf] %vm764, %v677
  %769 = vst.msk [vmem:[#allocation2 + $0x10] sm:$0xf] %vm764, %v678
  %770 = vst.msk [vmem:[#allocation2 + $0x14] sm:$0xf] %vm764, %v679
  %771 = vst.msk [vmem:[#allocation2 + $0x18] sm:$0xf] %vm764, %v680
  %772 = vst.msk [vmem:[#allocation2 + $0x1c] sm:$0xf] %vm764, %v681
  %773 = vst.msk [vmem:[#allocation2 + $0x20] sm:$0xf] %vm764, %v682
  %774 = vst.msk [vmem:[#allocation2 + $0x24] sm:$0xf] %vm764, %v683
  %775 = vst.msk [vmem:[#allocation2 + $0x28] sm:$0xf] %vm764, %v684
  %776 = vst.msk [vmem:[#allocation2 + $0x2c] sm:$0xf] %vm764, %v685
  %777 = vst.msk [vmem:[#allocation2 + $0x30] sm:$0xf] %vm764, %v686
  %778 = vst.msk [vmem:[#allocation2 + $0x34] sm:$0xf] %vm764, %v687
  %779 = vst.msk [vmem:[#allocation2 + $0x38] sm:$0xf] %vm764, %v688
  %780 = vst.msk [vmem:[#allocation2 + $0x3c] sm:$0xf] %vm764, %v689
  %781 = vst.msk [vmem:[#allocation2 + $0x40] sm:$0xf] %vm764, %v690
  %782 = vst.msk [vmem:[#allocation2 + $0x44] sm:$0xf] %vm764, %v691
  %783 = vst.msk [vmem:[#allocation2 + $0x48] sm:$0xf] %vm764, %v692
  %784 = vst.msk [vmem:[#allocation2 + $0x4c] sm:$0xf] %vm764, %v693
  %785 = vst.msk [vmem:[#allocation2 + $0x50] sm:$0xf] %vm764, %v694
  %786 = vst.msk [vmem:[#allocation2 + $0x54] sm:$0xf] %vm764, %v695
  %787 = vst.msk [vmem:[#allocation2 + $0x58] sm:$0xf] %vm764, %v696
  %788 = vst.msk [vmem:[#allocation2 + $0x5c] sm:$0xf] %vm764, %v697
  %789 = vst.msk [vmem:[#allocation2 + $0x60] sm:$0xf] %vm764, %v698
  %790 = vst.msk [vmem:[#allocation2 + $0x64] sm:$0xf] %vm764, %v699
  %791 = vst.msk [vmem:[#allocation2 + $0x68] sm:$0xf] %vm764, %v700
  %792 = vst.msk [vmem:[#allocation2 + $0x6c] sm:$0xf] %vm764, %v701
  %793 = vst.msk [vmem:[#allocation2 + $0x70] sm:$0xf] %vm764, %v702
  %794 = vst.msk [vmem:[#allocation2 + $0x74] sm:$0xf] %vm764, %v703
  %795 = vst.msk [vmem:[#allocation2 + $0x78] sm:$0xf] %vm764, %v704
  %796 = vst.msk [vmem:[#allocation2 + $0x7c] sm:$0xf] %vm764, %v705
  %797 = vst.msk [vmem:[#allocation2 + $0x80] sm:$0xf] %vm764, %v706
  %798 = vst.msk [vmem:[#allocation2 + $0x84] sm:$0xf] %vm764, %v707
  %799 = vst.msk [vmem:[#allocation2 + $0x88] sm:$0xf] %vm764, %v708
  %800 = vst.msk [vmem:[#allocation2 + $0x8c] sm:$0xf] %vm764, %v709
  %801 = vst.msk [vmem:[#allocation2 + $0x90] sm:$0xf] %vm764, %v710
  %802 = vst.msk [vmem:[#allocation2 + $0x94] sm:$0xf] %vm764, %v711
  %803 = vst.msk [vmem:[#allocation2 + $0x98] sm:$0xf] %vm764, %v712
  %804 = vst.msk [vmem:[#allocation2 + $0x9c] sm:$0xf] %vm764, %v713
  %805 = vst.msk [vmem:[#allocation2 + $0xa0] sm:$0xf] %vm764, %v714
  %806 = vst.msk [vmem:[#allocation2 + $0xa4] sm:$0xf] %vm764, %v715
  %807 = vst.msk [vmem:[#allocation2 + $0xa8] sm:$0xf] %vm764, %v716
  %808 = vst.msk [vmem:[#allocation2 + $0xac] sm:$0xf] %vm764, %v717
  %809 = vst.msk [vmem:[#allocation2 + $0xb0] sm:$0xf] %vm764, %v718
  %v810 = vld [vmem:[#allocation2] sm:$0xf]
  %v811 = vld [vmem:[#allocation2 + $0x4] sm:$0xf]
  %v812 = vld [vmem:[#allocation2 + $0x8] sm:$0xf]
  %v813 = vld [vmem:[#allocation2 + $0xc] sm:$0xf]
  %v814 = vld [vmem:[#allocation2 + $0x10] sm:$0xf]
  %v815 = vld [vmem:[#allocation2 + $0x14] sm:$0xf]
  %v816 = vld [vmem:[#allocation2 + $0x18] sm:$0xf]
  %v817 = vld [vmem:[#allocation2 + $0x1c] sm:$0xf]
  %v818 = vld [vmem:[#allocation2 + $0x20] sm:$0xf]
  %v819 = vld [vmem:[#allocation2 + $0x24] sm:$0xf]
  %v820 = vld [vmem:[#allocation2 + $0x28] sm:$0xf]
  %v821 = vld [vmem:[#allocation2 + $0x2c] sm:$0xf]
  %v822 = vld [vmem:[#allocation2 + $0x30] sm:$0xf]
  %v823 = vld [vmem:[#allocation2 + $0x34] sm:$0xf]
  %v824 = vld [vmem:[#allocation2 + $0x38] sm:$0xf]
  %v825 = vld [vmem:[#allocation2 + $0x3c] sm:$0xf]
  %v826 = vld [vmem:[#allocation2 + $0x40] sm:$0xf]
  %v827 = vld [vmem:[#allocation2 + $0x44] sm:$0xf]
  %v828 = vld [vmem:[#allocation2 + $0x48] sm:$0xf]
  %v829 = vld [vmem:[#allocation2 + $0x4c] sm:$0xf]
  %v830 = vld [vmem:[#allocation2 + $0x50] sm:$0xf]
  %v831 = vld [vmem:[#allocation2 + $0x54] sm:$0xf]
  %v832 = vld [vmem:[#allocation2 + $0x58] sm:$0xf]
  %v833 = vld [vmem:[#allocation2 + $0x5c] sm:$0xf]
  %v834 = vld [vmem:[#allocation2 + $0x60] sm:$0xf]
  %v835 = vld [vmem:[#allocation2 + $0x64] sm:$0xf]
  %v836 = vld [vmem:[#allocation2 + $0x68] sm:$0xf]
  %v837 = vld [vmem:[#allocation2 + $0x6c] sm:$0xf]
  %v838 = vld [vmem:[#allocation2 + $0x70] sm:$0xf]
  %v839 = vld [vmem:[#allocation2 + $0x74] sm:$0xf]
  %v840 = vld [vmem:[#allocation2 + $0x78] sm:$0xf]
  %v841 = vld [vmem:[#allocation2 + $0x7c] sm:$0xf]
  %v842 = vld [vmem:[#allocation2 + $0x80] sm:$0xf]
  %v843 = vld [vmem:[#allocation2 + $0x84] sm:$0xf]
  %v844 = vld [vmem:[#allocation2 + $0x88] sm:$0xf]
  %v845 = vld [vmem:[#allocation2 + $0x8c] sm:$0xf]
  %v846 = vld [vmem:[#allocation2 + $0x90] sm:$0xf]
  %v847 = vld [vmem:[#allocation2 + $0x94] sm:$0xf]
  %v848 = vld [vmem:[#allocation2 + $0x98] sm:$0xf]
  %v849 = vld [vmem:[#allocation2 + $0x9c] sm:$0xf]
  %v850 = vld [vmem:[%s1] sm:$0xf]
  %v851 = vld [vmem:[%s1 + $0x4] sm:$0xf]
  %v852 = vld [vmem:[%s1 + $0x8] sm:$0xf]
  %v853 = vld [vmem:[%s1 + $0xc] sm:$0xf]
  %v854 = vld [vmem:[#allocation2 + $0xa0] sm:$0x1]
  %v855 = vld [vmem:[%s1 + $0x10] sm:$0xf]
  %v856 = vld [vmem:[%s1 + $0x14] sm:$0xf]
  %v857 = vld [vmem:[%s1 + $0x18] sm:$0xf]
  %v858 = vld [vmem:[%s1 + $0x1c] sm:$0xf]
  %v900 = vunpack.c.l.b16 %v810
  %v901 = vunpack.c.l.b16 %v811
  %v902 = vunpack.c.l.b16 %v812
  %v903 = vunpack.c.l.b16 %v813
  %v904 = vunpack.c.l.b16 %v814
  %v905 = vunpack.c.l.b16 %v815
  %v906 = vunpack.c.l.b16 %v816
  %v907 = vunpack.c.l.b16 %v817
  %v908 = vunpack.c.l.b16 %v818
  %v909 = vunpack.c.l.b16 %v819
  %v910 = vunpack.c.l.b16 %v820
  %v911 = vunpack.c.l.b16 %v821
  %v912 = vunpack.c.l.b16 %v822
  %v913 = vunpack.c.l.b16 %v823
  %v914 = vunpack.c.l.b16 %v824
  %v915 = vunpack.c.l.b16 %v825
  %v916 = vunpack.c.l.b16 %v826
  %v917 = vunpack.c.l.b16 %v827
  %v918 = vunpack.c.l.b16 %v828
  %v919 = vunpack.c.l.b16 %v829
  %v920 = vunpack.c.l.b16 %v830
  %v921 = vunpack.c.l.b16 %v831
  %v922 = vunpack.c.l.b16 %v832
  %v923 = vunpack.c.l.b16 %v833
  %v924 = vunpack.c.l.b16 %v834
  %v925 = vunpack.c.l.b16 %v835
  %v926 = vunpack.c.l.b16 %v836
  %v927 = vunpack.c.l.b16 %v837
  %v928 = vunpack.c.l.b16 %v838
  %v929 = vunpack.c.l.b16 %v839
  %v930 = vunpack.c.l.b16 %v840
  %v931 = vunpack.c.l.b16 %v841
  %v932 = vunpack.c.l.b16 %v842
  %v933 = vunpack.c.l.b16 %v843
  %v934 = vunpack.c.l.b16 %v844
  %v935 = vunpack.c.l.b16 %v845
  %v936 = vunpack.c.l.b16 %v846
  %v937 = vunpack.c.l.b16 %v847
  %v938 = vunpack.c.l.b16 %v848
  %v939 = vunpack.c.l.b16 %v849
  %v940 = vunpack.c.l.b16 %v854
  %v941 = vpack.c.b16 %v901, %v900
  %v942 = vpack.c.b16 %v903, %v902
  %v943 = vpack.c.b16 %v905, %v904
  %v944 = vpack.c.b16 %v907, %v906
  %v945 = vpack.c.b16 %v909, %v908
  %v946 = vpack.c.b16 %v911, %v910
  %v947 = vpack.c.b16 %v913, %v912
  %v948 = vpack.c.b16 %v915, %v914
  %v949 = vpack.c.b16 %v917, %v916
  %v950 = vpack.c.b16 %v919, %v918
  %v951 = vpack.c.b16 %v921, %v920
  %v952 = vpack.c.b16 %v923, %v922
  %v953 = vpack.c.b16 %v925, %v924
  %v954 = vpack.c.b16 %v927, %v926
  %v955 = vpack.c.b16 %v929, %v928
  %v956 = vpack.c.b16 %v931, %v930
  %v957 = vpack.c.b16 %v933, %v932
  %v958 = vpack.c.b16 %v935, %v934
  %v959 = vpack.c.b16 %v937, %v936
  %v960 = vpack.c.b16 %v939, %v938
  %v961 = vpack.c.b16 %v940, %v940
  %vm962 = vsmask.f32 7424
  %v964 = vshrl.u32 %v941, 16
  %v966 = vshll.u32 %v941, 16
  %v968 = vrot.slane %v966, 1
  %v969 = vor.u32 %v964, %v968
  %v971 = vshll.u32 %v942, 16
  %v973 = vrot.slane %v971, 1
  %v974 = vsel %vm962, %v969, %v973
  %v975 = vshrl.u32 %v942, 16
  %v977 = vor.u32 %v975, %v973
  %v979 = vshll.u32 %v943, 16
  %v981 = vrot.slane %v979, 1
  %v982 = vsel %vm962, %v977, %v981
  %v983 = vshrl.u32 %v943, 16
  %v985 = vor.u32 %v983, %v981
  %v987 = vshll.u32 %v944, 16
  %v989 = vrot.slane %v987, 1
  %v990 = vsel %vm962, %v985, %v989
  %v991 = vshrl.u32 %v944, 16
  %v993 = vor.u32 %v991, %v989
  %v995 = vshll.u32 %v945, 16
  %v997 = vrot.slane %v995, 1
  %v998 = vsel %vm962, %v993, %v997
  %v999 = vshrl.u32 %v945, 16
  %v1001 = vor.u32 %v999, %v997
  %v1003 = vshll.u32 %v946, 16
  %v1005 = vrot.slane %v1003, 1
  %v1006 = vsel %vm962, %v1001, %v1005
  %v1007 = vshrl.u32 %v946, 16
  %v1009 = vor.u32 %v1007, %v1005
  %v1011 = vshll.u32 %v947, 16
  %v1013 = vrot.slane %v1011, 1
  %v1014 = vsel %vm962, %v1009, %v1013
  %v1015 = vshrl.u32 %v947, 16
  %v1017 = vor.u32 %v1015, %v1013
  %v1019 = vshll.u32 %v948, 16
  %v1021 = vrot.slane %v1019, 1
  %v1022 = vsel %vm962, %v1017, %v1021
  %v1023 = vshrl.u32 %v948, 16
  %v1025 = vor.u32 %v1023, %v1021
  %v1027 = vshll.u32 %v949, 16
  %v1029 = vrot.slane %v1027, 1
  %v1030 = vsel %vm962, %v1025, %v1029
  %v1031 = vshrl.u32 %v949, 16
  %v1033 = vor.u32 %v1031, %v1029
  %v1035 = vshll.u32 %v950, 16
  %v1037 = vrot.slane %v1035, 1
  %v1038 = vsel %vm962, %v1033, %v1037
  %v1039 = vshrl.u32 %v950, 16
  %v1041 = vor.u32 %v1039, %v1037
  %v1043 = vshll.u32 %v951, 16
  %v1045 = vrot.slane %v1043, 1
  %v1046 = vsel %vm962, %v1041, %v1045
  %v1047 = vshrl.u32 %v951, 16
  %v1049 = vor.u32 %v1047, %v1045
  %v1051 = vshll.u32 %v952, 16
  %v1053 = vrot.slane %v1051, 1
  %v1054 = vsel %vm962, %v1049, %v1053
  %v1055 = vshrl.u32 %v952, 16
  %v1057 = vor.u32 %v1055, %v1053
  %v1059 = vshll.u32 %v953, 16
  %v1061 = vrot.slane %v1059, 1
  %v1062 = vsel %vm962, %v1057, %v1061
  %v1063 = vshrl.u32 %v953, 16
  %v1065 = vor.u32 %v1063, %v1061
  %v1067 = vshll.u32 %v954, 16
  %v1069 = vrot.slane %v1067, 1
  %v1070 = vsel %vm962, %v1065, %v1069
  %v1071 = vshrl.u32 %v954, 16
  %v1073 = vor.u32 %v1071, %v1069
  %v1075 = vshll.u32 %v955, 16
  %v1077 = vrot.slane %v1075, 1
  %v1078 = vsel %vm962, %v1073, %v1077
  %v1079 = vshrl.u32 %v955, 16
  %v1081 = vor.u32 %v1079, %v1077
  %v1083 = vshll.u32 %v956, 16
  %v1085 = vrot.slane %v1083, 1
  %v1086 = vsel %vm962, %v1081, %v1085
  %v1087 = vshrl.u32 %v956, 16
  %v1089 = vor.u32 %v1087, %v1085
  %v1091 = vshll.u32 %v957, 16
  %v1093 = vrot.slane %v1091, 1
  %v1094 = vsel %vm962, %v1089, %v1093
  %v1095 = vshrl.u32 %v957, 16
  %v1097 = vor.u32 %v1095, %v1093
  %v1099 = vshll.u32 %v958, 16
  %v1101 = vrot.slane %v1099, 1
  %v1102 = vsel %vm962, %v1097, %v1101
  %v1103 = vshrl.u32 %v958, 16
  %v1105 = vor.u32 %v1103, %v1101
  %v1107 = vshll.u32 %v959, 16
  %v1109 = vrot.slane %v1107, 1
  %v1110 = vsel %vm962, %v1105, %v1109
  %v1111 = vshrl.u32 %v959, 16
  %v1113 = vor.u32 %v1111, %v1109
  %v1115 = vshll.u32 %v960, 16
  %v1117 = vrot.slane %v1115, 1
  %v1118 = vsel %vm962, %v1113, %v1117
  %v1119 = vshrl.u32 %v960, 16
  %v1121 = vor.u32 %v1119, %v1117
  %v1123 = vshll.u32 %v961, 16
  %v1125 = vrot.slane %v1123, 1
  %v1126 = vsel %vm962, %v1121, %v1125
  %v1131 = vunpack.c.l.b16 %v855
  %v1132 = vunpack.c.l.b16 %v856
  %v1133 = vunpack.c.l.b16 %v857
  %v1134 = vunpack.c.l.b16 %v858
  %v1135 = vpack.c.b16 %v1132, %v1131
  %v1136 = vpack.c.b16 %v1134, %v1133
  %vm1139 = vcmask 261120
  %v1141 = vsel %vm1139, %v974, 0
  %v1144 = vsel %vm1139, %v982, 0
  %v1147 = vsel %vm1139, %v990, 0
  %v1150 = vsel %vm1139, %v998, 0
  %v1153 = vsel %vm1139, %v1006, 0
  %v1156 = vsel %vm1139, %v1014, 0
  %v1159 = vsel %vm1139, %v1022, 0
  %v1162 = vsel %vm1139, %v1030, 0
  %v1165 = vsel %vm1139, %v1038, 0
  %v1168 = vsel %vm1139, %v1046, 0
  %v1171 = vsel %vm1139, %v1054, 0
  %v1174 = vsel %vm1139, %v1062, 0
  %v1177 = vsel %vm1139, %v1070, 0
  %v1180 = vsel %vm1139, %v1078, 0
  %v1183 = vsel %vm1139, %v1086, 0
  %v1186 = vsel %vm1139, %v1094, 0
  %v1189 = vsel %vm1139, %v1102, 0
  %v1192 = vsel %vm1139, %v1110, 0
  %v1195 = vsel %vm1139, %v1118, 0
  %v1198 = vsel %vm1139, %v1126, 0
  %1200 = vmatprep.subr.bf16.mxu0 0
  %1201 = vmatpush1.bf16.msra.mxu0 %v1135
  %1202 = vmatprep.subr.bf16.mxu0 0
  %1203 = vmatpush1.bf16.msra.mxu0 %v1136
  %1204 = vmatprep.subr.bf16.mxu0 0
  %1205 = vmatpush1.bf16.msra.mxu0 0
  %1206 = vmatprep.subr.bf16.mxu0 0
  %1207 = vmatpush1.bf16.msra.mxu0 0
  %1208 = vmatprep.subr.bf16.mxu0 0
  %1209 = vmatpush1.bf16.msra.mxu0 0
  %1210 = vmatprep.subr.bf16.mxu0 0
  %1211 = vmatpush1.bf16.msra.mxu0 0
  %1212 = vmatprep.subr.bf16.mxu0 0
  %1213 = vmatpush1.bf16.msra.mxu0 0
  %1214 = vmatprep.subr.bf16.mxu0 0
  %1215 = vmatpush1.bf16.msra.mxu0 0
  %1216 = vmatprep.subr.bf16.mxu0 0
  %1217 = vmatpush1.bf16.msra.mxu0 0
  %1218 = vmatprep.subr.bf16.mxu0 0
  %1219 = vmatpush1.bf16.msra.mxu0 0
  %1220 = vmatprep.subr.bf16.mxu0 0
  %1221 = vmatpush1.bf16.msra.mxu0 0
  %1222 = vmatprep.subr.bf16.mxu0 0
  %1223 = vmatpush1.bf16.msra.mxu0 0
  %1224 = vmatprep.subr.bf16.mxu0 0
  %1225 = vmatpush1.bf16.msra.mxu0 0
  %1226 = vmatprep.subr.bf16.mxu0 0
  %1227 = vmatpush1.bf16.msra.mxu0 0
  %1228 = vmatprep.subr.bf16.mxu0 0
  %1229 = vmatpush1.bf16.msra.mxu0 0
  %1230 = vmatprep.subr.bf16.mxu0 0
  %1231 = vmatpush1.bf16.msra.mxu0 0
  %1232 = vmatprep.mubr.bf16.mxu0 0
  %1233 = vmatmul.mubr.bf16.gmra.mrb[0].mxu0 %v1141
  %v1234 = vpop.f32.mrb[0].mxu0
  %v1235 = vadd.f32 0.0, %v1234
  %v1236 = vpop.f32.mrb[0].mxu0
  %v1237 = vpop.f32.mrb[0].mxu0
  %v1238 = vadd.f32 0.0, %v1237
  %v1239 = vpop.f32.mrb[0].mxu0
  %1240 = vmatprep.mubr.bf16.mxu0 0
  %1241 = vmatmul.mubr.bf16.gmra.mrb[0].mxu0 %v1144
  %v1242 = vpop.f32.mrb[0].mxu0
  %v1243 = vadd.f32 0.0, %v1242
  %v1244 = vpop.f32.mrb[0].mxu0
  %v1245 = vpop.f32.mrb[0].mxu0
  %v1246 = vadd.f32 0.0, %v1245
  %v1247 = vpop.f32.mrb[0].mxu0
  %1248 = vmatprep.mubr.bf16.mxu0 0
  %1249 = vmatmul.mubr.bf16.gmra.mrb[0].mxu0 %v1147
  %v1250 = vpop.f32.mrb[0].mxu0
  %v1251 = vadd.f32 0.0, %v1250
  %v1252 = vpop.f32.mrb[0].mxu0
  %v1253 = vpop.f32.mrb[0].mxu0
  %v1254 = vadd.f32 0.0, %v1253
  %v1255 = vpop.f32.mrb[0].mxu0
  %1256 = vmatprep.mubr.bf16.mxu0 0
  %1257 = vmatmul.mubr.bf16.gmra.mrb[0].mxu0 %v1150
  %v1258 = vpop.f32.mrb[0].mxu0
  %v1259 = vadd.f32 0.0, %v1258
  %v1260 = vpop.f32.mrb[0].mxu0
  %v1261 = vpop.f32.mrb[0].mxu0
  %v1262 = vadd.f32 0.0, %v1261
  %v1263 = vpop.f32.mrb[0].mxu0
  %1264 = vmatprep.mubr.bf16.mxu0 0
  %1265 = vmatmul.mubr.bf16.gmra.mrb[0].mxu0 %v1153
  %v1266 = vpop.f32.mrb[0].mxu0
  %v1267 = vadd.f32 0.0, %v1266
  %v1268 = vpop.f32.mrb[0].mxu0
  %v1269 = vpop.f32.mrb[0].mxu0
  %v1270 = vadd.f32 0.0, %v1269
  %v1271 = vpop.f32.mrb[0].mxu0
  %1272 = vmatprep.mubr.bf16.mxu0 0
  %1273 = vmatmul.mubr.bf16.gmra.mrb[0].mxu0 %v1156
  %v1274 = vpop.f32.mrb[0].mxu0
  %v1275 = vadd.f32 0.0, %v1274
  %v1276 = vpop.f32.mrb[0].mxu0
  %v1277 = vpop.f32.mrb[0].mxu0
  %v1278 = vadd.f32 0.0, %v1277
  %v1279 = vpop.f32.mrb[0].mxu0
  %1280 = vmatprep.mubr.bf16.mxu0 0
  %1281 = vmatmul.mubr.bf16.gmra.mrb[0].mxu0 %v1159
  %v1282 = vpop.f32.mrb[0].mxu0
  %v1283 = vadd.f32 0.0, %v1282
  %v1284 = vpop.f32.mrb[0].mxu0
  %v1285 = vpop.f32.mrb[0].mxu0
  %v1286 = vadd.f32 0.0, %v1285
  %v1287 = vpop.f32.mrb[0].mxu0
  %1288 = vmatprep.mubr.bf16.mxu0 0
  %1289 = vmatmul.mubr.bf16.gmra.mrb[0].mxu0 %v1162
  %v1290 = vpop.f32.mrb[0].mxu0
  %v1291 = vadd.f32 0.0, %v1290
  %v1292 = vpop.f32.mrb[0].mxu0
  %v1293 = vpop.f32.mrb[0].mxu0
  %v1294 = vadd.f32 0.0, %v1293
  %v1295 = vpop.f32.mrb[0].mxu0
  %1296 = vmatprep.mubr.bf16.mxu0 0
  %1297 = vmatmul.mubr.bf16.gmra.mrb[0].mxu0 %v1165
  %v1298 = vpop.f32.mrb[0].mxu0
  %v1299 = vadd.f32 0.0, %v1298
  %v1300 = vpop.f32.mrb[0].mxu0
  %v1301 = vpop.f32.mrb[0].mxu0
  %v1302 = vadd.f32 0.0, %v1301
  %v1303 = vpop.f32.mrb[0].mxu0
  %1304 = vmatprep.mubr.bf16.mxu0 0
  %1305 = vmatmul.mubr.bf16.gmra.mrb[0].mxu0 %v1168
  %v1306 = vpop.f32.mrb[0].mxu0
  %v1307 = vadd.f32 0.0, %v1306
  %v1308 = vpop.f32.mrb[0].mxu0
  %v1309 = vpop.f32.mrb[0].mxu0
  %v1310 = vadd.f32 0.0, %v1309
  %v1311 = vpop.f32.mrb[0].mxu0
  %1312 = vmatprep.mubr.bf16.mxu0 0
  %1313 = vmatmul.mubr.bf16.gmra.mrb[0].mxu0 %v1171
  %v1314 = vpop.f32.mrb[0].mxu0
  %v1315 = vadd.f32 0.0, %v1314
  %v1316 = vpop.f32.mrb[0].mxu0
  %v1317 = vpop.f32.mrb[0].mxu0
  %v1318 = vadd.f32 0.0, %v1317
  %v1319 = vpop.f32.mrb[0].mxu0
  %1320 = vmatprep.mubr.bf16.mxu0 0
  %1321 = vmatmul.mubr.bf16.gmra.mrb[0].mxu0 %v1174
  %v1322 = vpop.f32.mrb[0].mxu0
  %v1323 = vadd.f32 0.0, %v1322
  %v1324 = vpop.f32.mrb[0].mxu0
  %v1325 = vpop.f32.mrb[0].mxu0
  %v1326 = vadd.f32 0.0, %v1325
  %v1327 = vpop.f32.mrb[0].mxu0
  %1328 = vmatprep.mubr.bf16.mxu0 0
  %1329 = vmatmul.mubr.bf16.gmra.mrb[0].mxu0 %v1177
  %v1330 = vpop.f32.mrb[0].mxu0
  %v1331 = vadd.f32 0.0, %v1330
  %v1332 = vpop.f32.mrb[0].mxu0
  %v1333 = vpop.f32.mrb[0].mxu0
  %v1334 = vadd.f32 0.0, %v1333
  %v1335 = vpop.f32.mrb[0].mxu0
  %1336 = vmatprep.mubr.bf16.mxu0 0
  %1337 = vmatmul.mubr.bf16.gmra.mrb[0].mxu0 %v1180
  %v1338 = vpop.f32.mrb[0].mxu0
  %v1339 = vadd.f32 0.0, %v1338
  %v1340 = vpop.f32.mrb[0].mxu0
  %v1341 = vpop.f32.mrb[0].mxu0
  %v1342 = vadd.f32 0.0, %v1341
  %v1343 = vpop.f32.mrb[0].mxu0
  %1344 = vmatprep.mubr.bf16.mxu0 0
  %1345 = vmatmul.mubr.bf16.gmra.mrb[0].mxu0 %v1183
  %v1346 = vpop.f32.mrb[0].mxu0
  %v1347 = vadd.f32 0.0, %v1346
  %v1348 = vpop.f32.mrb[0].mxu0
  %v1349 = vpop.f32.mrb[0].mxu0
  %v1350 = vadd.f32 0.0, %v1349
  %v1351 = vpop.f32.mrb[0].mxu0
  %1352 = vmatprep.mubr.bf16.mxu0 0
  %1353 = vmatmul.mubr.bf16.gmra.mrb[0].mxu0 %v1186
  %v1354 = vpop.f32.mrb[0].mxu0
  %v1355 = vadd.f32 0.0, %v1354
  %v1356 = vpop.f32.mrb[0].mxu0
  %v1357 = vpop.f32.mrb[0].mxu0
  %v1358 = vadd.f32 0.0, %v1357
  %v1359 = vpop.f32.mrb[0].mxu0
  %1360 = vmatprep.mubr.bf16.mxu0 0
  %1361 = vmatmul.mubr.bf16.gmra.mrb[0].mxu0 %v1189
  %v1362 = vpop.f32.mrb[0].mxu0
  %v1363 = vadd.f32 0.0, %v1362
  %v1364 = vpop.f32.mrb[0].mxu0
  %v1365 = vpop.f32.mrb[0].mxu0
  %v1366 = vadd.f32 0.0, %v1365
  %v1367 = vpop.f32.mrb[0].mxu0
  %1368 = vmatprep.mubr.bf16.mxu0 0
  %1369 = vmatmul.mubr.bf16.gmra.mrb[0].mxu0 %v1192
  %v1370 = vpop.f32.mrb[0].mxu0
  %v1371 = vadd.f32 0.0, %v1370
  %v1372 = vpop.f32.mrb[0].mxu0
  %v1373 = vpop.f32.mrb[0].mxu0
  %v1374 = vadd.f32 0.0, %v1373
  %v1375 = vpop.f32.mrb[0].mxu0
  %1376 = vmatprep.mubr.bf16.mxu0 0
  %1377 = vmatmul.mubr.bf16.gmra.mrb[0].mxu0 %v1195
  %v1378 = vpop.f32.mrb[0].mxu0
  %v1379 = vadd.f32 0.0, %v1378
  %v1380 = vpop.f32.mrb[0].mxu0
  %v1381 = vpop.f32.mrb[0].mxu0
  %v1382 = vadd.f32 0.0, %v1381
  %v1383 = vpop.f32.mrb[0].mxu0
  %1384 = vmatprep.mubr.bf16.mxu0 0
  %1385 = vmatmul.mubr.bf16.gmra.mrb[0].mxu0 %v1198
  %v1386 = vpop.f32.mrb[0].mxu0
  %v1387 = vadd.f32 0.0, %v1386
  %v1388 = vpop.f32.mrb[0].mxu0
  %v1389 = vpop.f32.mrb[0].mxu0
  %v1390 = vadd.f32 0.0, %v1389
  %v1391 = vpop.f32.mrb[0].mxu0
  %1392 = vdwg.mxu0
  %v1397 = vunpack.c.l.b16 %v850
  %v1398 = vunpack.c.l.b16 %v851
  %v1399 = vunpack.c.l.b16 %v852
  %v1400 = vunpack.c.l.b16 %v853
  %v1401 = vpack.c.b16 %v1398, %v1397
  %v1402 = vpack.c.b16 %v1400, %v1399
  %v1405 = vsel %vm1139, %v941, 0
  %v1407 = vsel %vm1139, %v942, 0
  %v1409 = vsel %vm1139, %v943, 0
  %v1411 = vsel %vm1139, %v944, 0
  %v1413 = vsel %vm1139, %v945, 0
  %v1415 = vsel %vm1139, %v946, 0
  %v1417 = vsel %vm1139, %v947, 0
  %v1419 = vsel %vm1139, %v948, 0
  %v1421 = vsel %vm1139, %v949, 0
  %v1423 = vsel %vm1139, %v950, 0
  %v1425 = vsel %vm1139, %v951, 0
  %v1427 = vsel %vm1139, %v952, 0
  %v1429 = vsel %vm1139, %v953, 0
  %v1431 = vsel %vm1139, %v954, 0
  %v1433 = vsel %vm1139, %v955, 0
  %v1435 = vsel %vm1139, %v956, 0
  %v1437 = vsel %vm1139, %v957, 0
  %v1439 = vsel %vm1139, %v958, 0
  %v1441 = vsel %vm1139, %v959, 0
  %v1443 = vsel %vm1139, %v960, 0
  %1445 = vmatprep.subr.bf16.mxu0 0
  %1446 = vmatpush1.bf16.msra.mxu0 %v1401
  %1447 = vmatprep.subr.bf16.mxu0 0
  %1448 = vmatpush1.bf16.msra.mxu0 %v1402
  %1449 = vmatprep.subr.bf16.mxu0 0
  %1450 = vmatpush1.bf16.msra.mxu0 0
  %1451 = vmatprep.subr.bf16.mxu0 0
  %1452 = vmatpush1.bf16.msra.mxu0 0
  %1453 = vmatprep.subr.bf16.mxu0 0
  %1454 = vmatpush1.bf16.msra.mxu0 0
  %1455 = vmatprep.subr.bf16.mxu0 0
  %1456 = vmatpush1.bf16.msra.mxu0 0
  %1457 = vmatprep.subr.bf16.mxu0 0
  %1458 = vmatpush1.bf16.msra.mxu0 0
  %1459 = vmatprep.subr.bf16.mxu0 0
  %1460 = vmatpush1.bf16.msra.mxu0 0
  %1461 = vmatprep.subr.bf16.mxu0 0
  %1462 = vmatpush1.bf16.msra.mxu0 0
  %1463 = vmatprep.subr.bf16.mxu0 0
  %1464 = vmatpush1.bf16.msra.mxu0 0
  %1465 = vmatprep.subr.bf16.mxu0 0
  %1466 = vmatpush1.bf16.msra.mxu0 0
  %1467 = vmatprep.subr.bf16.mxu0 0
  %1468 = vmatpush1.bf16.msra.mxu0 0
  %1469 = vmatprep.subr.bf16.mxu0 0
  %1470 = vmatpush1.bf16.msra.mxu0 0
  %1471 = vmatprep.subr.bf16.mxu0 0
  %1472 = vmatpush1.bf16.msra.mxu0 0
  %1473 = vmatprep.subr.bf16.mxu0 0
  %1474 = vmatpush1.bf16.msra.mxu0 0
  %1475 = vmatprep.subr.bf16.mxu0 0
  %1476 = vmatpush1.bf16.msra.mxu0 0
  %1477 = vmatprep.mubr.bf16.mxu0 0
  %1478 = vmatmul.mubr.bf16.gmra.mrb[0].mxu0 %v1405
  %v1479 = vpop.f32.mrb[0].mxu0
  %v1480 = vadd.f32 %v1235, %v1479
  %v1481 = vpop.f32.mrb[0].mxu0
  %v1482 = vpop.f32.mrb[0].mxu0
  %v1483 = vadd.f32 %v1238, %v1482
  %v1484 = vpop.f32.mrb[0].mxu0
  %1485 = vmatprep.mubr.bf16.mxu0 0
  %1486 = vmatmul.mubr.bf16.gmra.mrb[0].mxu0 %v1407
  %v1487 = vpop.f32.mrb[0].mxu0
  %v1488 = vadd.f32 %v1243, %v1487
  %v1489 = vpop.f32.mrb[0].mxu0
  %v1490 = vpop.f32.mrb[0].mxu0
  %v1491 = vadd.f32 %v1246, %v1490
  %v1492 = vpop.f32.mrb[0].mxu0
  %1493 = vmatprep.mubr.bf16.mxu0 0
  %1494 = vmatmul.mubr.bf16.gmra.mrb[0].mxu0 %v1409
  %v1495 = vpop.f32.mrb[0].mxu0
  %v1496 = vadd.f32 %v1251, %v1495
  %v1497 = vpop.f32.mrb[0].mxu0
  %v1498 = vpop.f32.mrb[0].mxu0
  %v1499 = vadd.f32 %v1254, %v1498
  %v1500 = vpop.f32.mrb[0].mxu0
  %1501 = vmatprep.mubr.bf16.mxu0 0
  %1502 = vmatmul.mubr.bf16.gmra.mrb[0].mxu0 %v1411
  %v1503 = vpop.f32.mrb[0].mxu0
  %v1504 = vadd.f32 %v1259, %v1503
  %v1505 = vpop.f32.mrb[0].mxu0
  %v1506 = vpop.f32.mrb[0].mxu0
  %v1507 = vadd.f32 %v1262, %v1506
  %v1508 = vpop.f32.mrb[0].mxu0
  %1509 = vmatprep.mubr.bf16.mxu0 0
  %1510 = vmatmul.mubr.bf16.gmra.mrb[0].mxu0 %v1413
  %v1511 = vpop.f32.mrb[0].mxu0
  %v1512 = vadd.f32 %v1267, %v1511
  %v1513 = vpop.f32.mrb[0].mxu0
  %v1514 = vpop.f32.mrb[0].mxu0
  %v1515 = vadd.f32 %v1270, %v1514
  %v1516 = vpop.f32.mrb[0].mxu0
  %1517 = vmatprep.mubr.bf16.mxu0 0
  %1518 = vmatmul.mubr.bf16.gmra.mrb[0].mxu0 %v1415
  %v1519 = vpop.f32.mrb[0].mxu0
  %v1520 = vadd.f32 %v1275, %v1519
  %v1521 = vpop.f32.mrb[0].mxu0
  %v1522 = vpop.f32.mrb[0].mxu0
  %v1523 = vadd.f32 %v1278, %v1522
  %v1524 = vpop.f32.mrb[0].mxu0
  %1525 = vmatprep.mubr.bf16.mxu0 0
  %1526 = vmatmul.mubr.bf16.gmra.mrb[0].mxu0 %v1417
  %v1527 = vpop.f32.mrb[0].mxu0
  %v1528 = vadd.f32 %v1283, %v1527
  %v1529 = vpop.f32.mrb[0].mxu0
  %v1530 = vpop.f32.mrb[0].mxu0
  %v1531 = vadd.f32 %v1286, %v1530
  %v1532 = vpop.f32.mrb[0].mxu0
  %1533 = vmatprep.mubr.bf16.mxu0 0
  %1534 = vmatmul.mubr.bf16.gmra.mrb[0].mxu0 %v1419
  %v1535 = vpop.f32.mrb[0].mxu0
  %v1536 = vadd.f32 %v1291, %v1535
  %v1537 = vpop.f32.mrb[0].mxu0
  %v1538 = vpop.f32.mrb[0].mxu0
  %v1539 = vadd.f32 %v1294, %v1538
  %v1540 = vpop.f32.mrb[0].mxu0
  %1541 = vmatprep.mubr.bf16.mxu0 0
  %1542 = vmatmul.mubr.bf16.gmra.mrb[0].mxu0 %v1421
  %v1543 = vpop.f32.mrb[0].mxu0
  %v1544 = vadd.f32 %v1299, %v1543
  %v1545 = vpop.f32.mrb[0].mxu0
  %v1546 = vpop.f32.mrb[0].mxu0
  %v1547 = vadd.f32 %v1302, %v1546
  %v1548 = vpop.f32.mrb[0].mxu0
  %1549 = vmatprep.mubr.bf16.mxu0 0
  %1550 = vmatmul.mubr.bf16.gmra.mrb[0].mxu0 %v1423
  %v1551 = vpop.f32.mrb[0].mxu0
  %v1552 = vadd.f32 %v1307, %v1551
  %v1553 = vpop.f32.mrb[0].mxu0
  %v1554 = vpop.f32.mrb[0].mxu0
  %v1555 = vadd.f32 %v1310, %v1554
  %v1556 = vpop.f32.mrb[0].mxu0
  %1557 = vmatprep.mubr.bf16.mxu0 0
  %1558 = vmatmul.mubr.bf16.gmra.mrb[0].mxu0 %v1425
  %v1559 = vpop.f32.mrb[0].mxu0
  %v1560 = vadd.f32 %v1315, %v1559
  %v1561 = vpop.f32.mrb[0].mxu0
  %v1562 = vpop.f32.mrb[0].mxu0
  %v1563 = vadd.f32 %v1318, %v1562
  %v1564 = vpop.f32.mrb[0].mxu0
  %1565 = vmatprep.mubr.bf16.mxu0 0
  %1566 = vmatmul.mubr.bf16.gmra.mrb[0].mxu0 %v1427
  %v1567 = vpop.f32.mrb[0].mxu0
  %v1568 = vadd.f32 %v1323, %v1567
  %v1569 = vpop.f32.mrb[0].mxu0
  %v1570 = vpop.f32.mrb[0].mxu0
  %v1571 = vadd.f32 %v1326, %v1570
  %v1572 = vpop.f32.mrb[0].mxu0
  %1573 = vmatprep.mubr.bf16.mxu0 0
  %1574 = vmatmul.mubr.bf16.gmra.mrb[0].mxu0 %v1429
  %v1575 = vpop.f32.mrb[0].mxu0
  %v1576 = vadd.f32 %v1331, %v1575
  %v1577 = vpop.f32.mrb[0].mxu0
  %v1578 = vpop.f32.mrb[0].mxu0
  %v1579 = vadd.f32 %v1334, %v1578
  %v1580 = vpop.f32.mrb[0].mxu0
  %1581 = vmatprep.mubr.bf16.mxu0 0
  %1582 = vmatmul.mubr.bf16.gmra.mrb[0].mxu0 %v1431
  %v1583 = vpop.f32.mrb[0].mxu0
  %v1584 = vadd.f32 %v1339, %v1583
  %v1585 = vpop.f32.mrb[0].mxu0
  %v1586 = vpop.f32.mrb[0].mxu0
  %v1587 = vadd.f32 %v1342, %v1586
  %v1588 = vpop.f32.mrb[0].mxu0
  %1589 = vmatprep.mubr.bf16.mxu0 0
  %1590 = vmatmul.mubr.bf16.gmra.mrb[0].mxu0 %v1433
  %v1591 = vpop.f32.mrb[0].mxu0
  %v1592 = vadd.f32 %v1347, %v1591
  %v1593 = vpop.f32.mrb[0].mxu0
  %v1594 = vpop.f32.mrb[0].mxu0
  %v1595 = vadd.f32 %v1350, %v1594
  %v1596 = vpop.f32.mrb[0].mxu0
  %1597 = vmatprep.mubr.bf16.mxu0 0
  %1598 = vmatmul.mubr.bf16.gmra.mrb[0].mxu0 %v1435
  %v1599 = vpop.f32.mrb[0].mxu0
  %v1600 = vadd.f32 %v1355, %v1599
  %v1601 = vpop.f32.mrb[0].mxu0
  %v1602 = vpop.f32.mrb[0].mxu0
  %v1603 = vadd.f32 %v1358, %v1602
  %v1604 = vpop.f32.mrb[0].mxu0
  %1605 = vmatprep.mubr.bf16.mxu0 0
  %1606 = vmatmul.mubr.bf16.gmra.mrb[0].mxu0 %v1437
  %v1607 = vpop.f32.mrb[0].mxu0
  %v1608 = vadd.f32 %v1363, %v1607
  %v1609 = vpop.f32.mrb[0].mxu0
  %v1610 = vpop.f32.mrb[0].mxu0
  %v1611 = vadd.f32 %v1366, %v1610
  %v1612 = vpop.f32.mrb[0].mxu0
  %1613 = vmatprep.mubr.bf16.mxu0 0
  %1614 = vmatmul.mubr.bf16.gmra.mrb[0].mxu0 %v1439
  %v1615 = vpop.f32.mrb[0].mxu0
  %v1616 = vadd.f32 %v1371, %v1615
  %v1617 = vpop.f32.mrb[0].mxu0
  %v1618 = vpop.f32.mrb[0].mxu0
  %v1619 = vadd.f32 %v1374, %v1618
  %v1620 = vpop.f32.mrb[0].mxu0
  %1621 = vmatprep.mubr.bf16.mxu0 0
  %1622 = vmatmul.mubr.bf16.gmra.mrb[0].mxu0 %v1441
  %v1623 = vpop.f32.mrb[0].mxu0
  %v1624 = vadd.f32 %v1379, %v1623
  %v1625 = vpop.f32.mrb[0].mxu0
  %v1626 = vpop.f32.mrb[0].mxu0
  %v1627 = vadd.f32 %v1382, %v1626
  %v1628 = vpop.f32.mrb[0].mxu0
  %1629 = vmatprep.mubr.bf16.mxu0 0
  %1630 = vmatmul.mubr.bf16.gmra.mrb[0].mxu0 %v1443
  %v1631 = vpop.f32.mrb[0].mxu0
  %v1632 = vadd.f32 %v1387, %v1631
  %v1633 = vpop.f32.mrb[0].mxu0
  %v1634 = vpop.f32.mrb[0].mxu0
  %v1635 = vadd.f32 %v1390, %v1634
  %v1636 = vpop.f32.mrb[0].mxu0
  %1637 = vdwg.mxu0
  %v1638 = vld [vmem:[#allocation2] sm:$0xe]
  %v1639 = vld [vmem:[%s1 + $0x20] sm:$0xf]
  %v1640 = vld [vmem:[%s1 + $0x24] sm:$0xf]
  %v1641 = vld [vmem:[%s1 + $0x28] sm:$0xf]
  %v1642 = vld [vmem:[%s1 + $0x2c] sm:$0xf]
  %v1644 = vunpack.c.l.b16 %v1638
  %v1645 = vpack.c.b16 %v901, %v1644
  %vm1646 = vcmask 1046528
  %v1647 = vrot.slane %v1645, 1
  %v1648 = vrot.slane %v942, 1
  %v1649 = vsel %vm1646, %v1647, %v1648
  %v1650 = vrot.slane %v943, 1
  %v1651 = vsel %vm1646, %v1648, %v1650
  %v1652 = vrot.slane %v944, 1
  %v1653 = vsel %vm1646, %v1650, %v1652
  %v1654 = vrot.slane %v945, 1
  %v1655 = vsel %vm1646, %v1652, %v1654
  %v1656 = vrot.slane %v946, 1
  %v1657 = vsel %vm1646, %v1654, %v1656
  %v1658 = vrot.slane %v947, 1
  %v1659 = vsel %vm1646, %v1656, %v1658
  %v1660 = vrot.slane %v948, 1
  %v1661 = vsel %vm1646, %v1658, %v1660
  %v1662 = vrot.slane %v949, 1
  %v1663 = vsel %vm1646, %v1660, %v1662
  %v1664 = vrot.slane %v950, 1
  %v1665 = vsel %vm1646, %v1662, %v1664
  %v1666 = vrot.slane %v951, 1
  %v1667 = vsel %vm1646, %v1664, %v1666
  %v1668 = vrot.slane %v952, 1
  %v1669 = vsel %vm1646, %v1666, %v1668
  %v1670 = vrot.slane %v953, 1
  %v1671 = vsel %vm1646, %v1668, %v1670
  %v1672 = vrot.slane %v954, 1
  %v1673 = vsel %vm1646, %v1670, %v1672
  %v1674 = vrot.slane %v955, 1
  %v1675 = vsel %vm1646, %v1672, %v1674
  %v1676 = vrot.slane %v956, 1
  %v1677 = vsel %vm1646, %v1674, %v1676
  %v1678 = vrot.slane %v957, 1
  %v1679 = vsel %vm1646, %v1676, %v1678
  %v1680 = vrot.slane %v958, 1
  %v1681 = vsel %vm1646, %v1678, %v1680
  %v1682 = vrot.slane %v959, 1
  %v1683 = vsel %vm1646, %v1680, %v1682
  %v1684 = vrot.slane %v960, 1
  %v1685 = vsel %vm1646, %v1682, %v1684
  %v1686 = vrot.slane %v961, 1
  %v1687 = vsel %vm1646, %v1684, %v1686
  %v1692 = vunpack.c.l.b16 %v1639
  %v1693 = vunpack.c.l.b16 %v1640
  %v1694 = vunpack.c.l.b16 %v1641
  %v1695 = vunpack.c.l.b16 %v1642
  %v1696 = vpack.c.b16 %v1693, %v1692
  %v1697 = vpack.c.b16 %v1695, %v1694
  %v1701 = vsel %vm1139, %v1649, 0
  %v1704 = vsel %vm1139, %v1651, 0
  %v1707 = vsel %vm1139, %v1653, 0
  %v1710 = vsel %vm1139, %v1655, 0
  %v1713 = vsel %vm1139, %v1657, 0
  %v1716 = vsel %vm1139, %v1659, 0
  %v1719 = vsel %vm1139, %v1661, 0
  %v1722 = vsel %vm1139, %v1663, 0
  %v1725 = vsel %vm1139, %v1665, 0
  %v1728 = vsel %vm1139, %v1667, 0
  %v1731 = vsel %vm1139, %v1669, 0
  %v1734 = vsel %vm1139, %v1671, 0
  %v1737 = vsel %vm1139, %v1673, 0
  %v1740 = vsel %vm1139, %v1675, 0
  %v1743 = vsel %vm1139, %v1677, 0
  %v1746 = vsel %vm1139, %v1679, 0
  %v1749 = vsel %vm1139, %v1681, 0
  %v1752 = vsel %vm1139, %v1683, 0
  %v1755 = vsel %vm1139, %v1685, 0
  %v1758 = vsel %vm1139, %v1687, 0
  %1760 = vmatprep.subr.bf16.mxu0 0
  %1761 = vmatpush1.bf16.msra.mxu0 %v1696
  %1762 = vmatprep.subr.bf16.mxu0 0
  %1763 = vmatpush1.bf16.msra.mxu0 %v1697
  %1764 = vmatprep.subr.bf16.mxu0 0
  %1765 = vmatpush1.bf16.msra.mxu0 0
  %1766 = vmatprep.subr.bf16.mxu0 0
  %1767 = vmatpush1.bf16.msra.mxu0 0
  %1768 = vmatprep.subr.bf16.mxu0 0
  %1769 = vmatpush1.bf16.msra.mxu0 0
  %1770 = vmatprep.subr.bf16.mxu0 0
  %1771 = vmatpush1.bf16.msra.mxu0 0
  %1772 = vmatprep.subr.bf16.mxu0 0
  %1773 = vmatpush1.bf16.msra.mxu0 0
  %1774 = vmatprep.subr.bf16.mxu0 0
  %1775 = vmatpush1.bf16.msra.mxu0 0
  %1776 = vmatprep.subr.bf16.mxu0 0
  %1777 = vmatpush1.bf16.msra.mxu0 0
  %1778 = vmatprep.subr.bf16.mxu0 0
  %1779 = vmatpush1.bf16.msra.mxu0 0
  %1780 = vmatprep.subr.bf16.mxu0 0
  %1781 = vmatpush1.bf16.msra.mxu0 0
  %1782 = vmatprep.subr.bf16.mxu0 0
  %1783 = vmatpush1.bf16.msra.mxu0 0
  %1784 = vmatprep.subr.bf16.mxu0 0
  %1785 = vmatpush1.bf16.msra.mxu0 0
  %1786 = vmatprep.subr.bf16.mxu0 0
  %1787 = vmatpush1.bf16.msra.mxu0 0
  %1788 = vmatprep.subr.bf16.mxu0 0
  %1789 = vmatpush1.bf16.msra.mxu0 0
  %1790 = vmatprep.subr.bf16.mxu0 0
  %1791 = vmatpush1.bf16.msra.mxu0 0
  %1792 = vmatprep.mubr.bf16.mxu0 0
  %1793 = vmatmul.mubr.bf16.gmra.mrb[0].mxu0 %v1701
  %v1794 = vpop.f32.mrb[0].mxu0
  %v1795 = vadd.f32 0.0, %v1794
  %v1796 = vpop.f32.mrb[0].mxu0
  %v1797 = vpop.f32.mrb[0].mxu0
  %v1798 = vadd.f32 0.0, %v1797
  %v1799 = vpop.f32.mrb[0].mxu0
  %1800 = vmatprep.mubr.bf16.mxu0 0
  %1801 = vmatmul.mubr.bf16.gmra.mrb[0].mxu0 %v1704
  %v1802 = vpop.f32.mrb[0].mxu0
  %v1803 = vadd.f32 0.0, %v1802
  %v1804 = vpop.f32.mrb[0].mxu0
  %v1805 = vpop.f32.mrb[0].mxu0
  %v1806 = vadd.f32 0.0, %v1805
  %v1807 = vpop.f32.mrb[0].mxu0
  %1808 = vmatprep.mubr.bf16.mxu0 0
  %1809 = vmatmul.mubr.bf16.gmra.mrb[0].mxu0 %v1707
  %v1810 = vpop.f32.mrb[0].mxu0
  %v1811 = vadd.f32 0.0, %v1810
  %v1812 = vpop.f32.mrb[0].mxu0
  %v1813 = vpop.f32.mrb[0].mxu0
  %v1814 = vadd.f32 0.0, %v1813
  %v1815 = vpop.f32.mrb[0].mxu0
  %1816 = vmatprep.mubr.bf16.mxu0 0
  %1817 = vmatmul.mubr.bf16.gmra.mrb[0].mxu0 %v1710
  %v1818 = vpop.f32.mrb[0].mxu0
  %v1819 = vadd.f32 0.0, %v1818
  %v1820 = vpop.f32.mrb[0].mxu0
  %v1821 = vpop.f32.mrb[0].mxu0
  %v1822 = vadd.f32 0.0, %v1821
  %v1823 = vpop.f32.mrb[0].mxu0
  %1824 = vmatprep.mubr.bf16.mxu0 0
  %1825 = vmatmul.mubr.bf16.gmra.mrb[0].mxu0 %v1713
  %v1826 = vpop.f32.mrb[0].mxu0
  %v1827 = vadd.f32 0.0, %v1826
  %v1828 = vpop.f32.mrb[0].mxu0
  %v1829 = vpop.f32.mrb[0].mxu0
  %v1830 = vadd.f32 0.0, %v1829
  %v1831 = vpop.f32.mrb[0].mxu0
  %1832 = vmatprep.mubr.bf16.mxu0 0
  %1833 = vmatmul.mubr.bf16.gmra.mrb[0].mxu0 %v1716
  %v1834 = vpop.f32.mrb[0].mxu0
  %v1835 = vadd.f32 0.0, %v1834
  %v1836 = vpop.f32.mrb[0].mxu0
  %v1837 = vpop.f32.mrb[0].mxu0
  %v1838 = vadd.f32 0.0, %v1837
  %v1839 = vpop.f32.mrb[0].mxu0
  %1840 = vmatprep.mubr.bf16.mxu0 0
  %1841 = vmatmul.mubr.bf16.gmra.mrb[0].mxu0 %v1719
  %v1842 = vpop.f32.mrb[0].mxu0
  %v1843 = vadd.f32 0.0, %v1842
  %v1844 = vpop.f32.mrb[0].mxu0
  %v1845 = vpop.f32.mrb[0].mxu0
  %v1846 = vadd.f32 0.0, %v1845
  %v1847 = vpop.f32.mrb[0].mxu0
  %1848 = vmatprep.mubr.bf16.mxu0 0
  %1849 = vmatmul.mubr.bf16.gmra.mrb[0].mxu0 %v1722
  %v1850 = vpop.f32.mrb[0].mxu0
  %v1851 = vadd.f32 0.0, %v1850
  %v1852 = vpop.f32.mrb[0].mxu0
  %v1853 = vpop.f32.mrb[0].mxu0
  %v1854 = vadd.f32 0.0, %v1853
  %v1855 = vpop.f32.mrb[0].mxu0
  %1856 = vmatprep.mubr.bf16.mxu0 0
  %1857 = vmatmul.mubr.bf16.gmra.mrb[0].mxu0 %v1725
  %v1858 = vpop.f32.mrb[0].mxu0
  %v1859 = vadd.f32 0.0, %v1858
  %v1860 = vpop.f32.mrb[0].mxu0
  %v1861 = vpop.f32.mrb[0].mxu0
  %v1862 = vadd.f32 0.0, %v1861
  %v1863 = vpop.f32.mrb[0].mxu0
  %1864 = vmatprep.mubr.bf16.mxu0 0
  %1865 = vmatmul.mubr.bf16.gmra.mrb[0].mxu0 %v1728
  %v1866 = vpop.f32.mrb[0].mxu0
  %v1867 = vadd.f32 0.0, %v1866
  %v1868 = vpop.f32.mrb[0].mxu0
  %v1869 = vpop.f32.mrb[0].mxu0
  %v1870 = vadd.f32 0.0, %v1869
  %v1871 = vpop.f32.mrb[0].mxu0
  %1872 = vmatprep.mubr.bf16.mxu0 0
  %1873 = vmatmul.mubr.bf16.gmra.mrb[0].mxu0 %v1731
  %v1874 = vpop.f32.mrb[0].mxu0
  %v1875 = vadd.f32 0.0, %v1874
  %v1876 = vpop.f32.mrb[0].mxu0
  %v1877 = vpop.f32.mrb[0].mxu0
  %v1878 = vadd.f32 0.0, %v1877
  %v1879 = vpop.f32.mrb[0].mxu0
  %1880 = vmatprep.mubr.bf16.mxu0 0
  %1881 = vmatmul.mubr.bf16.gmra.mrb[0].mxu0 %v1734
  %v1882 = vpop.f32.mrb[0].mxu0
  %v1883 = vadd.f32 0.0, %v1882
  %v1884 = vpop.f32.mrb[0].mxu0
  %v1885 = vpop.f32.mrb[0].mxu0
  %v1886 = vadd.f32 0.0, %v1885
  %v1887 = vpop.f32.mrb[0].mxu0
  %1888 = vmatprep.mubr.bf16.mxu0 0
  %1889 = vmatmul.mubr.bf16.gmra.mrb[0].mxu0 %v1737
  %v1890 = vpop.f32.mrb[0].mxu0
  %v1891 = vadd.f32 0.0, %v1890
  %v1892 = vpop.f32.mrb[0].mxu0
  %v1893 = vpop.f32.mrb[0].mxu0
  %v1894 = vadd.f32 0.0, %v1893
  %v1895 = vpop.f32.mrb[0].mxu0
  %1896 = vmatprep.mubr.bf16.mxu0 0
  %1897 = vmatmul.mubr.bf16.gmra.mrb[0].mxu0 %v1740
  %v1898 = vpop.f32.mrb[0].mxu0
  %v1899 = vadd.f32 0.0, %v1898
  %v1900 = vpop.f32.mrb[0].mxu0
  %v1901 = vpop.f32.mrb[0].mxu0
  %v1902 = vadd.f32 0.0, %v1901
  %v1903 = vpop.f32.mrb[0].mxu0
  %1904 = vmatprep.mubr.bf16.mxu0 0
  %1905 = vmatmul.mubr.bf16.gmra.mrb[0].mxu0 %v1743
  %v1906 = vpop.f32.mrb[0].mxu0
  %v1907 = vadd.f32 0.0, %v1906
  %v1908 = vpop.f32.mrb[0].mxu0
  %v1909 = vpop.f32.mrb[0].mxu0
  %v1910 = vadd.f32 0.0, %v1909
  %v1911 = vpop.f32.mrb[0].mxu0
  %1912 = vmatprep.mubr.bf16.mxu0 0
  %1913 = vmatmul.mubr.bf16.gmra.mrb[0].mxu0 %v1746
  %v1914 = vpop.f32.mrb[0].mxu0
  %v1915 = vadd.f32 0.0, %v1914
  %v1916 = vpop.f32.mrb[0].mxu0
  %v1917 = vpop.f32.mrb[0].mxu0
  %v1918 = vadd.f32 0.0, %v1917
  %v1919 = vpop.f32.mrb[0].mxu0
  %1920 = vmatprep.mubr.bf16.mxu0 0
  %1921 = vmatmul.mubr.bf16.gmra.mrb[0].mxu0 %v1749
  %v1922 = vpop.f32.mrb[0].mxu0
  %v1923 = vadd.f32 0.0, %v1922
  %v1924 = vpop.f32.mrb[0].mxu0
  %v1925 = vpop.f32.mrb[0].mxu0
  %v1926 = vadd.f32 0.0, %v1925
  %v1927 = vpop.f32.mrb[0].mxu0
  %1928 = vmatprep.mubr.bf16.mxu0 0
  %1929 = vmatmul.mubr.bf16.gmra.mrb[0].mxu0 %v1752
  %v1930 = vpop.f32.mrb[0].mxu0
  %v1931 = vadd.f32 0.0, %v1930
  %v1932 = vpop.f32.mrb[0].mxu0
  %v1933 = vpop.f32.mrb[0].mxu0
  %v1934 = vadd.f32 0.0, %v1933
  %v1935 = vpop.f32.mrb[0].mxu0
  %1936 = vmatprep.mubr.bf16.mxu0 0
  %1937 = vmatmul.mubr.bf16.gmra.mrb[0].mxu0 %v1755
  %v1938 = vpop.f32.mrb[0].mxu0
  %v1939 = vadd.f32 0.0, %v1938
  %v1940 = vpop.f32.mrb[0].mxu0
  %v1941 = vpop.f32.mrb[0].mxu0
  %v1942 = vadd.f32 0.0, %v1941
  %v1943 = vpop.f32.mrb[0].mxu0
  %1944 = vmatprep.mubr.bf16.mxu0 0
  %1945 = vmatmul.mubr.bf16.gmra.mrb[0].mxu0 %v1758
  %v1946 = vpop.f32.mrb[0].mxu0
  %v1947 = vadd.f32 0.0, %v1946
  %v1948 = vpop.f32.mrb[0].mxu0
  %v1949 = vpop.f32.mrb[0].mxu0
  %v1950 = vadd.f32 0.0, %v1949
  %v1951 = vpop.f32.mrb[0].mxu0
  %1952 = vdwg.mxu0
  %v1953 = vadd.f32 %v1480, %v1795
  %v1954 = vadd.f32 %v1483, %v1798
  %v1955 = vadd.f32 %v1488, %v1803
  %v1956 = vadd.f32 %v1491, %v1806
  %v1957 = vadd.f32 %v1496, %v1811
  %v1958 = vadd.f32 %v1499, %v1814
  %v1959 = vadd.f32 %v1504, %v1819
  %v1960 = vadd.f32 %v1507, %v1822
  %v1961 = vadd.f32 %v1512, %v1827
  %v1962 = vadd.f32 %v1515, %v1830
  %v1963 = vadd.f32 %v1520, %v1835
  %v1964 = vadd.f32 %v1523, %v1838
  %v1965 = vadd.f32 %v1528, %v1843
  %v1966 = vadd.f32 %v1531, %v1846
  %v1967 = vadd.f32 %v1536, %v1851
  %v1968 = vadd.f32 %v1539, %v1854
  %v1969 = vadd.f32 %v1544, %v1859
  %v1970 = vadd.f32 %v1547, %v1862
  %v1971 = vadd.f32 %v1552, %v1867
  %v1972 = vadd.f32 %v1555, %v1870
  %v1973 = vadd.f32 %v1560, %v1875
  %v1974 = vadd.f32 %v1563, %v1878
  %v1975 = vadd.f32 %v1568, %v1883
  %v1976 = vadd.f32 %v1571, %v1886
  %v1977 = vadd.f32 %v1576, %v1891
  %v1978 = vadd.f32 %v1579, %v1894
  %v1979 = vadd.f32 %v1584, %v1899
  %v1980 = vadd.f32 %v1587, %v1902
  %v1981 = vadd.f32 %v1592, %v1907
  %v1982 = vadd.f32 %v1595, %v1910
  %v1983 = vadd.f32 %v1600, %v1915
  %v1984 = vadd.f32 %v1603, %v1918
  %v1985 = vadd.f32 %v1608, %v1923
  %v1986 = vadd.f32 %v1611, %v1926
  %v1987 = vadd.f32 %v1616, %v1931
  %v1988 = vadd.f32 %v1619, %v1934
  %v1989 = vadd.f32 %v1624, %v1939
  %v1990 = vadd.f32 %v1627, %v1942
  %v1991 = vadd.f32 %v1632, %v1947
  %v1992 = vadd.f32 %v1635, %v1950
  %v1993 = vld [vmem:[#allocation2 + $0x8] sm:$0xf]
  %v1994 = vld [vmem:[#allocation2 + $0xc] sm:$0xf]
  %v1995 = vld [vmem:[#allocation2 + $0x10] sm:$0xf]
  %v1996 = vld [vmem:[#allocation2 + $0x14] sm:$0xf]
  %v1997 = vld [vmem:[#allocation2 + $0x18] sm:$0xf]
  %v1998 = vld [vmem:[#allocation2 + $0x1c] sm:$0xf]
  %v1999 = vld [vmem:[#allocation2 + $0x20] sm:$0xf]
  %v2000 = vld [vmem:[#allocation2 + $0x24] sm:$0xf]
  %v2001 = vld [vmem:[#allocation2 + $0x28] sm:$0xf]
  %v2002 = vld [vmem:[#allocation2 + $0x2c] sm:$0xf]
  %v2003 = vld [vmem:[#allocation2 + $0x30] sm:$0xf]
  %v2004 = vld [vmem:[#allocation2 + $0x34] sm:$0xf]
  %v2005 = vld [vmem:[#allocation2 + $0x38] sm:$0xf]
  %v2006 = vld [vmem:[#allocation2 + $0x3c] sm:$0xf]
  %v2007 = vld [vmem:[#allocation2 + $0x40] sm:$0xf]
  %v2008 = vld [vmem:[#allocation2 + $0x44] sm:$0xf]
  %v2009 = vld [vmem:[#allocation2 + $0x48] sm:$0xf]
  %v2010 = vld [vmem:[#allocation2 + $0x4c] sm:$0xf]
  %v2011 = vld [vmem:[#allocation2 + $0x50] sm:$0xf]
  %v2012 = vld [vmem:[#allocation2 + $0x54] sm:$0xf]
  %v2013 = vld [vmem:[#allocation2 + $0x58] sm:$0xf]
  %v2014 = vld [vmem:[#allocation2 + $0x5c] sm:$0xf]
  %v2015 = vld [vmem:[#allocation2 + $0x60] sm:$0xf]
  %v2016 = vld [vmem:[#allocation2 + $0x64] sm:$0xf]
  %v2017 = vld [vmem:[#allocation2 + $0x68] sm:$0xf]
  %v2018 = vld [vmem:[#allocation2 + $0x6c] sm:$0xf]
  %v2019 = vld [vmem:[#allocation2 + $0x70] sm:$0xf]
  %v2020 = vld [vmem:[#allocation2 + $0x74] sm:$0xf]
  %v2021 = vld [vmem:[#allocation2 + $0x78] sm:$0xf]
  %v2022 = vld [vmem:[#allocation2 + $0x7c] sm:$0xf]
  %v2023 = vld [vmem:[#allocation2 + $0x80] sm:$0xf]
  %v2024 = vld [vmem:[#allocation2 + $0x84] sm:$0xf]
  %v2025 = vld [vmem:[#allocation2 + $0x88] sm:$0xf]
  %v2026 = vld [vmem:[#allocation2 + $0x8c] sm:$0xf]
  %v2027 = vld [vmem:[#allocation2 + $0x90] sm:$0xf]
  %v2028 = vld [vmem:[#allocation2 + $0x94] sm:$0xf]
  %v2029 = vld [vmem:[#allocation2 + $0x98] sm:$0xf]
  %v2030 = vld [vmem:[#allocation2 + $0x9c] sm:$0xf]
  %v2031 = vld [vmem:[#allocation2 + $0xa0] sm:$0xf]
  %v2032 = vld [vmem:[#allocation2 + $0xa4] sm:$0xf]
  %v2033 = vld [vmem:[%s1 + $0x30] sm:$0xf]
  %v2034 = vld [vmem:[%s1 + $0x34] sm:$0xf]
  %v2035 = vld [vmem:[%s1 + $0x38] sm:$0xf]
  %v2036 = vld [vmem:[%s1 + $0x3c] sm:$0xf]
  %v2077 = vunpack.c.l.b16 %v1993
  %v2078 = vunpack.c.l.b16 %v1994
  %v2079 = vunpack.c.l.b16 %v1995
  %v2080 = vunpack.c.l.b16 %v1996
  %v2081 = vunpack.c.l.b16 %v1997
  %v2082 = vunpack.c.l.b16 %v1998
  %v2083 = vunpack.c.l.b16 %v1999
  %v2084 = vunpack.c.l.b16 %v2000
  %v2085 = vunpack.c.l.b16 %v2001
  %v2086 = vunpack.c.l.b16 %v2002
  %v2087 = vunpack.c.l.b16 %v2003
  %v2088 = vunpack.c.l.b16 %v2004
  %v2089 = vunpack.c.l.b16 %v2005
  %v2090 = vunpack.c.l.b16 %v2006
  %v2091 = vunpack.c.l.b16 %v2007
  %v2092 = vunpack.c.l.b16 %v2008
  %v2093 = vunpack.c.l.b16 %v2009
  %v2094 = vunpack.c.l.b16 %v2010
  %v2095 = vunpack.c.l.b16 %v2011
  %v2096 = vunpack.c.l.b16 %v2012
  %v2097 = vunpack.c.l.b16 %v2013
  %v2098 = vunpack.c.l.b16 %v2014
  %v2099 = vunpack.c.l.b16 %v2015
  %v2100 = vunpack.c.l.b16 %v2016
  %v2101 = vunpack.c.l.b16 %v2017
  %v2102 = vunpack.c.l.b16 %v2018
  %v2103 = vunpack.c.l.b16 %v2019
  %v2104 = vunpack.c.l.b16 %v2020
  %v2105 = vunpack.c.l.b16 %v2021
  %v2106 = vunpack.c.l.b16 %v2022
  %v2107 = vunpack.c.l.b16 %v2023
  %v2108 = vunpack.c.l.b16 %v2024
  %v2109 = vunpack.c.l.b16 %v2025
  %v2110 = vunpack.c.l.b16 %v2026
  %v2111 = vunpack.c.l.b16 %v2027
  %v2112 = vunpack.c.l.b16 %v2028
  %v2113 = vunpack.c.l.b16 %v2029
  %v2114 = vunpack.c.l.b16 %v2030
  %v2115 = vunpack.c.l.b16 %v2031
  %v2116 = vunpack.c.l.b16 %v2032
  %v2117 = vpack.c.b16 %v2078, %v2077
  %v2118 = vpack.c.b16 %v2080, %v2079
  %v2119 = vpack.c.b16 %v2082, %v2081
  %v2120 = vpack.c.b16 %v2084, %v2083
  %v2121 = vpack.c.b16 %v2086, %v2085
  %v2122 = vpack.c.b16 %v2088, %v2087
  %v2123 = vpack.c.b16 %v2090, %v2089
  %v2124 = vpack.c.b16 %v2092, %v2091
  %v2125 = vpack.c.b16 %v2094, %v2093
  %v2126 = vpack.c.b16 %v2096, %v2095
  %v2127 = vpack.c.b16 %v2098, %v2097
  %v2128 = vpack.c.b16 %v2100, %v2099
  %v2129 = vpack.c.b16 %v2102, %v2101
  %v2130 = vpack.c.b16 %v2104, %v2103
  %v2131 = vpack.c.b16 %v2106, %v2105
  %v2132 = vpack.c.b16 %v2108, %v2107
  %v2133 = vpack.c.b16 %v2110, %v2109
  %v2134 = vpack.c.b16 %v2112, %v2111
  %v2135 = vpack.c.b16 %v2114, %v2113
  %v2136 = vpack.c.b16 %v2116, %v2115
  %v2141 = vunpack.c.l.b16 %v2033
  %v2142 = vunpack.c.l.b16 %v2034
  %v2143 = vunpack.c.l.b16 %v2035
  %v2144 = vunpack.c.l.b16 %v2036
  %v2145 = vpack.c.b16 %v2142, %v2141
  %v2146 = vpack.c.b16 %v2144, %v2143
  %v2150 = vsel %vm1139, %v2117, 0
  %v2153 = vsel %vm1139, %v2118, 0
  %v2156 = vsel %vm1139, %v2119, 0
  %v2159 = vsel %vm1139, %v2120, 0
  %v2162 = vsel %vm1139, %v2121, 0
  %v2165 = vsel %vm1139, %v2122, 0
  %v2168 = vsel %vm1139, %v2123, 0
  %v2171 = vsel %vm1139, %v2124, 0
  %v2174 = vsel %vm1139, %v2125, 0
  %v2177 = vsel %vm1139, %v2126, 0
  %v2180 = vsel %vm1139, %v2127, 0
  %v2183 = vsel %vm1139, %v2128, 0
  %v2186 = vsel %vm1139, %v2129, 0
  %v2189 = vsel %vm1139, %v2130, 0
  %v2192 = vsel %vm1139, %v2131, 0
  %v2195 = vsel %vm1139, %v2132, 0
  %v2198 = vsel %vm1139, %v2133, 0
  %v2201 = vsel %vm1139, %v2134, 0
  %v2204 = vsel %vm1139, %v2135, 0
  %v2207 = vsel %vm1139, %v2136, 0
  %2209 = vmatprep.subr.bf16.mxu0 0
  %2210 = vmatpush1.bf16.msra.mxu0 %v2145
  %2211 = vmatprep.subr.bf16.mxu0 0
  %2212 = vmatpush1.bf16.msra.mxu0 %v2146
  %2213 = vmatprep.subr.bf16.mxu0 0
  %2214 = vmatpush1.bf16.msra.mxu0 0
  %2215 = vmatprep.subr.bf16.mxu0 0
  %2216 = vmatpush1.bf16.msra.mxu0 0
  %2217 = vmatprep.subr.bf16.mxu0 0
  %2218 = vmatpush1.bf16.msra.mxu0 0
  %2219 = vmatprep.subr.bf16.mxu0 0
  %2220 = vmatpush1.bf16.msra.mxu0 0
  %2221 = vmatprep.subr.bf16.mxu0 0
  %2222 = vmatpush1.bf16.msra.mxu0 0
  %2223 = vmatprep.subr.bf16.mxu0 0
  %2224 = vmatpush1.bf16.msra.mxu0 0
  %2225 = vmatprep.subr.bf16.mxu0 0
  %2226 = vmatpush1.bf16.msra.mxu0 0
  %2227 = vmatprep.subr.bf16.mxu0 0
  %2228 = vmatpush1.bf16.msra.mxu0 0
  %2229 = vmatprep.subr.bf16.mxu0 0
  %2230 = vmatpush1.bf16.msra.mxu0 0
  %2231 = vmatprep.subr.bf16.mxu0 0
  %2232 = vmatpush1.bf16.msra.mxu0 0
  %2233 = vmatprep.subr.bf16.mxu0 0
  %2234 = vmatpush1.bf16.msra.mxu0 0
  %2235 = vmatprep.subr.bf16.mxu0 0
  %2236 = vmatpush1.bf16.msra.mxu0 0
  %2237 = vmatprep.subr.bf16.mxu0 0
  %2238 = vmatpush1.bf16.msra.mxu0 0
  %2239 = vmatprep.subr.bf16.mxu0 0
  %2240 = vmatpush1.bf16.msra.mxu0 0
  %2241 = vmatprep.mubr.bf16.mxu0 0
  %2242 = vmatmul.mubr.bf16.gmra.mrb[0].mxu0 %v2150
  %v2243 = vpop.f32.mrb[0].mxu0
  %v2244 = vadd.f32 0.0, %v2243
  %v2245 = vpop.f32.mrb[0].mxu0
  %v2246 = vpop.f32.mrb[0].mxu0
  %v2247 = vadd.f32 0.0, %v2246
  %v2248 = vpop.f32.mrb[0].mxu0
  %2249 = vmatprep.mubr.bf16.mxu0 0
  %2250 = vmatmul.mubr.bf16.gmra.mrb[0].mxu0 %v2153
  %v2251 = vpop.f32.mrb[0].mxu0
  %v2252 = vadd.f32 0.0, %v2251
  %v2253 = vpop.f32.mrb[0].mxu0
  %v2254 = vpop.f32.mrb[0].mxu0
  %v2255 = vadd.f32 0.0, %v2254
  %v2256 = vpop.f32.mrb[0].mxu0
  %2257 = vmatprep.mubr.bf16.mxu0 0
  %2258 = vmatmul.mubr.bf16.gmra.mrb[0].mxu0 %v2156
  %v2259 = vpop.f32.mrb[0].mxu0
  %v2260 = vadd.f32 0.0, %v2259
  %v2261 = vpop.f32.mrb[0].mxu0
  %v2262 = vpop.f32.mrb[0].mxu0
  %v2263 = vadd.f32 0.0, %v2262
  %v2264 = vpop.f32.mrb[0].mxu0
  %2265 = vmatprep.mubr.bf16.mxu0 0
  %2266 = vmatmul.mubr.bf16.gmra.mrb[0].mxu0 %v2159
  %v2267 = vpop.f32.mrb[0].mxu0
  %v2268 = vadd.f32 0.0, %v2267
  %v2269 = vpop.f32.mrb[0].mxu0
  %v2270 = vpop.f32.mrb[0].mxu0
  %v2271 = vadd.f32 0.0, %v2270
  %v2272 = vpop.f32.mrb[0].mxu0
  %2273 = vmatprep.mubr.bf16.mxu0 0
  %2274 = vmatmul.mubr.bf16.gmra.mrb[0].mxu0 %v2162
  %v2275 = vpop.f32.mrb[0].mxu0
  %v2276 = vadd.f32 0.0, %v2275
  %v2277 = vpop.f32.mrb[0].mxu0
  %v2278 = vpop.f32.mrb[0].mxu0
  %v2279 = vadd.f32 0.0, %v2278
  %v2280 = vpop.f32.mrb[0].mxu0
  %2281 = vmatprep.mubr.bf16.mxu0 0
  %2282 = vmatmul.mubr.bf16.gmra.mrb[0].mxu0 %v2165
  %v2283 = vpop.f32.mrb[0].mxu0
  %v2284 = vadd.f32 0.0, %v2283
  %v2285 = vpop.f32.mrb[0].mxu0
  %v2286 = vpop.f32.mrb[0].mxu0
  %v2287 = vadd.f32 0.0, %v2286
  %v2288 = vpop.f32.mrb[0].mxu0
  %2289 = vmatprep.mubr.bf16.mxu0 0
  %2290 = vmatmul.mubr.bf16.gmra.mrb[0].mxu0 %v2168
  %v2291 = vpop.f32.mrb[0].mxu0
  %v2292 = vadd.f32 0.0, %v2291
  %v2293 = vpop.f32.mrb[0].mxu0
  %v2294 = vpop.f32.mrb[0].mxu0
  %v2295 = vadd.f32 0.0, %v2294
  %v2296 = vpop.f32.mrb[0].mxu0
  %2297 = vmatprep.mubr.bf16.mxu0 0
  %2298 = vmatmul.mubr.bf16.gmra.mrb[0].mxu0 %v2171
  %v2299 = vpop.f32.mrb[0].mxu0
  %v2300 = vadd.f32 0.0, %v2299
  %v2301 = vpop.f32.mrb[0].mxu0
  %v2302 = vpop.f32.mrb[0].mxu0
  %v2303 = vadd.f32 0.0, %v2302
  %v2304 = vpop.f32.mrb[0].mxu0
  %2305 = vmatprep.mubr.bf16.mxu0 0
  %2306 = vmatmul.mubr.bf16.gmra.mrb[0].mxu0 %v2174
  %v2307 = vpop.f32.mrb[0].mxu0
  %v2308 = vadd.f32 0.0, %v2307
  %v2309 = vpop.f32.mrb[0].mxu0
  %v2310 = vpop.f32.mrb[0].mxu0
  %v2311 = vadd.f32 0.0, %v2310
  %v2312 = vpop.f32.mrb[0].mxu0
  %2313 = vmatprep.mubr.bf16.mxu0 0
  %2314 = vmatmul.mubr.bf16.gmra.mrb[0].mxu0 %v2177
  %v2315 = vpop.f32.mrb[0].mxu0
  %v2316 = vadd.f32 0.0, %v2315
  %v2317 = vpop.f32.mrb[0].mxu0
  %v2318 = vpop.f32.mrb[0].mxu0
  %v2319 = vadd.f32 0.0, %v2318
  %v2320 = vpop.f32.mrb[0].mxu0
  %2321 = vmatprep.mubr.bf16.mxu0 0
  %2322 = vmatmul.mubr.bf16.gmra.mrb[0].mxu0 %v2180
  %v2323 = vpop.f32.mrb[0].mxu0
  %v2324 = vadd.f32 0.0, %v2323
  %v2325 = vpop.f32.mrb[0].mxu0
  %v2326 = vpop.f32.mrb[0].mxu0
  %v2327 = vadd.f32 0.0, %v2326
  %v2328 = vpop.f32.mrb[0].mxu0
  %2329 = vmatprep.mubr.bf16.mxu0 0
  %2330 = vmatmul.mubr.bf16.gmra.mrb[0].mxu0 %v2183
  %v2331 = vpop.f32.mrb[0].mxu0
  %v2332 = vadd.f32 0.0, %v2331
  %v2333 = vpop.f32.mrb[0].mxu0
  %v2334 = vpop.f32.mrb[0].mxu0
  %v2335 = vadd.f32 0.0, %v2334
  %v2336 = vpop.f32.mrb[0].mxu0
  %2337 = vmatprep.mubr.bf16.mxu0 0
  %2338 = vmatmul.mubr.bf16.gmra.mrb[0].mxu0 %v2186
  %v2339 = vpop.f32.mrb[0].mxu0
  %v2340 = vadd.f32 0.0, %v2339
  %v2341 = vpop.f32.mrb[0].mxu0
  %v2342 = vpop.f32.mrb[0].mxu0
  %v2343 = vadd.f32 0.0, %v2342
  %v2344 = vpop.f32.mrb[0].mxu0
  %2345 = vmatprep.mubr.bf16.mxu0 0
  %2346 = vmatmul.mubr.bf16.gmra.mrb[0].mxu0 %v2189
  %v2347 = vpop.f32.mrb[0].mxu0
  %v2348 = vadd.f32 0.0, %v2347
  %v2349 = vpop.f32.mrb[0].mxu0
  %v2350 = vpop.f32.mrb[0].mxu0
  %v2351 = vadd.f32 0.0, %v2350
  %v2352 = vpop.f32.mrb[0].mxu0
  %2353 = vmatprep.mubr.bf16.mxu0 0
  %2354 = vmatmul.mubr.bf16.gmra.mrb[0].mxu0 %v2192
  %v2355 = vpop.f32.mrb[0].mxu0
  %v2356 = vadd.f32 0.0, %v2355
  %v2357 = vpop.f32.mrb[0].mxu0
  %v2358 = vpop.f32.mrb[0].mxu0
  %v2359 = vadd.f32 0.0, %v2358
  %v2360 = vpop.f32.mrb[0].mxu0
  %2361 = vmatprep.mubr.bf16.mxu0 0
  %2362 = vmatmul.mubr.bf16.gmra.mrb[0].mxu0 %v2195
  %v2363 = vpop.f32.mrb[0].mxu0
  %v2364 = vadd.f32 0.0, %v2363
  %v2365 = vpop.f32.mrb[0].mxu0
  %v2366 = vpop.f32.mrb[0].mxu0
  %v2367 = vadd.f32 0.0, %v2366
  %v2368 = vpop.f32.mrb[0].mxu0
  %2369 = vmatprep.mubr.bf16.mxu0 0
  %2370 = vmatmul.mubr.bf16.gmra.mrb[0].mxu0 %v2198
  %v2371 = vpop.f32.mrb[0].mxu0
  %v2372 = vadd.f32 0.0, %v2371
  %v2373 = vpop.f32.mrb[0].mxu0
  %v2374 = vpop.f32.mrb[0].mxu0
  %v2375 = vadd.f32 0.0, %v2374
  %v2376 = vpop.f32.mrb[0].mxu0
  %2377 = vmatprep.mubr.bf16.mxu0 0
  %2378 = vmatmul.mubr.bf16.gmra.mrb[0].mxu0 %v2201
  %v2379 = vpop.f32.mrb[0].mxu0
  %v2380 = vadd.f32 0.0, %v2379
  %v2381 = vpop.f32.mrb[0].mxu0
  %v2382 = vpop.f32.mrb[0].mxu0
  %v2383 = vadd.f32 0.0, %v2382
  %v2384 = vpop.f32.mrb[0].mxu0
  %2385 = vmatprep.mubr.bf16.mxu0 0
  %2386 = vmatmul.mubr.bf16.gmra.mrb[0].mxu0 %v2204
  %v2387 = vpop.f32.mrb[0].mxu0
  %v2388 = vadd.f32 0.0, %v2387
  %v2389 = vpop.f32.mrb[0].mxu0
  %v2390 = vpop.f32.mrb[0].mxu0
  %v2391 = vadd.f32 0.0, %v2390
  %v2392 = vpop.f32.mrb[0].mxu0
  %2393 = vmatprep.mubr.bf16.mxu0 0
  %2394 = vmatmul.mubr.bf16.gmra.mrb[0].mxu0 %v2207
  %v2395 = vpop.f32.mrb[0].mxu0
  %v2396 = vadd.f32 0.0, %v2395
  %v2397 = vpop.f32.mrb[0].mxu0
  %v2398 = vpop.f32.mrb[0].mxu0
  %v2399 = vadd.f32 0.0, %v2398
  %v2400 = vpop.f32.mrb[0].mxu0
  %2401 = vdwg.mxu0
  %v2402 = vadd.f32 %v1953, %v2244
  %v2403 = vadd.f32 %v1954, %v2247
  %v2404 = vadd.f32 %v1955, %v2252
  %v2405 = vadd.f32 %v1956, %v2255
  %v2406 = vadd.f32 %v1957, %v2260
  %v2407 = vadd.f32 %v1958, %v2263
  %v2408 = vadd.f32 %v1959, %v2268
  %v2409 = vadd.f32 %v1960, %v2271
  %v2410 = vadd.f32 %v1961, %v2276
  %v2411 = vadd.f32 %v1962, %v2279
  %v2412 = vadd.f32 %v1963, %v2284
  %v2413 = vadd.f32 %v1964, %v2287
  %v2414 = vadd.f32 %v1965, %v2292
  %v2415 = vadd.f32 %v1966, %v2295
  %v2416 = vadd.f32 %v1967, %v2300
  %v2417 = vadd.f32 %v1968, %v2303
  %v2418 = vadd.f32 %v1969, %v2308
  %v2419 = vadd.f32 %v1970, %v2311
  %v2420 = vadd.f32 %v1971, %v2316
  %v2421 = vadd.f32 %v1972, %v2319
  %v2422 = vadd.f32 %v1973, %v2324
  %v2423 = vadd.f32 %v1974, %v2327
  %v2424 = vadd.f32 %v1975, %v2332
  %v2425 = vadd.f32 %v1976, %v2335
  %v2426 = vadd.f32 %v1977, %v2340
  %v2427 = vadd.f32 %v1978, %v2343
  %v2428 = vadd.f32 %v1979, %v2348
  %v2429 = vadd.f32 %v1980, %v2351
  %v2430 = vadd.f32 %v1981, %v2356
  %v2431 = vadd.f32 %v1982, %v2359
  %v2432 = vadd.f32 %v1983, %v2364
  %v2433 = vadd.f32 %v1984, %v2367
  %v2434 = vadd.f32 %v1985, %v2372
  %v2435 = vadd.f32 %v1986, %v2375
  %v2436 = vadd.f32 %v1987, %v2380
  %v2437 = vadd.f32 %v1988, %v2383
  %v2438 = vadd.f32 %v1989, %v2388
  %v2439 = vadd.f32 %v1990, %v2391
  %v2440 = vadd.f32 %v1991, %v2396
  %v2441 = vadd.f32 %v1992, %v2399
  %v2442 = vld [vmem:[#allocation2 + $0x8] sm:$0xf]
  %v2443 = vld [vmem:[#allocation2 + $0xc] sm:$0xf]
  %v2444 = vld [vmem:[#allocation2 + $0x10] sm:$0xf]
  %v2445 = vld [vmem:[#allocation2 + $0x14] sm:$0xf]
  %v2446 = vld [vmem:[#allocation2 + $0x18] sm:$0xf]
  %v2447 = vld [vmem:[#allocation2 + $0x1c] sm:$0xf]
  %v2448 = vld [vmem:[#allocation2 + $0x20] sm:$0xf]
  %v2449 = vld [vmem:[#allocation2 + $0x24] sm:$0xf]
  %v2450 = vld [vmem:[#allocation2 + $0x28] sm:$0xf]
  %v2451 = vld [vmem:[#allocation2 + $0x2c] sm:$0xf]
  %v2452 = vld [vmem:[#allocation2 + $0x30] sm:$0xf]
  %v2453 = vld [vmem:[#allocation2 + $0x34] sm:$0xf]
  %v2454 = vld [vmem:[#allocation2 + $0x38] sm:$0xf]
  %v2455 = vld [vmem:[#allocation2 + $0x3c] sm:$0xf]
  %v2456 = vld [vmem:[#allocation2 + $0x40] sm:$0xf]
  %v2457 = vld [vmem:[#allocation2 + $0x44] sm:$0xf]
  %v2458 = vld [vmem:[#allocation2 + $0x48] sm:$0xf]
  %v2459 = vld [vmem:[#allocation2 + $0x4c] sm:$0xf]
  %v2460 = vld [vmem:[#allocation2 + $0x50] sm:$0xf]
  %v2461 = vld [vmem:[#allocation2 + $0x54] sm:$0xf]
  %v2462 = vld [vmem:[#allocation2 + $0x58] sm:$0xf]
  %v2463 = vld [vmem:[#allocation2 + $0x5c] sm:$0xf]
  %v2464 = vld [vmem:[#allocation2 + $0x60] sm:$0xf]
  %v2465 = vld [vmem:[#allocation2 + $0x64] sm:$0xf]
  %v2466 = vld [vmem:[#allocation2 + $0x68] sm:$0xf]
  %v2467 = vld [vmem:[#allocation2 + $0x6c] sm:$0xf]
  %v2468 = vld [vmem:[#allocation2 + $0x70] sm:$0xf]
  %v2469 = vld [vmem:[#allocation2 + $0x74] sm:$0xf]
  %v2470 = vld [vmem:[#allocation2 + $0x78] sm:$0xf]
  %v2471 = vld [vmem:[#allocation2 + $0x7c] sm:$0xf]
  %v2472 = vld [vmem:[#allocation2 + $0x80] sm:$0xf]
  %v2473 = vld [vmem:[#allocation2 + $0x84] sm:$0xf]
  %v2474 = vld [vmem:[#allocation2 + $0x88] sm:$0xf]
  %v2475 = vld [vmem:[#allocation2 + $0x8c] sm:$0xf]
  %v2476 = vld [vmem:[#allocation2 + $0x90] sm:$0xf]
  %v2477 = vld [vmem:[#allocation2 + $0x94] sm:$0xf]
  %v2478 = vld [vmem:[#allocation2 + $0x98] sm:$0xf]
  %v2479 = vld [vmem:[#allocation2 + $0x9c] sm:$0xf]
  %v2480 = vld [vmem:[#allocation2 + $0xa0] sm:$0xf]
  %v2481 = vld [vmem:[#allocation2 + $0xa4] sm:$0xf]
  %v2482 = vld [vmem:[#allocation2 + $0xa8] sm:$0x1]
  %v2483 = vld [vmem:[%s1 + $0x40] sm:$0xf]
  %v2484 = vld [vmem:[%s1 + $0x44] sm:$0xf]
  %v2485 = vld [vmem:[%s1 + $0x48] sm:$0xf]
  %v2486 = vld [vmem:[%s1 + $0x4c] sm:$0xf]
  %v2528 = vunpack.c.l.b16 %v2442
  %v2529 = vunpack.c.l.b16 %v2443
  %v2530 = vunpack.c.l.b16 %v2444
  %v2531 = vunpack.c.l.b16 %v2445
  %v2532 = vunpack.c.l.b16 %v2446
  %v2533 = vunpack.c.l.b16 %v2447
  %v2534 = vunpack.c.l.b16 %v2448
  %v2535 = vunpack.c.l.b16 %v2449
  %v2536 = vunpack.c.l.b16 %v2450
  %v2537 = vunpack.c.l.b16 %v2451
  %v2538 = vunpack.c.l.b16 %v2452
  %v2539 = vunpack.c.l.b16 %v2453
  %v2540 = vunpack.c.l.b16 %v2454
  %v2541 = vunpack.c.l.b16 %v2455
  %v2542 = vunpack.c.l.b16 %v2456
  %v2543 = vunpack.c.l.b16 %v2457
  %v2544 = vunpack.c.l.b16 %v2458
  %v2545 = vunpack.c.l.b16 %v2459
  %v2546 = vunpack.c.l.b16 %v2460
  %v2547 = vunpack.c.l.b16 %v2461
  %v2548 = vunpack.c.l.b16 %v2462
  %v2549 = vunpack.c.l.b16 %v2463
  %v2550 = vunpack.c.l.b16 %v2464
  %v2551 = vunpack.c.l.b16 %v2465
  %v2552 = vunpack.c.l.b16 %v2466
  %v2553 = vunpack.c.l.b16 %v2467
  %v2554 = vunpack.c.l.b16 %v2468
  %v2555 = vunpack.c.l.b16 %v2469
  %v2556 = vunpack.c.l.b16 %v2470
  %v2557 = vunpack.c.l.b16 %v2471
  %v2558 = vunpack.c.l.b16 %v2472
  %v2559 = vunpack.c.l.b16 %v2473
  %v2560 = vunpack.c.l.b16 %v2474
  %v2561 = vunpack.c.l.b16 %v2475
  %v2562 = vunpack.c.l.b16 %v2476
  %v2563 = vunpack.c.l.b16 %v2477
  %v2564 = vunpack.c.l.b16 %v2478
  %v2565 = vunpack.c.l.b16 %v2479
  %v2566 = vunpack.c.l.b16 %v2480
  %v2567 = vunpack.c.l.b16 %v2481
  %v2568 = vunpack.c.l.b16 %v2482
  %v2569 = vpack.c.b16 %v2529, %v2528
  %v2570 = vpack.c.b16 %v2531, %v2530
  %v2571 = vpack.c.b16 %v2533, %v2532
  %v2572 = vpack.c.b16 %v2535, %v2534
  %v2573 = vpack.c.b16 %v2537, %v2536
  %v2574 = vpack.c.b16 %v2539, %v2538
  %v2575 = vpack.c.b16 %v2541, %v2540
  %v2576 = vpack.c.b16 %v2543, %v2542
  %v2577 = vpack.c.b16 %v2545, %v2544
  %v2578 = vpack.c.b16 %v2547, %v2546
  %v2579 = vpack.c.b16 %v2549, %v2548
  %v2580 = vpack.c.b16 %v2551, %v2550
  %v2581 = vpack.c.b16 %v2553, %v2552
  %v2582 = vpack.c.b16 %v2555, %v2554
  %v2583 = vpack.c.b16 %v2557, %v2556
  %v2584 = vpack.c.b16 %v2559, %v2558
  %v2585 = vpack.c.b16 %v2561, %v2560
  %v2586 = vpack.c.b16 %v2563, %v2562
  %v2587 = vpack.c.b16 %v2565, %v2564
  %v2588 = vpack.c.b16 %v2567, %v2566
  %v2589 = vpack.c.b16 %v2568, %v2568
  %v2591 = vshrl.u32 %v2569, 16
  %v2593 = vshll.u32 %v2569, 16
  %v2595 = vrot.slane %v2593, 1
  %v2596 = vor.u32 %v2591, %v2595
  %v2598 = vshll.u32 %v2570, 16
  %v2600 = vrot.slane %v2598, 1
  %v2601 = vsel %vm962, %v2596, %v2600
  %v2602 = vshrl.u32 %v2570, 16
  %v2604 = vor.u32 %v2602, %v2600
  %v2606 = vshll.u32 %v2571, 16
  %v2608 = vrot.slane %v2606, 1
  %v2609 = vsel %vm962, %v2604, %v2608
  %v2610 = vshrl.u32 %v2571, 16
  %v2612 = vor.u32 %v2610, %v2608
  %v2614 = vshll.u32 %v2572, 16
  %v2616 = vrot.slane %v2614, 1
  %v2617 = vsel %vm962, %v2612, %v2616
  %v2618 = vshrl.u32 %v2572, 16
  %v2620 = vor.u32 %v2618, %v2616
  %v2622 = vshll.u32 %v2573, 16
  %v2624 = vrot.slane %v2622, 1
  %v2625 = vsel %vm962, %v2620, %v2624
  %v2626 = vshrl.u32 %v2573, 16
  %v2628 = vor.u32 %v2626, %v2624
  %v2630 = vshll.u32 %v2574, 16
  %v2632 = vrot.slane %v2630, 1
  %v2633 = vsel %vm962, %v2628, %v2632
  %v2634 = vshrl.u32 %v2574, 16
  %v2636 = vor.u32 %v2634, %v2632
  %v2638 = vshll.u32 %v2575, 16
  %v2640 = vrot.slane %v2638, 1
  %v2641 = vsel %vm962, %v2636, %v2640
  %v2642 = vshrl.u32 %v2575, 16
  %v2644 = vor.u32 %v2642, %v2640
  %v2646 = vshll.u32 %v2576, 16
  %v2648 = vrot.slane %v2646, 1
  %v2649 = vsel %vm962, %v2644, %v2648
  %v2650 = vshrl.u32 %v2576, 16
  %v2652 = vor.u32 %v2650, %v2648
  %v2654 = vshll.u32 %v2577, 16
  %v2656 = vrot.slane %v2654, 1
  %v2657 = vsel %vm962, %v2652, %v2656
  %v2658 = vshrl.u32 %v2577, 16
  %v2660 = vor.u32 %v2658, %v2656
  %v2662 = vshll.u32 %v2578, 16
  %v2664 = vrot.slane %v2662, 1
  %v2665 = vsel %vm962, %v2660, %v2664
  %v2666 = vshrl.u32 %v2578, 16
  %v2668 = vor.u32 %v2666, %v2664
  %v2670 = vshll.u32 %v2579, 16
  %v2672 = vrot.slane %v2670, 1
  %v2673 = vsel %vm962, %v2668, %v2672
  %v2674 = vshrl.u32 %v2579, 16
  %v2676 = vor.u32 %v2674, %v2672
  %v2678 = vshll.u32 %v2580, 16
  %v2680 = vrot.slane %v2678, 1
  %v2681 = vsel %vm962, %v2676, %v2680
  %v2682 = vshrl.u32 %v2580, 16
  %v2684 = vor.u32 %v2682, %v2680
  %v2686 = vshll.u32 %v2581, 16
  %v2688 = vrot.slane %v2686, 1
  %v2689 = vsel %vm962, %v2684, %v2688
  %v2690 = vshrl.u32 %v2581, 16
  %v2692 = vor.u32 %v2690, %v2688
  %v2694 = vshll.u32 %v2582, 16
  %v2696 = vrot.slane %v2694, 1
  %v2697 = vsel %vm962, %v2692, %v2696
  %v2698 = vshrl.u32 %v2582, 16
  %v2700 = vor.u32 %v2698, %v2696
  %v2702 = vshll.u32 %v2583, 16
  %v2704 = vrot.slane %v2702, 1
  %v2705 = vsel %vm962, %v2700, %v2704
  %v2706 = vshrl.u32 %v2583, 16
  %v2708 = vor.u32 %v2706, %v2704
  %v2710 = vshll.u32 %v2584, 16
  %v2712 = vrot.slane %v2710, 1
  %v2713 = vsel %vm962, %v2708, %v2712
  %v2714 = vshrl.u32 %v2584, 16
  %v2716 = vor.u32 %v2714, %v2712
  %v2718 = vshll.u32 %v2585, 16
  %v2720 = vrot.slane %v2718, 1
  %v2721 = vsel %vm962, %v2716, %v2720
  %v2722 = vshrl.u32 %v2585, 16
  %v2724 = vor.u32 %v2722, %v2720
  %v2726 = vshll.u32 %v2586, 16
  %v2728 = vrot.slane %v2726, 1
  %v2729 = vsel %vm962, %v2724, %v2728
  %v2730 = vshrl.u32 %v2586, 16
  %v2732 = vor.u32 %v2730, %v2728
  %v2734 = vshll.u32 %v2587, 16
  %v2736 = vrot.slane %v2734, 1
  %v2737 = vsel %vm962, %v2732, %v2736
  %v2738 = vshrl.u32 %v2587, 16
  %v2740 = vor.u32 %v2738, %v2736
  %v2742 = vshll.u32 %v2588, 16
  %v2744 = vrot.slane %v2742, 1
  %v2745 = vsel %vm962, %v2740, %v2744
  %v2746 = vshrl.u32 %v2588, 16
  %v2748 = vor.u32 %v2746, %v2744
  %v2750 = vshll.u32 %v2589, 16
  %v2752 = vrot.slane %v2750, 1
  %v2753 = vsel %vm962, %v2748, %v2752
  %v2758 = vunpack.c.l.b16 %v2483
  %v2759 = vunpack.c.l.b16 %v2484
  %v2760 = vunpack.c.l.b16 %v2485
  %v2761 = vunpack.c.l.b16 %v2486
  %v2762 = vpack.c.b16 %v2759, %v2758
  %v2763 = vpack.c.b16 %v2761, %v2760
  %v2767 = vsel %vm1139, %v2601, 0
  %v2770 = vsel %vm1139, %v2609, 0
  %v2773 = vsel %vm1139, %v2617, 0
  %v2776 = vsel %vm1139, %v2625, 0
  %v2779 = vsel %vm1139, %v2633, 0
  %v2782 = vsel %vm1139, %v2641, 0
  %v2785 = vsel %vm1139, %v2649, 0
  %v2788 = vsel %vm1139, %v2657, 0
  %v2791 = vsel %vm1139, %v2665, 0
  %v2794 = vsel %vm1139, %v2673, 0
  %v2797 = vsel %vm1139, %v2681, 0
  %v2800 = vsel %vm1139, %v2689, 0
  %v2803 = vsel %vm1139, %v2697, 0
  %v2806 = vsel %vm1139, %v2705, 0
  %v2809 = vsel %vm1139, %v2713, 0
  %v2812 = vsel %vm1139, %v2721, 0
  %v2815 = vsel %vm1139, %v2729, 0
  %v2818 = vsel %vm1139, %v2737, 0
  %v2821 = vsel %vm1139, %v2745, 0
  %v2824 = vsel %vm1139, %v2753, 0
  %2826 = vmatprep.subr.bf16.mxu0 0
  %2827 = vmatpush1.bf16.msra.mxu0 %v2762
  %2828 = vmatprep.subr.bf16.mxu0 0
  %2829 = vmatpush1.bf16.msra.mxu0 %v2763
  %2830 = vmatprep.subr.bf16.mxu0 0
  %2831 = vmatpush1.bf16.msra.mxu0 0
  %2832 = vmatprep.subr.bf16.mxu0 0
  %2833 = vmatpush1.bf16.msra.mxu0 0
  %2834 = vmatprep.subr.bf16.mxu0 0
  %2835 = vmatpush1.bf16.msra.mxu0 0
  %2836 = vmatprep.subr.bf16.mxu0 0
  %2837 = vmatpush1.bf16.msra.mxu0 0
  %2838 = vmatprep.subr.bf16.mxu0 0
  %2839 = vmatpush1.bf16.msra.mxu0 0
  %2840 = vmatprep.subr.bf16.mxu0 0
  %2841 = vmatpush1.bf16.msra.mxu0 0
  %2842 = vmatprep.subr.bf16.mxu0 0
  %2843 = vmatpush1.bf16.msra.mxu0 0
  %2844 = vmatprep.subr.bf16.mxu0 0
  %2845 = vmatpush1.bf16.msra.mxu0 0
  %2846 = vmatprep.subr.bf16.mxu0 0
  %2847 = vmatpush1.bf16.msra.mxu0 0
  %2848 = vmatprep.subr.bf16.mxu0 0
  %2849 = vmatpush1.bf16.msra.mxu0 0
  %2850 = vmatprep.subr.bf16.mxu0 0
  %2851 = vmatpush1.bf16.msra.mxu0 0
  %2852 = vmatprep.subr.bf16.mxu0 0
  %2853 = vmatpush1.bf16.msra.mxu0 0
  %2854 = vmatprep.subr.bf16.mxu0 0
  %2855 = vmatpush1.bf16.msra.mxu0 0
  %2856 = vmatprep.subr.bf16.mxu0 0
  %2857 = vmatpush1.bf16.msra.mxu0 0
  %2858 = vmatprep.mubr.bf16.mxu0 0
  %2859 = vmatmul.mubr.bf16.gmra.mrb[0].mxu0 %v2767
  %v2860 = vpop.f32.mrb[0].mxu0
  %v2861 = vadd.f32 0.0, %v2860
  %v2862 = vpop.f32.mrb[0].mxu0
  %v2863 = vpop.f32.mrb[0].mxu0
  %v2864 = vadd.f32 0.0, %v2863
  %v2865 = vpop.f32.mrb[0].mxu0
  %2866 = vmatprep.mubr.bf16.mxu0 0
  %2867 = vmatmul.mubr.bf16.gmra.mrb[0].mxu0 %v2770
  %v2868 = vpop.f32.mrb[0].mxu0
  %v2869 = vadd.f32 0.0, %v2868
  %v2870 = vpop.f32.mrb[0].mxu0
  %v2871 = vpop.f32.mrb[0].mxu0
  %v2872 = vadd.f32 0.0, %v2871
  %v2873 = vpop.f32.mrb[0].mxu0
  %2874 = vmatprep.mubr.bf16.mxu0 0
  %2875 = vmatmul.mubr.bf16.gmra.mrb[0].mxu0 %v2773
  %v2876 = vpop.f32.mrb[0].mxu0
  %v2877 = vadd.f32 0.0, %v2876
  %v2878 = vpop.f32.mrb[0].mxu0
  %v2879 = vpop.f32.mrb[0].mxu0
  %v2880 = vadd.f32 0.0, %v2879
  %v2881 = vpop.f32.mrb[0].mxu0
  %2882 = vmatprep.mubr.bf16.mxu0 0
  %2883 = vmatmul.mubr.bf16.gmra.mrb[0].mxu0 %v2776
  %v2884 = vpop.f32.mrb[0].mxu0
  %v2885 = vadd.f32 0.0, %v2884
  %v2886 = vpop.f32.mrb[0].mxu0
  %v2887 = vpop.f32.mrb[0].mxu0
  %v2888 = vadd.f32 0.0, %v2887
  %v2889 = vpop.f32.mrb[0].mxu0
  %2890 = vmatprep.mubr.bf16.mxu0 0
  %2891 = vmatmul.mubr.bf16.gmra.mrb[0].mxu0 %v2779
  %v2892 = vpop.f32.mrb[0].mxu0
  %v2893 = vadd.f32 0.0, %v2892
  %v2894 = vpop.f32.mrb[0].mxu0
  %v2895 = vpop.f32.mrb[0].mxu0
  %v2896 = vadd.f32 0.0, %v2895
  %v2897 = vpop.f32.mrb[0].mxu0
  %2898 = vmatprep.mubr.bf16.mxu0 0
  %2899 = vmatmul.mubr.bf16.gmra.mrb[0].mxu0 %v2782
  %v2900 = vpop.f32.mrb[0].mxu0
  %v2901 = vadd.f32 0.0, %v2900
  %v2902 = vpop.f32.mrb[0].mxu0
  %v2903 = vpop.f32.mrb[0].mxu0
  %v2904 = vadd.f32 0.0, %v2903
  %v2905 = vpop.f32.mrb[0].mxu0
  %2906 = vmatprep.mubr.bf16.mxu0 0
  %2907 = vmatmul.mubr.bf16.gmra.mrb[0].mxu0 %v2785
  %v2908 = vpop.f32.mrb[0].mxu0
  %v2909 = vadd.f32 0.0, %v2908
  %v2910 = vpop.f32.mrb[0].mxu0
  %v2911 = vpop.f32.mrb[0].mxu0
  %v2912 = vadd.f32 0.0, %v2911
  %v2913 = vpop.f32.mrb[0].mxu0
  %2914 = vmatprep.mubr.bf16.mxu0 0
  %2915 = vmatmul.mubr.bf16.gmra.mrb[0].mxu0 %v2788
  %v2916 = vpop.f32.mrb[0].mxu0
  %v2917 = vadd.f32 0.0, %v2916
  %v2918 = vpop.f32.mrb[0].mxu0
  %v2919 = vpop.f32.mrb[0].mxu0
  %v2920 = vadd.f32 0.0, %v2919
  %v2921 = vpop.f32.mrb[0].mxu0
  %2922 = vmatprep.mubr.bf16.mxu0 0
  %2923 = vmatmul.mubr.bf16.gmra.mrb[0].mxu0 %v2791
  %v2924 = vpop.f32.mrb[0].mxu0
  %v2925 = vadd.f32 0.0, %v2924
  %v2926 = vpop.f32.mrb[0].mxu0
  %v2927 = vpop.f32.mrb[0].mxu0
  %v2928 = vadd.f32 0.0, %v2927
  %v2929 = vpop.f32.mrb[0].mxu0
  %2930 = vmatprep.mubr.bf16.mxu0 0
  %2931 = vmatmul.mubr.bf16.gmra.mrb[0].mxu0 %v2794
  %v2932 = vpop.f32.mrb[0].mxu0
  %v2933 = vadd.f32 0.0, %v2932
  %v2934 = vpop.f32.mrb[0].mxu0
  %v2935 = vpop.f32.mrb[0].mxu0
  %v2936 = vadd.f32 0.0, %v2935
  %v2937 = vpop.f32.mrb[0].mxu0
  %2938 = vmatprep.mubr.bf16.mxu0 0
  %2939 = vmatmul.mubr.bf16.gmra.mrb[0].mxu0 %v2797
  %v2940 = vpop.f32.mrb[0].mxu0
  %v2941 = vadd.f32 0.0, %v2940
  %v2942 = vpop.f32.mrb[0].mxu0
  %v2943 = vpop.f32.mrb[0].mxu0
  %v2944 = vadd.f32 0.0, %v2943
  %v2945 = vpop.f32.mrb[0].mxu0
  %2946 = vmatprep.mubr.bf16.mxu0 0
  %2947 = vmatmul.mubr.bf16.gmra.mrb[0].mxu0 %v2800
  %v2948 = vpop.f32.mrb[0].mxu0
  %v2949 = vadd.f32 0.0, %v2948
  %v2950 = vpop.f32.mrb[0].mxu0
  %v2951 = vpop.f32.mrb[0].mxu0
  %v2952 = vadd.f32 0.0, %v2951
  %v2953 = vpop.f32.mrb[0].mxu0
  %2954 = vmatprep.mubr.bf16.mxu0 0
  %2955 = vmatmul.mubr.bf16.gmra.mrb[0].mxu0 %v2803
  %v2956 = vpop.f32.mrb[0].mxu0
  %v2957 = vadd.f32 0.0, %v2956
  %v2958 = vpop.f32.mrb[0].mxu0
  %v2959 = vpop.f32.mrb[0].mxu0
  %v2960 = vadd.f32 0.0, %v2959
  %v2961 = vpop.f32.mrb[0].mxu0
  %2962 = vmatprep.mubr.bf16.mxu0 0
  %2963 = vmatmul.mubr.bf16.gmra.mrb[0].mxu0 %v2806
  %v2964 = vpop.f32.mrb[0].mxu0
  %v2965 = vadd.f32 0.0, %v2964
  %v2966 = vpop.f32.mrb[0].mxu0
  %v2967 = vpop.f32.mrb[0].mxu0
  %v2968 = vadd.f32 0.0, %v2967
  %v2969 = vpop.f32.mrb[0].mxu0
  %2970 = vmatprep.mubr.bf16.mxu0 0
  %2971 = vmatmul.mubr.bf16.gmra.mrb[0].mxu0 %v2809
  %v2972 = vpop.f32.mrb[0].mxu0
  %v2973 = vadd.f32 0.0, %v2972
  %v2974 = vpop.f32.mrb[0].mxu0
  %v2975 = vpop.f32.mrb[0].mxu0
  %v2976 = vadd.f32 0.0, %v2975
  %v2977 = vpop.f32.mrb[0].mxu0
  %2978 = vmatprep.mubr.bf16.mxu0 0
  %2979 = vmatmul.mubr.bf16.gmra.mrb[0].mxu0 %v2812
  %v2980 = vpop.f32.mrb[0].mxu0
  %v2981 = vadd.f32 0.0, %v2980
  %v2982 = vpop.f32.mrb[0].mxu0
  %v2983 = vpop.f32.mrb[0].mxu0
  %v2984 = vadd.f32 0.0, %v2983
  %v2985 = vpop.f32.mrb[0].mxu0
  %2986 = vmatprep.mubr.bf16.mxu0 0
  %2987 = vmatmul.mubr.bf16.gmra.mrb[0].mxu0 %v2815
  %v2988 = vpop.f32.mrb[0].mxu0
  %v2989 = vadd.f32 0.0, %v2988
  %v2990 = vpop.f32.mrb[0].mxu0
  %v2991 = vpop.f32.mrb[0].mxu0
  %v2992 = vadd.f32 0.0, %v2991
  %v2993 = vpop.f32.mrb[0].mxu0
  %2994 = vmatprep.mubr.bf16.mxu0 0
  %2995 = vmatmul.mubr.bf16.gmra.mrb[0].mxu0 %v2818
  %v2996 = vpop.f32.mrb[0].mxu0
  %v2997 = vadd.f32 0.0, %v2996
  %v2998 = vpop.f32.mrb[0].mxu0
  %v2999 = vpop.f32.mrb[0].mxu0
  %v3000 = vadd.f32 0.0, %v2999
  %v3001 = vpop.f32.mrb[0].mxu0
  %3002 = vmatprep.mubr.bf16.mxu0 0
  %3003 = vmatmul.mubr.bf16.gmra.mrb[0].mxu0 %v2821
  %v3004 = vpop.f32.mrb[0].mxu0
  %v3005 = vadd.f32 0.0, %v3004
  %v3006 = vpop.f32.mrb[0].mxu0
  %v3007 = vpop.f32.mrb[0].mxu0
  %v3008 = vadd.f32 0.0, %v3007
  %v3009 = vpop.f32.mrb[0].mxu0
  %3010 = vmatprep.mubr.bf16.mxu0 0
  %3011 = vmatmul.mubr.bf16.gmra.mrb[0].mxu0 %v2824
  %v3012 = vpop.f32.mrb[0].mxu0
  %v3013 = vadd.f32 0.0, %v3012
  %v3014 = vpop.f32.mrb[0].mxu0
  %v3015 = vpop.f32.mrb[0].mxu0
  %v3016 = vadd.f32 0.0, %v3015
  %v3017 = vpop.f32.mrb[0].mxu0
  %3018 = vdwg.mxu0
  %v3019 = vadd.f32 %v2402, %v2861
  %v3020 = vadd.f32 %v2403, %v2864
  %v3021 = vadd.f32 %v2404, %v2869
  %v3022 = vadd.f32 %v2405, %v2872
  %v3023 = vadd.f32 %v2406, %v2877
  %v3024 = vadd.f32 %v2407, %v2880
  %v3025 = vadd.f32 %v2408, %v2885
  %v3026 = vadd.f32 %v2409, %v2888
  %v3027 = vadd.f32 %v2410, %v2893
  %v3028 = vadd.f32 %v2411, %v2896
  %v3029 = vadd.f32 %v2412, %v2901
  %v3030 = vadd.f32 %v2413, %v2904
  %v3031 = vadd.f32 %v2414, %v2909
  %v3032 = vadd.f32 %v2415, %v2912
  %v3033 = vadd.f32 %v2416, %v2917
  %v3034 = vadd.f32 %v2417, %v2920
  %v3035 = vadd.f32 %v2418, %v2925
  %v3036 = vadd.f32 %v2419, %v2928
  %v3037 = vadd.f32 %v2420, %v2933
  %v3038 = vadd.f32 %v2421, %v2936
  %v3039 = vadd.f32 %v2422, %v2941
  %v3040 = vadd.f32 %v2423, %v2944
  %v3041 = vadd.f32 %v2424, %v2949
  %v3042 = vadd.f32 %v2425, %v2952
  %v3043 = vadd.f32 %v2426, %v2957
  %v3044 = vadd.f32 %v2427, %v2960
  %v3045 = vadd.f32 %v2428, %v2965
  %v3046 = vadd.f32 %v2429, %v2968
  %v3047 = vadd.f32 %v2430, %v2973
  %v3048 = vadd.f32 %v2431, %v2976
  %v3049 = vadd.f32 %v2432, %v2981
  %v3050 = vadd.f32 %v2433, %v2984
  %v3051 = vadd.f32 %v2434, %v2989
  %v3052 = vadd.f32 %v2435, %v2992
  %v3053 = vadd.f32 %v2436, %v2997
  %v3054 = vadd.f32 %v2437, %v3000
  %v3055 = vadd.f32 %v2438, %v3005
  %v3056 = vadd.f32 %v2439, %v3008
  %v3057 = vadd.f32 %v2440, %v3013
  %v3058 = vadd.f32 %v2441, %v3016
  %v3059 = vld [vmem:[#allocation2 + $0x8] sm:$0xe]
  %v3060 = vld [vmem:[%s1 + $0x50] sm:$0xf]
  %v3061 = vld [vmem:[%s1 + $0x54] sm:$0xf]
  %v3062 = vld [vmem:[%s1 + $0x58] sm:$0xf]
  %v3063 = vld [vmem:[%s1 + $0x5c] sm:$0xf]
  %v3065 = vunpack.c.l.b16 %v3059
  %v3066 = vpack.c.b16 %v2529, %v3065
  %v3067 = vrot.slane %v3066, 1
  %v3068 = vrot.slane %v2570, 1
  %v3069 = vsel %vm1646, %v3067, %v3068
  %v3070 = vrot.slane %v2571, 1
  %v3071 = vsel %vm1646, %v3068, %v3070
  %v3072 = vrot.slane %v2572, 1
  %v3073 = vsel %vm1646, %v3070, %v3072
  %v3074 = vrot.slane %v2573, 1
  %v3075 = vsel %vm1646, %v3072, %v3074
  %v3076 = vrot.slane %v2574, 1
  %v3077 = vsel %vm1646, %v3074, %v3076
  %v3078 = vrot.slane %v2575, 1
  %v3079 = vsel %vm1646, %v3076, %v3078
  %v3080 = vrot.slane %v2576, 1
  %v3081 = vsel %vm1646, %v3078, %v3080
  %v3082 = vrot.slane %v2577, 1
  %v3083 = vsel %vm1646, %v3080, %v3082
  %v3084 = vrot.slane %v2578, 1
  %v3085 = vsel %vm1646, %v3082, %v3084
  %v3086 = vrot.slane %v2579, 1
  %v3087 = vsel %vm1646, %v3084, %v3086
  %v3088 = vrot.slane %v2580, 1
  %v3089 = vsel %vm1646, %v3086, %v3088
  %v3090 = vrot.slane %v2581, 1
  %v3091 = vsel %vm1646, %v3088, %v3090
  %v3092 = vrot.slane %v2582, 1
  %v3093 = vsel %vm1646, %v3090, %v3092
  %v3094 = vrot.slane %v2583, 1
  %v3095 = vsel %vm1646, %v3092, %v3094
  %v3096 = vrot.slane %v2584, 1
  %v3097 = vsel %vm1646, %v3094, %v3096
  %v3098 = vrot.slane %v2585, 1
  %v3099 = vsel %vm1646, %v3096, %v3098
  %v3100 = vrot.slane %v2586, 1
  %v3101 = vsel %vm1646, %v3098, %v3100
  %v3102 = vrot.slane %v2587, 1
  %v3103 = vsel %vm1646, %v3100, %v3102
  %v3104 = vrot.slane %v2588, 1
  %v3105 = vsel %vm1646, %v3102, %v3104
  %v3106 = vrot.slane %v2589, 1
  %v3107 = vsel %vm1646, %v3104, %v3106
  %v3112 = vunpack.c.l.b16 %v3060
  %v3113 = vunpack.c.l.b16 %v3061
  %v3114 = vunpack.c.l.b16 %v3062
  %v3115 = vunpack.c.l.b16 %v3063
  %v3116 = vpack.c.b16 %v3113, %v3112
  %v3117 = vpack.c.b16 %v3115, %v3114
  %v3121 = vsel %vm1139, %v3069, 0
  %v3124 = vsel %vm1139, %v3071, 0
  %v3127 = vsel %vm1139, %v3073, 0
  %v3130 = vsel %vm1139, %v3075, 0
  %v3133 = vsel %vm1139, %v3077, 0
  %v3136 = vsel %vm1139, %v3079, 0
  %v3139 = vsel %vm1139, %v3081, 0
  %v3142 = vsel %vm1139, %v3083, 0
  %v3145 = vsel %vm1139, %v3085, 0
  %v3148 = vsel %vm1139, %v3087, 0
  %v3151 = vsel %vm1139, %v3089, 0
  %v3154 = vsel %vm1139, %v3091, 0
  %v3157 = vsel %vm1139, %v3093, 0
  %v3160 = vsel %vm1139, %v3095, 0
  %v3163 = vsel %vm1139, %v3097, 0
  %v3166 = vsel %vm1139, %v3099, 0
  %v3169 = vsel %vm1139, %v3101, 0
  %v3172 = vsel %vm1139, %v3103, 0
  %v3175 = vsel %vm1139, %v3105, 0
  %v3178 = vsel %vm1139, %v3107, 0
  %3180 = vmatprep.subr.bf16.mxu0 0
  %3181 = vmatpush1.bf16.msra.mxu0 %v3116
  %3182 = vmatprep.subr.bf16.mxu0 0
  %3183 = vmatpush1.bf16.msra.mxu0 %v3117
  %3184 = vmatprep.subr.bf16.mxu0 0
  %3185 = vmatpush1.bf16.msra.mxu0 0
  %3186 = vmatprep.subr.bf16.mxu0 0
  %3187 = vmatpush1.bf16.msra.mxu0 0
  %3188 = vmatprep.subr.bf16.mxu0 0
  %3189 = vmatpush1.bf16.msra.mxu0 0
  %3190 = vmatprep.subr.bf16.mxu0 0
  %3191 = vmatpush1.bf16.msra.mxu0 0
  %3192 = vmatprep.subr.bf16.mxu0 0
  %3193 = vmatpush1.bf16.msra.mxu0 0
  %3194 = vmatprep.subr.bf16.mxu0 0
  %3195 = vmatpush1.bf16.msra.mxu0 0
  %3196 = vmatprep.subr.bf16.mxu0 0
  %3197 = vmatpush1.bf16.msra.mxu0 0
  %3198 = vmatprep.subr.bf16.mxu0 0
  %3199 = vmatpush1.bf16.msra.mxu0 0
  %3200 = vmatprep.subr.bf16.mxu0 0
  %3201 = vmatpush1.bf16.msra.mxu0 0
  %3202 = vmatprep.subr.bf16.mxu0 0
  %3203 = vmatpush1.bf16.msra.mxu0 0
  %3204 = vmatprep.subr.bf16.mxu0 0
  %3205 = vmatpush1.bf16.msra.mxu0 0
  %3206 = vmatprep.subr.bf16.mxu0 0
  %3207 = vmatpush1.bf16.msra.mxu0 0
  %3208 = vmatprep.subr.bf16.mxu0 0
  %3209 = vmatpush1.bf16.msra.mxu0 0
  %3210 = vmatprep.subr.bf16.mxu0 0
  %3211 = vmatpush1.bf16.msra.mxu0 0
  %3212 = vmatprep.mubr.bf16.mxu0 0
  %3213 = vmatmul.mubr.bf16.gmra.mrb[0].mxu0 %v3121
  %v3214 = vpop.f32.mrb[0].mxu0
  %v3215 = vadd.f32 0.0, %v3214
  %v3216 = vpop.f32.mrb[0].mxu0
  %v3217 = vpop.f32.mrb[0].mxu0
  %v3218 = vadd.f32 0.0, %v3217
  %v3219 = vpop.f32.mrb[0].mxu0
  %3220 = vmatprep.mubr.bf16.mxu0 0
  %3221 = vmatmul.mubr.bf16.gmra.mrb[0].mxu0 %v3124
  %v3222 = vpop.f32.mrb[0].mxu0
  %v3223 = vadd.f32 0.0, %v3222
  %v3224 = vpop.f32.mrb[0].mxu0
  %v3225 = vpop.f32.mrb[0].mxu0
  %v3226 = vadd.f32 0.0, %v3225
  %v3227 = vpop.f32.mrb[0].mxu0
  %3228 = vmatprep.mubr.bf16.mxu0 0
  %3229 = vmatmul.mubr.bf16.gmra.mrb[0].mxu0 %v3127
  %v3230 = vpop.f32.mrb[0].mxu0
  %v3231 = vadd.f32 0.0, %v3230
  %v3232 = vpop.f32.mrb[0].mxu0
  %v3233 = vpop.f32.mrb[0].mxu0
  %v3234 = vadd.f32 0.0, %v3233
  %v3235 = vpop.f32.mrb[0].mxu0
  %3236 = vmatprep.mubr.bf16.mxu0 0
  %3237 = vmatmul.mubr.bf16.gmra.mrb[0].mxu0 %v3130
  %v3238 = vpop.f32.mrb[0].mxu0
  %v3239 = vadd.f32 0.0, %v3238
  %v3240 = vpop.f32.mrb[0].mxu0
  %v3241 = vpop.f32.mrb[0].mxu0
  %v3242 = vadd.f32 0.0, %v3241
  %v3243 = vpop.f32.mrb[0].mxu0
  %3244 = vmatprep.mubr.bf16.mxu0 0
  %3245 = vmatmul.mubr.bf16.gmra.mrb[0].mxu0 %v3133
  %v3246 = vpop.f32.mrb[0].mxu0
  %v3247 = vadd.f32 0.0, %v3246
  %v3248 = vpop.f32.mrb[0].mxu0
  %v3249 = vpop.f32.mrb[0].mxu0
  %v3250 = vadd.f32 0.0, %v3249
  %v3251 = vpop.f32.mrb[0].mxu0
  %3252 = vmatprep.mubr.bf16.mxu0 0
  %3253 = vmatmul.mubr.bf16.gmra.mrb[0].mxu0 %v3136
  %v3254 = vpop.f32.mrb[0].mxu0
  %v3255 = vadd.f32 0.0, %v3254
  %v3256 = vpop.f32.mrb[0].mxu0
  %v3257 = vpop.f32.mrb[0].mxu0
  %v3258 = vadd.f32 0.0, %v3257
  %v3259 = vpop.f32.mrb[0].mxu0
  %3260 = vmatprep.mubr.bf16.mxu0 0
  %3261 = vmatmul.mubr.bf16.gmra.mrb[0].mxu0 %v3139
  %v3262 = vpop.f32.mrb[0].mxu0
  %v3263 = vadd.f32 0.0, %v3262
  %v3264 = vpop.f32.mrb[0].mxu0
  %v3265 = vpop.f32.mrb[0].mxu0
  %v3266 = vadd.f32 0.0, %v3265
  %v3267 = vpop.f32.mrb[0].mxu0
  %3268 = vmatprep.mubr.bf16.mxu0 0
  %3269 = vmatmul.mubr.bf16.gmra.mrb[0].mxu0 %v3142
  %v3270 = vpop.f32.mrb[0].mxu0
  %v3271 = vadd.f32 0.0, %v3270
  %v3272 = vpop.f32.mrb[0].mxu0
  %v3273 = vpop.f32.mrb[0].mxu0
  %v3274 = vadd.f32 0.0, %v3273
  %v3275 = vpop.f32.mrb[0].mxu0
  %3276 = vmatprep.mubr.bf16.mxu0 0
  %3277 = vmatmul.mubr.bf16.gmra.mrb[0].mxu0 %v3145
  %v3278 = vpop.f32.mrb[0].mxu0
  %v3279 = vadd.f32 0.0, %v3278
  %v3280 = vpop.f32.mrb[0].mxu0
  %v3281 = vpop.f32.mrb[0].mxu0
  %v3282 = vadd.f32 0.0, %v3281
  %v3283 = vpop.f32.mrb[0].mxu0
  %3284 = vmatprep.mubr.bf16.mxu0 0
  %3285 = vmatmul.mubr.bf16.gmra.mrb[0].mxu0 %v3148
  %v3286 = vpop.f32.mrb[0].mxu0
  %v3287 = vadd.f32 0.0, %v3286
  %v3288 = vpop.f32.mrb[0].mxu0
  %v3289 = vpop.f32.mrb[0].mxu0
  %v3290 = vadd.f32 0.0, %v3289
  %v3291 = vpop.f32.mrb[0].mxu0
  %3292 = vmatprep.mubr.bf16.mxu0 0
  %3293 = vmatmul.mubr.bf16.gmra.mrb[0].mxu0 %v3151
  %v3294 = vpop.f32.mrb[0].mxu0
  %v3295 = vadd.f32 0.0, %v3294
  %v3296 = vpop.f32.mrb[0].mxu0
  %v3297 = vpop.f32.mrb[0].mxu0
  %v3298 = vadd.f32 0.0, %v3297
  %v3299 = vpop.f32.mrb[0].mxu0
  %3300 = vmatprep.mubr.bf16.mxu0 0
  %3301 = vmatmul.mubr.bf16.gmra.mrb[0].mxu0 %v3154
  %v3302 = vpop.f32.mrb[0].mxu0
  %v3303 = vadd.f32 0.0, %v3302
  %v3304 = vpop.f32.mrb[0].mxu0
  %v3305 = vpop.f32.mrb[0].mxu0
  %v3306 = vadd.f32 0.0, %v3305
  %v3307 = vpop.f32.mrb[0].mxu0
  %3308 = vmatprep.mubr.bf16.mxu0 0
  %3309 = vmatmul.mubr.bf16.gmra.mrb[0].mxu0 %v3157
  %v3310 = vpop.f32.mrb[0].mxu0
  %v3311 = vadd.f32 0.0, %v3310
  %v3312 = vpop.f32.mrb[0].mxu0
  %v3313 = vpop.f32.mrb[0].mxu0
  %v3314 = vadd.f32 0.0, %v3313
  %v3315 = vpop.f32.mrb[0].mxu0
  %3316 = vmatprep.mubr.bf16.mxu0 0
  %3317 = vmatmul.mubr.bf16.gmra.mrb[0].mxu0 %v3160
  %v3318 = vpop.f32.mrb[0].mxu0
  %v3319 = vadd.f32 0.0, %v3318
  %v3320 = vpop.f32.mrb[0].mxu0
  %v3321 = vpop.f32.mrb[0].mxu0
  %v3322 = vadd.f32 0.0, %v3321
  %v3323 = vpop.f32.mrb[0].mxu0
  %3324 = vmatprep.mubr.bf16.mxu0 0
  %3325 = vmatmul.mubr.bf16.gmra.mrb[0].mxu0 %v3163
  %v3326 = vpop.f32.mrb[0].mxu0
  %v3327 = vadd.f32 0.0, %v3326
  %v3328 = vpop.f32.mrb[0].mxu0
  %v3329 = vpop.f32.mrb[0].mxu0
  %v3330 = vadd.f32 0.0, %v3329
  %v3331 = vpop.f32.mrb[0].mxu0
  %3332 = vmatprep.mubr.bf16.mxu0 0
  %3333 = vmatmul.mubr.bf16.gmra.mrb[0].mxu0 %v3166
  %v3334 = vpop.f32.mrb[0].mxu0
  %v3335 = vadd.f32 0.0, %v3334
  %v3336 = vpop.f32.mrb[0].mxu0
  %v3337 = vpop.f32.mrb[0].mxu0
  %v3338 = vadd.f32 0.0, %v3337
  %v3339 = vpop.f32.mrb[0].mxu0
  %3340 = vmatprep.mubr.bf16.mxu0 0
  %3341 = vmatmul.mubr.bf16.gmra.mrb[0].mxu0 %v3169
  %v3342 = vpop.f32.mrb[0].mxu0
  %v3343 = vadd.f32 0.0, %v3342
  %v3344 = vpop.f32.mrb[0].mxu0
  %v3345 = vpop.f32.mrb[0].mxu0
  %v3346 = vadd.f32 0.0, %v3345
  %v3347 = vpop.f32.mrb[0].mxu0
  %3348 = vmatprep.mubr.bf16.mxu0 0
  %3349 = vmatmul.mubr.bf16.gmra.mrb[0].mxu0 %v3172
  %v3350 = vpop.f32.mrb[0].mxu0
  %v3351 = vadd.f32 0.0, %v3350
  %v3352 = vpop.f32.mrb[0].mxu0
  %v3353 = vpop.f32.mrb[0].mxu0
  %v3354 = vadd.f32 0.0, %v3353
  %v3355 = vpop.f32.mrb[0].mxu0
  %3356 = vmatprep.mubr.bf16.mxu0 0
  %3357 = vmatmul.mubr.bf16.gmra.mrb[0].mxu0 %v3175
  %v3358 = vpop.f32.mrb[0].mxu0
  %v3359 = vadd.f32 0.0, %v3358
  %v3360 = vpop.f32.mrb[0].mxu0
  %v3361 = vpop.f32.mrb[0].mxu0
  %v3362 = vadd.f32 0.0, %v3361
  %v3363 = vpop.f32.mrb[0].mxu0
  %3364 = vmatprep.mubr.bf16.mxu0 0
  %3365 = vmatmul.mubr.bf16.gmra.mrb[0].mxu0 %v3178
  %v3366 = vpop.f32.mrb[0].mxu0
  %v3367 = vadd.f32 0.0, %v3366
  %v3368 = vpop.f32.mrb[0].mxu0
  %v3369 = vpop.f32.mrb[0].mxu0
  %v3370 = vadd.f32 0.0, %v3369
  %v3371 = vpop.f32.mrb[0].mxu0
  %3372 = vdwg.mxu0
  %v3373 = vadd.f32 %v3019, %v3215
  %v3374 = vadd.f32 %v3020, %v3218
  %v3375 = vadd.f32 %v3021, %v3223
  %v3376 = vadd.f32 %v3022, %v3226
  %v3377 = vadd.f32 %v3023, %v3231
  %v3378 = vadd.f32 %v3024, %v3234
  %v3379 = vadd.f32 %v3025, %v3239
  %v3380 = vadd.f32 %v3026, %v3242
  %v3381 = vadd.f32 %v3027, %v3247
  %v3382 = vadd.f32 %v3028, %v3250
  %v3383 = vadd.f32 %v3029, %v3255
  %v3384 = vadd.f32 %v3030, %v3258
  %v3385 = vadd.f32 %v3031, %v3263
  %v3386 = vadd.f32 %v3032, %v3266
  %v3387 = vadd.f32 %v3033, %v3271
  %v3388 = vadd.f32 %v3034, %v3274
  %v3389 = vadd.f32 %v3035, %v3279
  %v3390 = vadd.f32 %v3036, %v3282
  %v3391 = vadd.f32 %v3037, %v3287
  %v3392 = vadd.f32 %v3038, %v3290
  %v3393 = vadd.f32 %v3039, %v3295
  %v3394 = vadd.f32 %v3040, %v3298
  %v3395 = vadd.f32 %v3041, %v3303
  %v3396 = vadd.f32 %v3042, %v3306
  %v3397 = vadd.f32 %v3043, %v3311
  %v3398 = vadd.f32 %v3044, %v3314
  %v3399 = vadd.f32 %v3045, %v3319
  %v3400 = vadd.f32 %v3046, %v3322
  %v3401 = vadd.f32 %v3047, %v3327
  %v3402 = vadd.f32 %v3048, %v3330
  %v3403 = vadd.f32 %v3049, %v3335
  %v3404 = vadd.f32 %v3050, %v3338
  %v3405 = vadd.f32 %v3051, %v3343
  %v3406 = vadd.f32 %v3052, %v3346
  %v3407 = vadd.f32 %v3053, %v3351
  %v3408 = vadd.f32 %v3054, %v3354
  %v3409 = vadd.f32 %v3055, %v3359
  %v3410 = vadd.f32 %v3056, %v3362
  %v3411 = vadd.f32 %v3057, %v3367
  %v3412 = vadd.f32 %v3058, %v3370
  %v3413 = vld [vmem:[#allocation2 + $0x10] sm:$0xf]
  %v3414 = vld [vmem:[#allocation2 + $0x14] sm:$0xf]
  %v3415 = vld [vmem:[#allocation2 + $0x18] sm:$0xf]
  %v3416 = vld [vmem:[#allocation2 + $0x1c] sm:$0xf]
  %v3417 = vld [vmem:[#allocation2 + $0x20] sm:$0xf]
  %v3418 = vld [vmem:[#allocation2 + $0x24] sm:$0xf]
  %v3419 = vld [vmem:[#allocation2 + $0x28] sm:$0xf]
  %v3420 = vld [vmem:[#allocation2 + $0x2c] sm:$0xf]
  %v3421 = vld [vmem:[#allocation2 + $0x30] sm:$0xf]
  %v3422 = vld [vmem:[#allocation2 + $0x34] sm:$0xf]
  %v3423 = vld [vmem:[#allocation2 + $0x38] sm:$0xf]
  %v3424 = vld [vmem:[#allocation2 + $0x3c] sm:$0xf]
  %v3425 = vld [vmem:[#allocation2 + $0x40] sm:$0xf]
  %v3426 = vld [vmem:[#allocation2 + $0x44] sm:$0xf]
  %v3427 = vld [vmem:[#allocation2 + $0x48] sm:$0xf]
  %v3428 = vld [vmem:[#allocation2 + $0x4c] sm:$0xf]
  %v3429 = vld [vmem:[#allocation2 + $0x50] sm:$0xf]
  %v3430 = vld [vmem:[#allocation2 + $0x54] sm:$0xf]
  %v3431 = vld [vmem:[#allocation2 + $0x58] sm:$0xf]
  %v3432 = vld [vmem:[#allocation2 + $0x5c] sm:$0xf]
  %v3433 = vld [vmem:[#allocation2 + $0x60] sm:$0xf]
  %v3434 = vld [vmem:[#allocation2 + $0x64] sm:$0xf]
  %v3435 = vld [vmem:[#allocation2 + $0x68] sm:$0xf]
  %v3436 = vld [vmem:[#allocation2 + $0x6c] sm:$0xf]
  %v3437 = vld [vmem:[#allocation2 + $0x70] sm:$0xf]
  %v3438 = vld [vmem:[#allocation2 + $0x74] sm:$0xf]
  %v3439 = vld [vmem:[#allocation2 + $0x78] sm:$0xf]
  %v3440 = vld [vmem:[#allocation2 + $0x7c] sm:$0xf]
  %v3441 = vld [vmem:[#allocation2 + $0x80] sm:$0xf]
  %v3442 = vld [vmem:[#allocation2 + $0x84] sm:$0xf]
  %v3443 = vld [vmem:[#allocation2 + $0x88] sm:$0xf]
  %v3444 = vld [vmem:[#allocation2 + $0x8c] sm:$0xf]
  %v3445 = vld [vmem:[#allocation2 + $0x90] sm:$0xf]
  %v3446 = vld [vmem:[#allocation2 + $0x94] sm:$0xf]
  %v3447 = vld [vmem:[#allocation2 + $0x98] sm:$0xf]
  %v3448 = vld [vmem:[#allocation2 + $0x9c] sm:$0xf]
  %v3449 = vld [vmem:[#allocation2 + $0xa0] sm:$0xf]
  %v3450 = vld [vmem:[#allocation2 + $0xa4] sm:$0xf]
  %v3451 = vld [vmem:[#allocation2 + $0xa8] sm:$0xf]
  %v3452 = vld [vmem:[#allocation2 + $0xac] sm:$0xf]
  %v3453 = vld [vmem:[%s1 + $0x60] sm:$0xf]
  %v3454 = vld [vmem:[%s1 + $0x64] sm:$0xf]
  %v3455 = vld [vmem:[%s1 + $0x68] sm:$0xf]
  %v3456 = vld [vmem:[%s1 + $0x6c] sm:$0xf]
  %v3497 = vunpack.c.l.b16 %v3413
  %v3498 = vunpack.c.l.b16 %v3414
  %v3499 = vunpack.c.l.b16 %v3415
  %v3500 = vunpack.c.l.b16 %v3416
  %v3501 = vunpack.c.l.b16 %v3417
  %v3502 = vunpack.c.l.b16 %v3418
  %v3503 = vunpack.c.l.b16 %v3419
  %v3504 = vunpack.c.l.b16 %v3420
  %v3505 = vunpack.c.l.b16 %v3421
  %v3506 = vunpack.c.l.b16 %v3422
  %v3507 = vunpack.c.l.b16 %v3423
  %v3508 = vunpack.c.l.b16 %v3424
  %v3509 = vunpack.c.l.b16 %v3425
  %v3510 = vunpack.c.l.b16 %v3426
  %v3511 = vunpack.c.l.b16 %v3427
  %v3512 = vunpack.c.l.b16 %v3428
  %v3513 = vunpack.c.l.b16 %v3429
  %v3514 = vunpack.c.l.b16 %v3430
  %v3515 = vunpack.c.l.b16 %v3431
  %v3516 = vunpack.c.l.b16 %v3432
  %v3517 = vunpack.c.l.b16 %v3433
  %v3518 = vunpack.c.l.b16 %v3434
  %v3519 = vunpack.c.l.b16 %v3435
  %v3520 = vunpack.c.l.b16 %v3436
  %v3521 = vunpack.c.l.b16 %v3437
  %v3522 = vunpack.c.l.b16 %v3438
  %v3523 = vunpack.c.l.b16 %v3439
  %v3524 = vunpack.c.l.b16 %v3440
  %v3525 = vunpack.c.l.b16 %v3441
  %v3526 = vunpack.c.l.b16 %v3442
  %v3527 = vunpack.c.l.b16 %v3443
  %v3528 = vunpack.c.l.b16 %v3444
  %v3529 = vunpack.c.l.b16 %v3445
  %v3530 = vunpack.c.l.b16 %v3446
  %v3531 = vunpack.c.l.b16 %v3447
  %v3532 = vunpack.c.l.b16 %v3448
  %v3533 = vunpack.c.l.b16 %v3449
  %v3534 = vunpack.c.l.b16 %v3450
  %v3535 = vunpack.c.l.b16 %v3451
  %v3536 = vunpack.c.l.b16 %v3452
  %v3537 = vpack.c.b16 %v3498, %v3497
  %v3538 = vpack.c.b16 %v3500, %v3499
  %v3539 = vpack.c.b16 %v3502, %v3501
  %v3540 = vpack.c.b16 %v3504, %v3503
  %v3541 = vpack.c.b16 %v3506, %v3505
  %v3542 = vpack.c.b16 %v3508, %v3507
  %v3543 = vpack.c.b16 %v3510, %v3509
  %v3544 = vpack.c.b16 %v3512, %v3511
  %v3545 = vpack.c.b16 %v3514, %v3513
  %v3546 = vpack.c.b16 %v3516, %v3515
  %v3547 = vpack.c.b16 %v3518, %v3517
  %v3548 = vpack.c.b16 %v3520, %v3519
  %v3549 = vpack.c.b16 %v3522, %v3521
  %v3550 = vpack.c.b16 %v3524, %v3523
  %v3551 = vpack.c.b16 %v3526, %v3525
  %v3552 = vpack.c.b16 %v3528, %v3527
  %v3553 = vpack.c.b16 %v3530, %v3529
  %v3554 = vpack.c.b16 %v3532, %v3531
  %v3555 = vpack.c.b16 %v3534, %v3533
  %v3556 = vpack.c.b16 %v3536, %v3535
  %v3561 = vunpack.c.l.b16 %v3453
  %v3562 = vunpack.c.l.b16 %v3454
  %v3563 = vunpack.c.l.b16 %v3455
  %v3564 = vunpack.c.l.b16 %v3456
  %v3565 = vpack.c.b16 %v3562, %v3561
  %v3566 = vpack.c.b16 %v3564, %v3563
  %v3570 = vsel %vm1139, %v3537, 0
  %v3573 = vsel %vm1139, %v3538, 0
  %v3576 = vsel %vm1139, %v3539, 0
  %v3579 = vsel %vm1139, %v3540, 0
  %v3582 = vsel %vm1139, %v3541, 0
  %v3585 = vsel %vm1139, %v3542, 0
  %v3588 = vsel %vm1139, %v3543, 0
  %v3591 = vsel %vm1139, %v3544, 0
  %v3594 = vsel %vm1139, %v3545, 0
  %v3597 = vsel %vm1139, %v3546, 0
  %v3600 = vsel %vm1139, %v3547, 0
  %v3603 = vsel %vm1139, %v3548, 0
  %v3606 = vsel %vm1139, %v3549, 0
  %v3609 = vsel %vm1139, %v3550, 0
  %v3612 = vsel %vm1139, %v3551, 0
  %v3615 = vsel %vm1139, %v3552, 0
  %v3618 = vsel %vm1139, %v3553, 0
  %v3621 = vsel %vm1139, %v3554, 0
  %v3624 = vsel %vm1139, %v3555, 0
  %v3627 = vsel %vm1139, %v3556, 0
  %3629 = vmatprep.subr.bf16.mxu0 0
  %3630 = vmatpush1.bf16.msra.mxu0 %v3565
  %3631 = vmatprep.subr.bf16.mxu0 0
  %3632 = vmatpush1.bf16.msra.mxu0 %v3566
  %3633 = vmatprep.subr.bf16.mxu0 0
  %3634 = vmatpush1.bf16.msra.mxu0 0
  %3635 = vmatprep.subr.bf16.mxu0 0
  %3636 = vmatpush1.bf16.msra.mxu0 0
  %3637 = vmatprep.subr.bf16.mxu0 0
  %3638 = vmatpush1.bf16.msra.mxu0 0
  %3639 = vmatprep.subr.bf16.mxu0 0
  %3640 = vmatpush1.bf16.msra.mxu0 0
  %3641 = vmatprep.subr.bf16.mxu0 0
  %3642 = vmatpush1.bf16.msra.mxu0 0
  %3643 = vmatprep.subr.bf16.mxu0 0
  %3644 = vmatpush1.bf16.msra.mxu0 0
  %3645 = vmatprep.subr.bf16.mxu0 0
  %3646 = vmatpush1.bf16.msra.mxu0 0
  %3647 = vmatprep.subr.bf16.mxu0 0
  %3648 = vmatpush1.bf16.msra.mxu0 0
  %3649 = vmatprep.subr.bf16.mxu0 0
  %3650 = vmatpush1.bf16.msra.mxu0 0
  %3651 = vmatprep.subr.bf16.mxu0 0
  %3652 = vmatpush1.bf16.msra.mxu0 0
  %3653 = vmatprep.subr.bf16.mxu0 0
  %3654 = vmatpush1.bf16.msra.mxu0 0
  %3655 = vmatprep.subr.bf16.mxu0 0
  %3656 = vmatpush1.bf16.msra.mxu0 0
  %3657 = vmatprep.subr.bf16.mxu0 0
  %3658 = vmatpush1.bf16.msra.mxu0 0
  %3659 = vmatprep.subr.bf16.mxu0 0
  %3660 = vmatpush1.bf16.msra.mxu0 0
  %3661 = vmatprep.mubr.bf16.mxu0 0
  %3662 = vmatmul.mubr.bf16.gmra.mrb[0].mxu0 %v3570
  %v3663 = vpop.f32.mrb[0].mxu0
  %v3664 = vadd.f32 0.0, %v3663
  %v3665 = vpop.f32.mrb[0].mxu0
  %v3666 = vpop.f32.mrb[0].mxu0
  %v3667 = vadd.f32 0.0, %v3666
  %v3668 = vpop.f32.mrb[0].mxu0
  %3669 = vmatprep.mubr.bf16.mxu0 0
  %3670 = vmatmul.mubr.bf16.gmra.mrb[0].mxu0 %v3573
  %v3671 = vpop.f32.mrb[0].mxu0
  %v3672 = vadd.f32 0.0, %v3671
  %v3673 = vpop.f32.mrb[0].mxu0
  %v3674 = vpop.f32.mrb[0].mxu0
  %v3675 = vadd.f32 0.0, %v3674
  %v3676 = vpop.f32.mrb[0].mxu0
  %3677 = vmatprep.mubr.bf16.mxu0 0
  %3678 = vmatmul.mubr.bf16.gmra.mrb[0].mxu0 %v3576
  %v3679 = vpop.f32.mrb[0].mxu0
  %v3680 = vadd.f32 0.0, %v3679
  %v3681 = vpop.f32.mrb[0].mxu0
  %v3682 = vpop.f32.mrb[0].mxu0
  %v3683 = vadd.f32 0.0, %v3682
  %v3684 = vpop.f32.mrb[0].mxu0
  %3685 = vmatprep.mubr.bf16.mxu0 0
  %3686 = vmatmul.mubr.bf16.gmra.mrb[0].mxu0 %v3579
  %v3687 = vpop.f32.mrb[0].mxu0
  %v3688 = vadd.f32 0.0, %v3687
  %v3689 = vpop.f32.mrb[0].mxu0
  %v3690 = vpop.f32.mrb[0].mxu0
  %v3691 = vadd.f32 0.0, %v3690
  %v3692 = vpop.f32.mrb[0].mxu0
  %3693 = vmatprep.mubr.bf16.mxu0 0
  %3694 = vmatmul.mubr.bf16.gmra.mrb[0].mxu0 %v3582
  %v3695 = vpop.f32.mrb[0].mxu0
  %v3696 = vadd.f32 0.0, %v3695
  %v3697 = vpop.f32.mrb[0].mxu0
  %v3698 = vpop.f32.mrb[0].mxu0
  %v3699 = vadd.f32 0.0, %v3698
  %v3700 = vpop.f32.mrb[0].mxu0
  %3701 = vmatprep.mubr.bf16.mxu0 0
  %3702 = vmatmul.mubr.bf16.gmra.mrb[0].mxu0 %v3585
  %v3703 = vpop.f32.mrb[0].mxu0
  %v3704 = vadd.f32 0.0, %v3703
  %v3705 = vpop.f32.mrb[0].mxu0
  %v3706 = vpop.f32.mrb[0].mxu0
  %v3707 = vadd.f32 0.0, %v3706
  %v3708 = vpop.f32.mrb[0].mxu0
  %3709 = vmatprep.mubr.bf16.mxu0 0
  %3710 = vmatmul.mubr.bf16.gmra.mrb[0].mxu0 %v3588
  %v3711 = vpop.f32.mrb[0].mxu0
  %v3712 = vadd.f32 0.0, %v3711
  %v3713 = vpop.f32.mrb[0].mxu0
  %v3714 = vpop.f32.mrb[0].mxu0
  %v3715 = vadd.f32 0.0, %v3714
  %v3716 = vpop.f32.mrb[0].mxu0
  %3717 = vmatprep.mubr.bf16.mxu0 0
  %3718 = vmatmul.mubr.bf16.gmra.mrb[0].mxu0 %v3591
  %v3719 = vpop.f32.mrb[0].mxu0
  %v3720 = vadd.f32 0.0, %v3719
  %v3721 = vpop.f32.mrb[0].mxu0
  %v3722 = vpop.f32.mrb[0].mxu0
  %v3723 = vadd.f32 0.0, %v3722
  %v3724 = vpop.f32.mrb[0].mxu0
  %3725 = vmatprep.mubr.bf16.mxu0 0
  %3726 = vmatmul.mubr.bf16.gmra.mrb[0].mxu0 %v3594
  %v3727 = vpop.f32.mrb[0].mxu0
  %v3728 = vadd.f32 0.0, %v3727
  %v3729 = vpop.f32.mrb[0].mxu0
  %v3730 = vpop.f32.mrb[0].mxu0
  %v3731 = vadd.f32 0.0, %v3730
  %v3732 = vpop.f32.mrb[0].mxu0
  %3733 = vmatprep.mubr.bf16.mxu0 0
  %3734 = vmatmul.mubr.bf16.gmra.mrb[0].mxu0 %v3597
  %v3735 = vpop.f32.mrb[0].mxu0
  %v3736 = vadd.f32 0.0, %v3735
  %v3737 = vpop.f32.mrb[0].mxu0
  %v3738 = vpop.f32.mrb[0].mxu0
  %v3739 = vadd.f32 0.0, %v3738
  %v3740 = vpop.f32.mrb[0].mxu0
  %3741 = vmatprep.mubr.bf16.mxu0 0
  %3742 = vmatmul.mubr.bf16.gmra.mrb[0].mxu0 %v3600
  %v3743 = vpop.f32.mrb[0].mxu0
  %v3744 = vadd.f32 0.0, %v3743
  %v3745 = vpop.f32.mrb[0].mxu0
  %v3746 = vpop.f32.mrb[0].mxu0
  %v3747 = vadd.f32 0.0, %v3746
  %v3748 = vpop.f32.mrb[0].mxu0
  %3749 = vmatprep.mubr.bf16.mxu0 0
  %3750 = vmatmul.mubr.bf16.gmra.mrb[0].mxu0 %v3603
  %v3751 = vpop.f32.mrb[0].mxu0
  %v3752 = vadd.f32 0.0, %v3751
  %v3753 = vpop.f32.mrb[0].mxu0
  %v3754 = vpop.f32.mrb[0].mxu0
  %v3755 = vadd.f32 0.0, %v3754
  %v3756 = vpop.f32.mrb[0].mxu0
  %3757 = vmatprep.mubr.bf16.mxu0 0
  %3758 = vmatmul.mubr.bf16.gmra.mrb[0].mxu0 %v3606
  %v3759 = vpop.f32.mrb[0].mxu0
  %v3760 = vadd.f32 0.0, %v3759
  %v3761 = vpop.f32.mrb[0].mxu0
  %v3762 = vpop.f32.mrb[0].mxu0
  %v3763 = vadd.f32 0.0, %v3762
  %v3764 = vpop.f32.mrb[0].mxu0
  %3765 = vmatprep.mubr.bf16.mxu0 0
  %3766 = vmatmul.mubr.bf16.gmra.mrb[0].mxu0 %v3609
  %v3767 = vpop.f32.mrb[0].mxu0
  %v3768 = vadd.f32 0.0, %v3767
  %v3769 = vpop.f32.mrb[0].mxu0
  %v3770 = vpop.f32.mrb[0].mxu0
  %v3771 = vadd.f32 0.0, %v3770
  %v3772 = vpop.f32.mrb[0].mxu0
  %3773 = vmatprep.mubr.bf16.mxu0 0
  %3774 = vmatmul.mubr.bf16.gmra.mrb[0].mxu0 %v3612
  %v3775 = vpop.f32.mrb[0].mxu0
  %v3776 = vadd.f32 0.0, %v3775
  %v3777 = vpop.f32.mrb[0].mxu0
  %v3778 = vpop.f32.mrb[0].mxu0
  %v3779 = vadd.f32 0.0, %v3778
  %v3780 = vpop.f32.mrb[0].mxu0
  %3781 = vmatprep.mubr.bf16.mxu0 0
  %3782 = vmatmul.mubr.bf16.gmra.mrb[0].mxu0 %v3615
  %v3783 = vpop.f32.mrb[0].mxu0
  %v3784 = vadd.f32 0.0, %v3783
  %v3785 = vpop.f32.mrb[0].mxu0
  %v3786 = vpop.f32.mrb[0].mxu0
  %v3787 = vadd.f32 0.0, %v3786
  %v3788 = vpop.f32.mrb[0].mxu0
  %3789 = vmatprep.mubr.bf16.mxu0 0
  %3790 = vmatmul.mubr.bf16.gmra.mrb[0].mxu0 %v3618
  %v3791 = vpop.f32.mrb[0].mxu0
  %v3792 = vadd.f32 0.0, %v3791
  %v3793 = vpop.f32.mrb[0].mxu0
  %v3794 = vpop.f32.mrb[0].mxu0
  %v3795 = vadd.f32 0.0, %v3794
  %v3796 = vpop.f32.mrb[0].mxu0
  %3797 = vmatprep.mubr.bf16.mxu0 0
  %3798 = vmatmul.mubr.bf16.gmra.mrb[0].mxu0 %v3621
  %v3799 = vpop.f32.mrb[0].mxu0
  %v3800 = vadd.f32 0.0, %v3799
  %v3801 = vpop.f32.mrb[0].mxu0
  %v3802 = vpop.f32.mrb[0].mxu0
  %v3803 = vadd.f32 0.0, %v3802
  %v3804 = vpop.f32.mrb[0].mxu0
  %3805 = vmatprep.mubr.bf16.mxu0 0
  %3806 = vmatmul.mubr.bf16.gmra.mrb[0].mxu0 %v3624
  %v3807 = vpop.f32.mrb[0].mxu0
  %v3808 = vadd.f32 0.0, %v3807
  %v3809 = vpop.f32.mrb[0].mxu0
  %v3810 = vpop.f32.mrb[0].mxu0
  %v3811 = vadd.f32 0.0, %v3810
  %v3812 = vpop.f32.mrb[0].mxu0
  %3813 = vmatprep.mubr.bf16.mxu0 0
  %3814 = vmatmul.mubr.bf16.gmra.mrb[0].mxu0 %v3627
  %v3815 = vpop.f32.mrb[0].mxu0
  %v3816 = vadd.f32 0.0, %v3815
  %v3817 = vpop.f32.mrb[0].mxu0
  %v3818 = vpop.f32.mrb[0].mxu0
  %v3819 = vadd.f32 0.0, %v3818
  %v3820 = vpop.f32.mrb[0].mxu0
  %3821 = vdwg.mxu0
  %v3822 = vadd.f32 %v3373, %v3664
  %v3823 = vadd.f32 %v3374, %v3667
  %v3824 = vadd.f32 %v3375, %v3672
  %v3825 = vadd.f32 %v3376, %v3675
  %v3826 = vadd.f32 %v3377, %v3680
  %v3827 = vadd.f32 %v3378, %v3683
  %v3828 = vadd.f32 %v3379, %v3688
  %v3829 = vadd.f32 %v3380, %v3691
  %v3830 = vadd.f32 %v3381, %v3696
  %v3831 = vadd.f32 %v3382, %v3699
  %v3832 = vadd.f32 %v3383, %v3704
  %v3833 = vadd.f32 %v3384, %v3707
  %v3834 = vadd.f32 %v3385, %v3712
  %v3835 = vadd.f32 %v3386, %v3715
  %v3836 = vadd.f32 %v3387, %v3720
  %v3837 = vadd.f32 %v3388, %v3723
  %v3838 = vadd.f32 %v3389, %v3728
  %v3839 = vadd.f32 %v3390, %v3731
  %v3840 = vadd.f32 %v3391, %v3736
  %v3841 = vadd.f32 %v3392, %v3739
  %v3842 = vadd.f32 %v3393, %v3744
  %v3843 = vadd.f32 %v3394, %v3747
  %v3844 = vadd.f32 %v3395, %v3752
  %v3845 = vadd.f32 %v3396, %v3755
  %v3846 = vadd.f32 %v3397, %v3760
  %v3847 = vadd.f32 %v3398, %v3763
  %v3848 = vadd.f32 %v3399, %v3768
  %v3849 = vadd.f32 %v3400, %v3771
  %v3850 = vadd.f32 %v3401, %v3776
  %v3851 = vadd.f32 %v3402, %v3779
  %v3852 = vadd.f32 %v3403, %v3784
  %v3853 = vadd.f32 %v3404, %v3787
  %v3854 = vadd.f32 %v3405, %v3792
  %v3855 = vadd.f32 %v3406, %v3795
  %v3856 = vadd.f32 %v3407, %v3800
  %v3857 = vadd.f32 %v3408, %v3803
  %v3858 = vadd.f32 %v3409, %v3808
  %v3859 = vadd.f32 %v3410, %v3811
  %v3860 = vadd.f32 %v3411, %v3816
  %v3861 = vadd.f32 %v3412, %v3819
  %v3862 = vld [vmem:[#allocation2 + $0x10] sm:$0xf]
  %v3863 = vld [vmem:[#allocation2 + $0x14] sm:$0xf]
  %v3864 = vld [vmem:[#allocation2 + $0x18] sm:$0xf]
  %v3865 = vld [vmem:[#allocation2 + $0x1c] sm:$0xf]
  %v3866 = vld [vmem:[#allocation2 + $0x20] sm:$0xf]
  %v3867 = vld [vmem:[#allocation2 + $0x24] sm:$0xf]
  %v3868 = vld [vmem:[#allocation2 + $0x28] sm:$0xf]
  %v3869 = vld [vmem:[#allocation2 + $0x2c] sm:$0xf]
  %v3870 = vld [vmem:[#allocation2 + $0x30] sm:$0xf]
  %v3871 = vld [vmem:[#allocation2 + $0x34] sm:$0xf]
  %v3872 = vld [vmem:[#allocation2 + $0x38] sm:$0xf]
  %v3873 = vld [vmem:[#allocation2 + $0x3c] sm:$0xf]
  %v3874 = vld [vmem:[#allocation2 + $0x40] sm:$0xf]
  %v3875 = vld [vmem:[#allocation2 + $0x44] sm:$0xf]
  %v3876 = vld [vmem:[#allocation2 + $0x48] sm:$0xf]
  %v3877 = vld [vmem:[#allocation2 + $0x4c] sm:$0xf]
  %v3878 = vld [vmem:[#allocation2 + $0x50] sm:$0xf]
  %v3879 = vld [vmem:[#allocation2 + $0x54] sm:$0xf]
  %v3880 = vld [vmem:[#allocation2 + $0x58] sm:$0xf]
  %v3881 = vld [vmem:[#allocation2 + $0x5c] sm:$0xf]
  %v3882 = vld [vmem:[#allocation2 + $0x60] sm:$0xf]
  %v3883 = vld [vmem:[#allocation2 + $0x64] sm:$0xf]
  %v3884 = vld [vmem:[#allocation2 + $0x68] sm:$0xf]
  %v3885 = vld [vmem:[#allocation2 + $0x6c] sm:$0xf]
  %v3886 = vld [vmem:[#allocation2 + $0x70] sm:$0xf]
  %v3887 = vld [vmem:[#allocation2 + $0x74] sm:$0xf]
  %v3888 = vld [vmem:[#allocation2 + $0x78] sm:$0xf]
  %v3889 = vld [vmem:[#allocation2 + $0x7c] sm:$0xf]
  %v3890 = vld [vmem:[#allocation2 + $0x80] sm:$0xf]
  %v3891 = vld [vmem:[#allocation2 + $0x84] sm:$0xf]
  %v3892 = vld [vmem:[#allocation2 + $0x88] sm:$0xf]
  %v3893 = vld [vmem:[#allocation2 + $0x8c] sm:$0xf]
  %v3894 = vld [vmem:[#allocation2 + $0x90] sm:$0xf]
  %v3895 = vld [vmem:[#allocation2 + $0x94] sm:$0xf]
  %v3896 = vld [vmem:[#allocation2 + $0x98] sm:$0xf]
  %v3897 = vld [vmem:[#allocation2 + $0x9c] sm:$0xf]
  %v3898 = vld [vmem:[#allocation2 + $0xa0] sm:$0xf]
  %v3899 = vld [vmem:[#allocation2 + $0xa4] sm:$0xf]
  %v3900 = vld [vmem:[#allocation2 + $0xa8] sm:$0xf]
  %v3901 = vld [vmem:[#allocation2 + $0xac] sm:$0xf]
  %v3902 = vld [vmem:[#allocation2 + $0xb0] sm:$0x1]
  %v3903 = vld [vmem:[%s1 + $0x70] sm:$0xf]
  %v3904 = vld [vmem:[%s1 + $0x74] sm:$0xf]
  %v3905 = vld [vmem:[%s1 + $0x78] sm:$0xf]
  %v3906 = vld [vmem:[%s1 + $0x7c] sm:$0xf]
  %v3948 = vunpack.c.l.b16 %v3862
  %v3949 = vunpack.c.l.b16 %v3863
  %v3950 = vunpack.c.l.b16 %v3864
  %v3951 = vunpack.c.l.b16 %v3865
  %v3952 = vunpack.c.l.b16 %v3866
  %v3953 = vunpack.c.l.b16 %v3867
  %v3954 = vunpack.c.l.b16 %v3868
  %v3955 = vunpack.c.l.b16 %v3869
  %v3956 = vunpack.c.l.b16 %v3870
  %v3957 = vunpack.c.l.b16 %v3871
  %v3958 = vunpack.c.l.b16 %v3872
  %v3959 = vunpack.c.l.b16 %v3873
  %v3960 = vunpack.c.l.b16 %v3874
  %v3961 = vunpack.c.l.b16 %v3875
  %v3962 = vunpack.c.l.b16 %v3876
  %v3963 = vunpack.c.l.b16 %v3877
  %v3964 = vunpack.c.l.b16 %v3878
  %v3965 = vunpack.c.l.b16 %v3879
  %v3966 = vunpack.c.l.b16 %v3880
  %v3967 = vunpack.c.l.b16 %v3881
  %v3968 = vunpack.c.l.b16 %v3882
  %v3969 = vunpack.c.l.b16 %v3883
  %v3970 = vunpack.c.l.b16 %v3884
  %v3971 = vunpack.c.l.b16 %v3885
  %v3972 = vunpack.c.l.b16 %v3886
  %v3973 = vunpack.c.l.b16 %v3887
  %v3974 = vunpack.c.l.b16 %v3888
  %v3975 = vunpack.c.l.b16 %v3889
  %v3976 = vunpack.c.l.b16 %v3890
  %v3977 = vunpack.c.l.b16 %v3891
  %v3978 = vunpack.c.l.b16 %v3892
  %v3979 = vunpack.c.l.b16 %v3893
  %v3980 = vunpack.c.l.b16 %v3894
  %v3981 = vunpack.c.l.b16 %v3895
  %v3982 = vunpack.c.l.b16 %v3896
  %v3983 = vunpack.c.l.b16 %v3897
  %v3984 = vunpack.c.l.b16 %v3898
  %v3985 = vunpack.c.l.b16 %v3899
  %v3986 = vunpack.c.l.b16 %v3900
  %v3987 = vunpack.c.l.b16 %v3901
  %v3988 = vunpack.c.l.b16 %v3902
  %v3989 = vpack.c.b16 %v3949, %v3948
  %v3990 = vpack.c.b16 %v3951, %v3950
  %v3991 = vpack.c.b16 %v3953, %v3952
  %v3992 = vpack.c.b16 %v3955, %v3954
  %v3993 = vpack.c.b16 %v3957, %v3956
  %v3994 = vpack.c.b16 %v3959, %v3958
  %v3995 = vpack.c.b16 %v3961, %v3960
  %v3996 = vpack.c.b16 %v3963, %v3962
  %v3997 = vpack.c.b16 %v3965, %v3964
  %v3998 = vpack.c.b16 %v3967, %v3966
  %v3999 = vpack.c.b16 %v3969, %v3968
  %v4000 = vpack.c.b16 %v3971, %v3970
  %v4001 = vpack.c.b16 %v3973, %v3972
  %v4002 = vpack.c.b16 %v3975, %v3974
  %v4003 = vpack.c.b16 %v3977, %v3976
  %v4004 = vpack.c.b16 %v3979, %v3978
  %v4005 = vpack.c.b16 %v3981, %v3980
  %v4006 = vpack.c.b16 %v3983, %v3982
  %v4007 = vpack.c.b16 %v3985, %v3984
  %v4008 = vpack.c.b16 %v3987, %v3986
  %v4009 = vpack.c.b16 %v3988, %v3988
  %v4011 = vshrl.u32 %v3989, 16
  %v4013 = vshll.u32 %v3989, 16
  %v4015 = vrot.slane %v4013, 1
  %v4016 = vor.u32 %v4011, %v4015
  %v4018 = vshll.u32 %v3990, 16
  %v4020 = vrot.slane %v4018, 1
  %v4021 = vsel %vm962, %v4016, %v4020
  %v4022 = vshrl.u32 %v3990, 16
  %v4024 = vor.u32 %v4022, %v4020
  %v4026 = vshll.u32 %v3991, 16
  %v4028 = vrot.slane %v4026, 1
  %v4029 = vsel %vm962, %v4024, %v4028
  %v4030 = vshrl.u32 %v3991, 16
  %v4032 = vor.u32 %v4030, %v4028
  %v4034 = vshll.u32 %v3992, 16
  %v4036 = vrot.slane %v4034, 1
  %v4037 = vsel %vm962, %v4032, %v4036
  %v4038 = vshrl.u32 %v3992, 16
  %v4040 = vor.u32 %v4038, %v4036
  %v4042 = vshll.u32 %v3993, 16
  %v4044 = vrot.slane %v4042, 1
  %v4045 = vsel %vm962, %v4040, %v4044
  %v4046 = vshrl.u32 %v3993, 16
  %v4048 = vor.u32 %v4046, %v4044
  %v4050 = vshll.u32 %v3994, 16
  %v4052 = vrot.slane %v4050, 1
  %v4053 = vsel %vm962, %v4048, %v4052
  %v4054 = vshrl.u32 %v3994, 16
  %v4056 = vor.u32 %v4054, %v4052
  %v4058 = vshll.u32 %v3995, 16
  %v4060 = vrot.slane %v4058, 1
  %v4061 = vsel %vm962, %v4056, %v4060
  %v4062 = vshrl.u32 %v3995, 16
  %v4064 = vor.u32 %v4062, %v4060
  %v4066 = vshll.u32 %v3996, 16
  %v4068 = vrot.slane %v4066, 1
  %v4069 = vsel %vm962, %v4064, %v4068
  %v4070 = vshrl.u32 %v3996, 16
  %v4072 = vor.u32 %v4070, %v4068
  %v4074 = vshll.u32 %v3997, 16
  %v4076 = vrot.slane %v4074, 1
  %v4077 = vsel %vm962, %v4072, %v4076
  %v4078 = vshrl.u32 %v3997, 16
  %v4080 = vor.u32 %v4078, %v4076
  %v4082 = vshll.u32 %v3998, 16
  %v4084 = vrot.slane %v4082, 1
  %v4085 = vsel %vm962, %v4080, %v4084
  %v4086 = vshrl.u32 %v3998, 16
  %v4088 = vor.u32 %v4086, %v4084
  %v4090 = vshll.u32 %v3999, 16
  %v4092 = vrot.slane %v4090, 1
  %v4093 = vsel %vm962, %v4088, %v4092
  %v4094 = vshrl.u32 %v3999, 16
  %v4096 = vor.u32 %v4094, %v4092
  %v4098 = vshll.u32 %v4000, 16
  %v4100 = vrot.slane %v4098, 1
  %v4101 = vsel %vm962, %v4096, %v4100
  %v4102 = vshrl.u32 %v4000, 16
  %v4104 = vor.u32 %v4102, %v4100
  %v4106 = vshll.u32 %v4001, 16
  %v4108 = vrot.slane %v4106, 1
  %v4109 = vsel %vm962, %v4104, %v4108
  %v4110 = vshrl.u32 %v4001, 16
  %v4112 = vor.u32 %v4110, %v4108
  %v4114 = vshll.u32 %v4002, 16
  %v4116 = vrot.slane %v4114, 1
  %v4117 = vsel %vm962, %v4112, %v4116
  %v4118 = vshrl.u32 %v4002, 16
  %v4120 = vor.u32 %v4118, %v4116
  %v4122 = vshll.u32 %v4003, 16
  %v4124 = vrot.slane %v4122, 1
  %v4125 = vsel %vm962, %v4120, %v4124
  %v4126 = vshrl.u32 %v4003, 16
  %v4128 = vor.u32 %v4126, %v4124
  %v4130 = vshll.u32 %v4004, 16
  %v4132 = vrot.slane %v4130, 1
  %v4133 = vsel %vm962, %v4128, %v4132
  %v4134 = vshrl.u32 %v4004, 16
  %v4136 = vor.u32 %v4134, %v4132
  %v4138 = vshll.u32 %v4005, 16
  %v4140 = vrot.slane %v4138, 1
  %v4141 = vsel %vm962, %v4136, %v4140
  %v4142 = vshrl.u32 %v4005, 16
  %v4144 = vor.u32 %v4142, %v4140
  %v4146 = vshll.u32 %v4006, 16
  %v4148 = vrot.slane %v4146, 1
  %v4149 = vsel %vm962, %v4144, %v4148
  %v4150 = vshrl.u32 %v4006, 16
  %v4152 = vor.u32 %v4150, %v4148
  %v4154 = vshll.u32 %v4007, 16
  %v4156 = vrot.slane %v4154, 1
  %v4157 = vsel %vm962, %v4152, %v4156
  %v4158 = vshrl.u32 %v4007, 16
  %v4160 = vor.u32 %v4158, %v4156
  %v4162 = vshll.u32 %v4008, 16
  %v4164 = vrot.slane %v4162, 1
  %v4165 = vsel %vm962, %v4160, %v4164
  %v4166 = vshrl.u32 %v4008, 16
  %v4168 = vor.u32 %v4166, %v4164
  %v4170 = vshll.u32 %v4009, 16
  %v4172 = vrot.slane %v4170, 1
  %v4173 = vsel %vm962, %v4168, %v4172
  %v4178 = vunpack.c.l.b16 %v3903
  %v4179 = vunpack.c.l.b16 %v3904
  %v4180 = vunpack.c.l.b16 %v3905
  %v4181 = vunpack.c.l.b16 %v3906
  %v4182 = vpack.c.b16 %v4179, %v4178
  %v4183 = vpack.c.b16 %v4181, %v4180
  %v4187 = vsel %vm1139, %v4021, 0
  %v4190 = vsel %vm1139, %v4029, 0
  %v4193 = vsel %vm1139, %v4037, 0
  %v4196 = vsel %vm1139, %v4045, 0
  %v4199 = vsel %vm1139, %v4053, 0
  %v4202 = vsel %vm1139, %v4061, 0
  %v4205 = vsel %vm1139, %v4069, 0
  %v4208 = vsel %vm1139, %v4077, 0
  %v4211 = vsel %vm1139, %v4085, 0
  %v4214 = vsel %vm1139, %v4093, 0
  %v4217 = vsel %vm1139, %v4101, 0
  %v4220 = vsel %vm1139, %v4109, 0
  %v4223 = vsel %vm1139, %v4117, 0
  %v4226 = vsel %vm1139, %v4125, 0
  %v4229 = vsel %vm1139, %v4133, 0
  %v4232 = vsel %vm1139, %v4141, 0
  %v4235 = vsel %vm1139, %v4149, 0
  %v4238 = vsel %vm1139, %v4157, 0
  %v4241 = vsel %vm1139, %v4165, 0
  %v4244 = vsel %vm1139, %v4173, 0
  %4246 = vmatprep.subr.bf16.mxu0 0
  %4247 = vmatpush1.bf16.msra.mxu0 %v4182
  %4248 = vmatprep.subr.bf16.mxu0 0
  %4249 = vmatpush1.bf16.msra.mxu0 %v4183
  %4250 = vmatprep.subr.bf16.mxu0 0
  %4251 = vmatpush1.bf16.msra.mxu0 0
  %4252 = vmatprep.subr.bf16.mxu0 0
  %4253 = vmatpush1.bf16.msra.mxu0 0
  %4254 = vmatprep.subr.bf16.mxu0 0
  %4255 = vmatpush1.bf16.msra.mxu0 0
  %4256 = vmatprep.subr.bf16.mxu0 0
  %4257 = vmatpush1.bf16.msra.mxu0 0
  %4258 = vmatprep.subr.bf16.mxu0 0
  %4259 = vmatpush1.bf16.msra.mxu0 0
  %4260 = vmatprep.subr.bf16.mxu0 0
  %4261 = vmatpush1.bf16.msra.mxu0 0
  %4262 = vmatprep.subr.bf16.mxu0 0
  %4263 = vmatpush1.bf16.msra.mxu0 0
  %4264 = vmatprep.subr.bf16.mxu0 0
  %4265 = vmatpush1.bf16.msra.mxu0 0
  %4266 = vmatprep.subr.bf16.mxu0 0
  %4267 = vmatpush1.bf16.msra.mxu0 0
  %4268 = vmatprep.subr.bf16.mxu0 0
  %4269 = vmatpush1.bf16.msra.mxu0 0
  %4270 = vmatprep.subr.bf16.mxu0 0
  %4271 = vmatpush1.bf16.msra.mxu0 0
  %4272 = vmatprep.subr.bf16.mxu0 0
  %4273 = vmatpush1.bf16.msra.mxu0 0
  %4274 = vmatprep.subr.bf16.mxu0 0
  %4275 = vmatpush1.bf16.msra.mxu0 0
  %4276 = vmatprep.subr.bf16.mxu0 0
  %4277 = vmatpush1.bf16.msra.mxu0 0
  %4278 = vmatprep.mubr.bf16.mxu0 0
  %4279 = vmatmul.mubr.bf16.gmra.mrb[0].mxu0 %v4187
  %v4280 = vpop.f32.mrb[0].mxu0
  %v4281 = vadd.f32 0.0, %v4280
  %v4282 = vpop.f32.mrb[0].mxu0
  %v4283 = vpop.f32.mrb[0].mxu0
  %v4284 = vadd.f32 0.0, %v4283
  %v4285 = vpop.f32.mrb[0].mxu0
  %4286 = vmatprep.mubr.bf16.mxu0 0
  %4287 = vmatmul.mubr.bf16.gmra.mrb[0].mxu0 %v4190
  %v4288 = vpop.f32.mrb[0].mxu0
  %v4289 = vadd.f32 0.0, %v4288
  %v4290 = vpop.f32.mrb[0].mxu0
  %v4291 = vpop.f32.mrb[0].mxu0
  %v4292 = vadd.f32 0.0, %v4291
  %v4293 = vpop.f32.mrb[0].mxu0
  %4294 = vmatprep.mubr.bf16.mxu0 0
  %4295 = vmatmul.mubr.bf16.gmra.mrb[0].mxu0 %v4193
  %v4296 = vpop.f32.mrb[0].mxu0
  %v4297 = vadd.f32 0.0, %v4296
  %v4298 = vpop.f32.mrb[0].mxu0
  %v4299 = vpop.f32.mrb[0].mxu0
  %v4300 = vadd.f32 0.0, %v4299
  %v4301 = vpop.f32.mrb[0].mxu0
  %4302 = vmatprep.mubr.bf16.mxu0 0
  %4303 = vmatmul.mubr.bf16.gmra.mrb[0].mxu0 %v4196
  %v4304 = vpop.f32.mrb[0].mxu0
  %v4305 = vadd.f32 0.0, %v4304
  %v4306 = vpop.f32.mrb[0].mxu0
  %v4307 = vpop.f32.mrb[0].mxu0
  %v4308 = vadd.f32 0.0, %v4307
  %v4309 = vpop.f32.mrb[0].mxu0
  %4310 = vmatprep.mubr.bf16.mxu0 0
  %4311 = vmatmul.mubr.bf16.gmra.mrb[0].mxu0 %v4199
  %v4312 = vpop.f32.mrb[0].mxu0
  %v4313 = vadd.f32 0.0, %v4312
  %v4314 = vpop.f32.mrb[0].mxu0
  %v4315 = vpop.f32.mrb[0].mxu0
  %v4316 = vadd.f32 0.0, %v4315
  %v4317 = vpop.f32.mrb[0].mxu0
  %4318 = vmatprep.mubr.bf16.mxu0 0
  %4319 = vmatmul.mubr.bf16.gmra.mrb[0].mxu0 %v4202
  %v4320 = vpop.f32.mrb[0].mxu0
  %v4321 = vadd.f32 0.0, %v4320
  %v4322 = vpop.f32.mrb[0].mxu0
  %v4323 = vpop.f32.mrb[0].mxu0
  %v4324 = vadd.f32 0.0, %v4323
  %v4325 = vpop.f32.mrb[0].mxu0
  %4326 = vmatprep.mubr.bf16.mxu0 0
  %4327 = vmatmul.mubr.bf16.gmra.mrb[0].mxu0 %v4205
  %v4328 = vpop.f32.mrb[0].mxu0
  %v4329 = vadd.f32 0.0, %v4328
  %v4330 = vpop.f32.mrb[0].mxu0
  %v4331 = vpop.f32.mrb[0].mxu0
  %v4332 = vadd.f32 0.0, %v4331
  %v4333 = vpop.f32.mrb[0].mxu0
  %4334 = vmatprep.mubr.bf16.mxu0 0
  %4335 = vmatmul.mubr.bf16.gmra.mrb[0].mxu0 %v4208
  %v4336 = vpop.f32.mrb[0].mxu0
  %v4337 = vadd.f32 0.0, %v4336
  %v4338 = vpop.f32.mrb[0].mxu0
  %v4339 = vpop.f32.mrb[0].mxu0
  %v4340 = vadd.f32 0.0, %v4339
  %v4341 = vpop.f32.mrb[0].mxu0
  %4342 = vmatprep.mubr.bf16.mxu0 0
  %4343 = vmatmul.mubr.bf16.gmra.mrb[0].mxu0 %v4211
  %v4344 = vpop.f32.mrb[0].mxu0
  %v4345 = vadd.f32 0.0, %v4344
  %v4346 = vpop.f32.mrb[0].mxu0
  %v4347 = vpop.f32.mrb[0].mxu0
  %v4348 = vadd.f32 0.0, %v4347
  %v4349 = vpop.f32.mrb[0].mxu0
  %4350 = vmatprep.mubr.bf16.mxu0 0
  %4351 = vmatmul.mubr.bf16.gmra.mrb[0].mxu0 %v4214
  %v4352 = vpop.f32.mrb[0].mxu0
  %v4353 = vadd.f32 0.0, %v4352
  %v4354 = vpop.f32.mrb[0].mxu0
  %v4355 = vpop.f32.mrb[0].mxu0
  %v4356 = vadd.f32 0.0, %v4355
  %v4357 = vpop.f32.mrb[0].mxu0
  %4358 = vmatprep.mubr.bf16.mxu0 0
  %4359 = vmatmul.mubr.bf16.gmra.mrb[0].mxu0 %v4217
  %v4360 = vpop.f32.mrb[0].mxu0
  %v4361 = vadd.f32 0.0, %v4360
  %v4362 = vpop.f32.mrb[0].mxu0
  %v4363 = vpop.f32.mrb[0].mxu0
  %v4364 = vadd.f32 0.0, %v4363
  %v4365 = vpop.f32.mrb[0].mxu0
  %4366 = vmatprep.mubr.bf16.mxu0 0
  %4367 = vmatmul.mubr.bf16.gmra.mrb[0].mxu0 %v4220
  %v4368 = vpop.f32.mrb[0].mxu0
  %v4369 = vadd.f32 0.0, %v4368
  %v4370 = vpop.f32.mrb[0].mxu0
  %v4371 = vpop.f32.mrb[0].mxu0
  %v4372 = vadd.f32 0.0, %v4371
  %v4373 = vpop.f32.mrb[0].mxu0
  %4374 = vmatprep.mubr.bf16.mxu0 0
  %4375 = vmatmul.mubr.bf16.gmra.mrb[0].mxu0 %v4223
  %v4376 = vpop.f32.mrb[0].mxu0
  %v4377 = vadd.f32 0.0, %v4376
  %v4378 = vpop.f32.mrb[0].mxu0
  %v4379 = vpop.f32.mrb[0].mxu0
  %v4380 = vadd.f32 0.0, %v4379
  %v4381 = vpop.f32.mrb[0].mxu0
  %4382 = vmatprep.mubr.bf16.mxu0 0
  %4383 = vmatmul.mubr.bf16.gmra.mrb[0].mxu0 %v4226
  %v4384 = vpop.f32.mrb[0].mxu0
  %v4385 = vadd.f32 0.0, %v4384
  %v4386 = vpop.f32.mrb[0].mxu0
  %v4387 = vpop.f32.mrb[0].mxu0
  %v4388 = vadd.f32 0.0, %v4387
  %v4389 = vpop.f32.mrb[0].mxu0
  %4390 = vmatprep.mubr.bf16.mxu0 0
  %4391 = vmatmul.mubr.bf16.gmra.mrb[0].mxu0 %v4229
  %v4392 = vpop.f32.mrb[0].mxu0
  %v4393 = vadd.f32 0.0, %v4392
  %v4394 = vpop.f32.mrb[0].mxu0
  %v4395 = vpop.f32.mrb[0].mxu0
  %v4396 = vadd.f32 0.0, %v4395
  %v4397 = vpop.f32.mrb[0].mxu0
  %4398 = vmatprep.mubr.bf16.mxu0 0
  %4399 = vmatmul.mubr.bf16.gmra.mrb[0].mxu0 %v4232
  %v4400 = vpop.f32.mrb[0].mxu0
  %v4401 = vadd.f32 0.0, %v4400
  %v4402 = vpop.f32.mrb[0].mxu0
  %v4403 = vpop.f32.mrb[0].mxu0
  %v4404 = vadd.f32 0.0, %v4403
  %v4405 = vpop.f32.mrb[0].mxu0
  %4406 = vmatprep.mubr.bf16.mxu0 0
  %4407 = vmatmul.mubr.bf16.gmra.mrb[0].mxu0 %v4235
  %v4408 = vpop.f32.mrb[0].mxu0
  %v4409 = vadd.f32 0.0, %v4408
  %v4410 = vpop.f32.mrb[0].mxu0
  %v4411 = vpop.f32.mrb[0].mxu0
  %v4412 = vadd.f32 0.0, %v4411
  %v4413 = vpop.f32.mrb[0].mxu0
  %4414 = vmatprep.mubr.bf16.mxu0 0
  %4415 = vmatmul.mubr.bf16.gmra.mrb[0].mxu0 %v4238
  %v4416 = vpop.f32.mrb[0].mxu0
  %v4417 = vadd.f32 0.0, %v4416
  %v4418 = vpop.f32.mrb[0].mxu0
  %v4419 = vpop.f32.mrb[0].mxu0
  %v4420 = vadd.f32 0.0, %v4419
  %v4421 = vpop.f32.mrb[0].mxu0
  %4422 = vmatprep.mubr.bf16.mxu0 0
  %4423 = vmatmul.mubr.bf16.gmra.mrb[0].mxu0 %v4241
  %v4424 = vpop.f32.mrb[0].mxu0
  %v4425 = vadd.f32 0.0, %v4424
  %v4426 = vpop.f32.mrb[0].mxu0
  %v4427 = vpop.f32.mrb[0].mxu0
  %v4428 = vadd.f32 0.0, %v4427
  %v4429 = vpop.f32.mrb[0].mxu0
  %4430 = vmatprep.mubr.bf16.mxu0 0
  %4431 = vmatmul.mubr.bf16.gmra.mrb[0].mxu0 %v4244
  %v4432 = vpop.f32.mrb[0].mxu0
  %v4433 = vadd.f32 0.0, %v4432
  %v4434 = vpop.f32.mrb[0].mxu0
  %v4435 = vpop.f32.mrb[0].mxu0
  %v4436 = vadd.f32 0.0, %v4435
  %v4437 = vpop.f32.mrb[0].mxu0
  %4438 = vdwg.mxu0
  %v4439 = vadd.f32 %v3822, %v4281
  %v4440 = vadd.f32 %v3823, %v4284
  %v4441 = vadd.f32 %v3824, %v4289
  %v4442 = vadd.f32 %v3825, %v4292
  %v4443 = vadd.f32 %v3826, %v4297
  %v4444 = vadd.f32 %v3827, %v4300
  %v4445 = vadd.f32 %v3828, %v4305
  %v4446 = vadd.f32 %v3829, %v4308
  %v4447 = vadd.f32 %v3830, %v4313
  %v4448 = vadd.f32 %v3831, %v4316
  %v4449 = vadd.f32 %v3832, %v4321
  %v4450 = vadd.f32 %v3833, %v4324
  %v4451 = vadd.f32 %v3834, %v4329
  %v4452 = vadd.f32 %v3835, %v4332
  %v4453 = vadd.f32 %v3836, %v4337
  %v4454 = vadd.f32 %v3837, %v4340
  %v4455 = vadd.f32 %v3838, %v4345
  %v4456 = vadd.f32 %v3839, %v4348
  %v4457 = vadd.f32 %v3840, %v4353
  %v4458 = vadd.f32 %v3841, %v4356
  %v4459 = vadd.f32 %v3842, %v4361
  %v4460 = vadd.f32 %v3843, %v4364
  %v4461 = vadd.f32 %v3844, %v4369
  %v4462 = vadd.f32 %v3845, %v4372
  %v4463 = vadd.f32 %v3846, %v4377
  %v4464 = vadd.f32 %v3847, %v4380
  %v4465 = vadd.f32 %v3848, %v4385
  %v4466 = vadd.f32 %v3849, %v4388
  %v4467 = vadd.f32 %v3850, %v4393
  %v4468 = vadd.f32 %v3851, %v4396
  %v4469 = vadd.f32 %v3852, %v4401
  %v4470 = vadd.f32 %v3853, %v4404
  %v4471 = vadd.f32 %v3854, %v4409
  %v4472 = vadd.f32 %v3855, %v4412
  %v4473 = vadd.f32 %v3856, %v4417
  %v4474 = vadd.f32 %v3857, %v4420
  %v4475 = vadd.f32 %v3858, %v4425
  %v4476 = vadd.f32 %v3859, %v4428
  %v4477 = vadd.f32 %v3860, %v4433
  %v4478 = vadd.f32 %v3861, %v4436
  %v4479 = vld [vmem:[#allocation2 + $0x10] sm:$0xe]
  %v4480 = vld [vmem:[%s1 + $0x80] sm:$0xf]
  %v4481 = vld [vmem:[%s1 + $0x84] sm:$0xf]
  %v4482 = vld [vmem:[%s1 + $0x88] sm:$0xf]
  %v4483 = vld [vmem:[%s1 + $0x8c] sm:$0xf]
  %v4485 = vunpack.c.l.b16 %v4479
  %v4486 = vpack.c.b16 %v3949, %v4485
  %v4487 = vrot.slane %v4486, 1
  %v4488 = vrot.slane %v3990, 1
  %v4489 = vsel %vm1646, %v4487, %v4488
  %v4490 = vrot.slane %v3991, 1
  %v4491 = vsel %vm1646, %v4488, %v4490
  %v4492 = vrot.slane %v3992, 1
  %v4493 = vsel %vm1646, %v4490, %v4492
  %v4494 = vrot.slane %v3993, 1
  %v4495 = vsel %vm1646, %v4492, %v4494
  %v4496 = vrot.slane %v3994, 1
  %v4497 = vsel %vm1646, %v4494, %v4496
  %v4498 = vrot.slane %v3995, 1
  %v4499 = vsel %vm1646, %v4496, %v4498
  %v4500 = vrot.slane %v3996, 1
  %v4501 = vsel %vm1646, %v4498, %v4500
  %v4502 = vrot.slane %v3997, 1
  %v4503 = vsel %vm1646, %v4500, %v4502
  %v4504 = vrot.slane %v3998, 1
  %v4505 = vsel %vm1646, %v4502, %v4504
  %v4506 = vrot.slane %v3999, 1
  %v4507 = vsel %vm1646, %v4504, %v4506
  %v4508 = vrot.slane %v4000, 1
  %v4509 = vsel %vm1646, %v4506, %v4508
  %v4510 = vrot.slane %v4001, 1
  %v4511 = vsel %vm1646, %v4508, %v4510
  %v4512 = vrot.slane %v4002, 1
  %v4513 = vsel %vm1646, %v4510, %v4512
  %v4514 = vrot.slane %v4003, 1
  %v4515 = vsel %vm1646, %v4512, %v4514
  %v4516 = vrot.slane %v4004, 1
  %v4517 = vsel %vm1646, %v4514, %v4516
  %v4518 = vrot.slane %v4005, 1
  %v4519 = vsel %vm1646, %v4516, %v4518
  %v4520 = vrot.slane %v4006, 1
  %v4521 = vsel %vm1646, %v4518, %v4520
  %v4522 = vrot.slane %v4007, 1
  %v4523 = vsel %vm1646, %v4520, %v4522
  %v4524 = vrot.slane %v4008, 1
  %v4525 = vsel %vm1646, %v4522, %v4524
  %v4526 = vrot.slane %v4009, 1
  %v4527 = vsel %vm1646, %v4524, %v4526
  %v4532 = vunpack.c.l.b16 %v4480
  %v4533 = vunpack.c.l.b16 %v4481
  %v4534 = vunpack.c.l.b16 %v4482
  %v4535 = vunpack.c.l.b16 %v4483
  %v4536 = vpack.c.b16 %v4533, %v4532
  %v4537 = vpack.c.b16 %v4535, %v4534
  %v4541 = vsel %vm1139, %v4489, 0
  %v4544 = vsel %vm1139, %v4491, 0
  %v4547 = vsel %vm1139, %v4493, 0
  %v4550 = vsel %vm1139, %v4495, 0
  %v4553 = vsel %vm1139, %v4497, 0
  %v4556 = vsel %vm1139, %v4499, 0
  %v4559 = vsel %vm1139, %v4501, 0
  %v4562 = vsel %vm1139, %v4503, 0
  %v4565 = vsel %vm1139, %v4505, 0
  %v4568 = vsel %vm1139, %v4507, 0
  %v4571 = vsel %vm1139, %v4509, 0
  %v4574 = vsel %vm1139, %v4511, 0
  %v4577 = vsel %vm1139, %v4513, 0
  %v4580 = vsel %vm1139, %v4515, 0
  %v4583 = vsel %vm1139, %v4517, 0
  %v4586 = vsel %vm1139, %v4519, 0
  %v4589 = vsel %vm1139, %v4521, 0
  %v4592 = vsel %vm1139, %v4523, 0
  %v4595 = vsel %vm1139, %v4525, 0
  %v4598 = vsel %vm1139, %v4527, 0
  %4600 = vmatprep.subr.bf16.mxu0 0
  %4601 = vmatpush1.bf16.msra.mxu0 %v4536
  %4602 = vmatprep.subr.bf16.mxu0 0
  %4603 = vmatpush1.bf16.msra.mxu0 %v4537
  %4604 = vmatprep.subr.bf16.mxu0 0
  %4605 = vmatpush1.bf16.msra.mxu0 0
  %4606 = vmatprep.subr.bf16.mxu0 0
  %4607 = vmatpush1.bf16.msra.mxu0 0
  %4608 = vmatprep.subr.bf16.mxu0 0
  %4609 = vmatpush1.bf16.msra.mxu0 0
  %4610 = vmatprep.subr.bf16.mxu0 0
  %4611 = vmatpush1.bf16.msra.mxu0 0
  %4612 = vmatprep.subr.bf16.mxu0 0
  %4613 = vmatpush1.bf16.msra.mxu0 0
  %4614 = vmatprep.subr.bf16.mxu0 0
  %4615 = vmatpush1.bf16.msra.mxu0 0
  %4616 = vmatprep.subr.bf16.mxu0 0
  %4617 = vmatpush1.bf16.msra.mxu0 0
  %4618 = vmatprep.subr.bf16.mxu0 0
  %4619 = vmatpush1.bf16.msra.mxu0 0
  %4620 = vmatprep.subr.bf16.mxu0 0
  %4621 = vmatpush1.bf16.msra.mxu0 0
  %4622 = vmatprep.subr.bf16.mxu0 0
  %4623 = vmatpush1.bf16.msra.mxu0 0
  %4624 = vmatprep.subr.bf16.mxu0 0
  %4625 = vmatpush1.bf16.msra.mxu0 0
  %4626 = vmatprep.subr.bf16.mxu0 0
  %4627 = vmatpush1.bf16.msra.mxu0 0
  %4628 = vmatprep.subr.bf16.mxu0 0
  %4629 = vmatpush1.bf16.msra.mxu0 0
  %4630 = vmatprep.subr.bf16.mxu0 0
  %4631 = vmatpush1.bf16.msra.mxu0 0
  %4632 = vmatprep.mubr.bf16.mxu0 0
  %4633 = vmatmul.mubr.bf16.gmra.mrb[0].mxu0 %v4541
  %v4634 = vpop.f32.mrb[0].mxu0
  %v4635 = vadd.f32 0.0, %v4634
  %v4636 = vpop.f32.mrb[0].mxu0
  %v4637 = vpop.f32.mrb[0].mxu0
  %v4638 = vadd.f32 0.0, %v4637
  %v4639 = vpop.f32.mrb[0].mxu0
  %4640 = vmatprep.mubr.bf16.mxu0 0
  %4641 = vmatmul.mubr.bf16.gmra.mrb[0].mxu0 %v4544
  %v4642 = vpop.f32.mrb[0].mxu0
  %v4643 = vadd.f32 0.0, %v4642
  %v4644 = vpop.f32.mrb[0].mxu0
  %v4645 = vpop.f32.mrb[0].mxu0
  %v4646 = vadd.f32 0.0, %v4645
  %v4647 = vpop.f32.mrb[0].mxu0
  %4648 = vmatprep.mubr.bf16.mxu0 0
  %4649 = vmatmul.mubr.bf16.gmra.mrb[0].mxu0 %v4547
  %v4650 = vpop.f32.mrb[0].mxu0
  %v4651 = vadd.f32 0.0, %v4650
  %v4652 = vpop.f32.mrb[0].mxu0
  %v4653 = vpop.f32.mrb[0].mxu0
  %v4654 = vadd.f32 0.0, %v4653
  %v4655 = vpop.f32.mrb[0].mxu0
  %4656 = vmatprep.mubr.bf16.mxu0 0
  %4657 = vmatmul.mubr.bf16.gmra.mrb[0].mxu0 %v4550
  %v4658 = vpop.f32.mrb[0].mxu0
  %v4659 = vadd.f32 0.0, %v4658
  %v4660 = vpop.f32.mrb[0].mxu0
  %v4661 = vpop.f32.mrb[0].mxu0
  %v4662 = vadd.f32 0.0, %v4661
  %v4663 = vpop.f32.mrb[0].mxu0
  %4664 = vmatprep.mubr.bf16.mxu0 0
  %4665 = vmatmul.mubr.bf16.gmra.mrb[0].mxu0 %v4553
  %v4666 = vpop.f32.mrb[0].mxu0
  %v4667 = vadd.f32 0.0, %v4666
  %v4668 = vpop.f32.mrb[0].mxu0
  %v4669 = vpop.f32.mrb[0].mxu0
  %v4670 = vadd.f32 0.0, %v4669
  %v4671 = vpop.f32.mrb[0].mxu0
  %4672 = vmatprep.mubr.bf16.mxu0 0
  %4673 = vmatmul.mubr.bf16.gmra.mrb[0].mxu0 %v4556
  %v4674 = vpop.f32.mrb[0].mxu0
  %v4675 = vadd.f32 0.0, %v4674
  %v4676 = vpop.f32.mrb[0].mxu0
  %v4677 = vpop.f32.mrb[0].mxu0
  %v4678 = vadd.f32 0.0, %v4677
  %v4679 = vpop.f32.mrb[0].mxu0
  %4680 = vmatprep.mubr.bf16.mxu0 0
  %4681 = vmatmul.mubr.bf16.gmra.mrb[0].mxu0 %v4559
  %v4682 = vpop.f32.mrb[0].mxu0
  %v4683 = vadd.f32 0.0, %v4682
  %v4684 = vpop.f32.mrb[0].mxu0
  %v4685 = vpop.f32.mrb[0].mxu0
  %v4686 = vadd.f32 0.0, %v4685
  %v4687 = vpop.f32.mrb[0].mxu0
  %4688 = vmatprep.mubr.bf16.mxu0 0
  %4689 = vmatmul.mubr.bf16.gmra.mrb[0].mxu0 %v4562
  %v4690 = vpop.f32.mrb[0].mxu0
  %v4691 = vadd.f32 0.0, %v4690
  %v4692 = vpop.f32.mrb[0].mxu0
  %v4693 = vpop.f32.mrb[0].mxu0
  %v4694 = vadd.f32 0.0, %v4693
  %v4695 = vpop.f32.mrb[0].mxu0
  %4696 = vmatprep.mubr.bf16.mxu0 0
  %4697 = vmatmul.mubr.bf16.gmra.mrb[0].mxu0 %v4565
  %v4698 = vpop.f32.mrb[0].mxu0
  %v4699 = vadd.f32 0.0, %v4698
  %v4700 = vpop.f32.mrb[0].mxu0
  %v4701 = vpop.f32.mrb[0].mxu0
  %v4702 = vadd.f32 0.0, %v4701
  %v4703 = vpop.f32.mrb[0].mxu0
  %4704 = vmatprep.mubr.bf16.mxu0 0
  %4705 = vmatmul.mubr.bf16.gmra.mrb[0].mxu0 %v4568
  %v4706 = vpop.f32.mrb[0].mxu0
  %v4707 = vadd.f32 0.0, %v4706
  %v4708 = vpop.f32.mrb[0].mxu0
  %v4709 = vpop.f32.mrb[0].mxu0
  %v4710 = vadd.f32 0.0, %v4709
  %v4711 = vpop.f32.mrb[0].mxu0
  %4712 = vmatprep.mubr.bf16.mxu0 0
  %4713 = vmatmul.mubr.bf16.gmra.mrb[0].mxu0 %v4571
  %v4714 = vpop.f32.mrb[0].mxu0
  %v4715 = vadd.f32 0.0, %v4714
  %v4716 = vpop.f32.mrb[0].mxu0
  %v4717 = vpop.f32.mrb[0].mxu0
  %v4718 = vadd.f32 0.0, %v4717
  %v4719 = vpop.f32.mrb[0].mxu0
  %4720 = vmatprep.mubr.bf16.mxu0 0
  %4721 = vmatmul.mubr.bf16.gmra.mrb[0].mxu0 %v4574
  %v4722 = vpop.f32.mrb[0].mxu0
  %v4723 = vadd.f32 0.0, %v4722
  %v4724 = vpop.f32.mrb[0].mxu0
  %v4725 = vpop.f32.mrb[0].mxu0
  %v4726 = vadd.f32 0.0, %v4725
  %v4727 = vpop.f32.mrb[0].mxu0
  %4728 = vmatprep.mubr.bf16.mxu0 0
  %4729 = vmatmul.mubr.bf16.gmra.mrb[0].mxu0 %v4577
  %v4730 = vpop.f32.mrb[0].mxu0
  %v4731 = vadd.f32 0.0, %v4730
  %v4732 = vpop.f32.mrb[0].mxu0
  %v4733 = vpop.f32.mrb[0].mxu0
  %v4734 = vadd.f32 0.0, %v4733
  %v4735 = vpop.f32.mrb[0].mxu0
  %4736 = vmatprep.mubr.bf16.mxu0 0
  %4737 = vmatmul.mubr.bf16.gmra.mrb[0].mxu0 %v4580
  %v4738 = vpop.f32.mrb[0].mxu0
  %v4739 = vadd.f32 0.0, %v4738
  %v4740 = vpop.f32.mrb[0].mxu0
  %v4741 = vpop.f32.mrb[0].mxu0
  %v4742 = vadd.f32 0.0, %v4741
  %v4743 = vpop.f32.mrb[0].mxu0
  %4744 = vmatprep.mubr.bf16.mxu0 0
  %4745 = vmatmul.mubr.bf16.gmra.mrb[0].mxu0 %v4583
  %v4746 = vpop.f32.mrb[0].mxu0
  %v4747 = vadd.f32 0.0, %v4746
  %v4748 = vpop.f32.mrb[0].mxu0
  %v4749 = vpop.f32.mrb[0].mxu0
  %v4750 = vadd.f32 0.0, %v4749
  %v4751 = vpop.f32.mrb[0].mxu0
  %4752 = vmatprep.mubr.bf16.mxu0 0
  %4753 = vmatmul.mubr.bf16.gmra.mrb[0].mxu0 %v4586
  %v4754 = vpop.f32.mrb[0].mxu0
  %v4755 = vadd.f32 0.0, %v4754
  %v4756 = vpop.f32.mrb[0].mxu0
  %v4757 = vpop.f32.mrb[0].mxu0
  %v4758 = vadd.f32 0.0, %v4757
  %v4759 = vpop.f32.mrb[0].mxu0
  %4760 = vmatprep.mubr.bf16.mxu0 0
  %4761 = vmatmul.mubr.bf16.gmra.mrb[0].mxu0 %v4589
  %v4762 = vpop.f32.mrb[0].mxu0
  %v4763 = vadd.f32 0.0, %v4762
  %v4764 = vpop.f32.mrb[0].mxu0
  %v4765 = vpop.f32.mrb[0].mxu0
  %v4766 = vadd.f32 0.0, %v4765
  %v4767 = vpop.f32.mrb[0].mxu0
  %4768 = vmatprep.mubr.bf16.mxu0 0
  %4769 = vmatmul.mubr.bf16.gmra.mrb[0].mxu0 %v4592
  %v4770 = vpop.f32.mrb[0].mxu0
  %v4771 = vadd.f32 0.0, %v4770
  %v4772 = vpop.f32.mrb[0].mxu0
  %v4773 = vpop.f32.mrb[0].mxu0
  %v4774 = vadd.f32 0.0, %v4773
  %v4775 = vpop.f32.mrb[0].mxu0
  %4776 = vmatprep.mubr.bf16.mxu0 0
  %4777 = vmatmul.mubr.bf16.gmra.mrb[0].mxu0 %v4595
  %v4778 = vpop.f32.mrb[0].mxu0
  %v4779 = vadd.f32 0.0, %v4778
  %v4780 = vpop.f32.mrb[0].mxu0
  %v4781 = vpop.f32.mrb[0].mxu0
  %v4782 = vadd.f32 0.0, %v4781
  %v4783 = vpop.f32.mrb[0].mxu0
  %4784 = vmatprep.mubr.bf16.mxu0 0
  %4785 = vmatmul.mubr.bf16.gmra.mrb[0].mxu0 %v4598
  %v4786 = vpop.f32.mrb[0].mxu0
  %v4787 = vadd.f32 0.0, %v4786
  %v4788 = vpop.f32.mrb[0].mxu0
  %v4789 = vpop.f32.mrb[0].mxu0
  %v4790 = vadd.f32 0.0, %v4789
  %v4791 = vpop.f32.mrb[0].mxu0
  %4792 = vdwg.mxu0
  %v4793 = vadd.f32 %v4439, %v4635
  %v4794 = vadd.f32 %v4440, %v4638
  %v4795 = vadd.f32 %v4441, %v4643
  %v4796 = vadd.f32 %v4442, %v4646
  %v4797 = vadd.f32 %v4443, %v4651
  %v4798 = vadd.f32 %v4444, %v4654
  %v4799 = vadd.f32 %v4445, %v4659
  %v4800 = vadd.f32 %v4446, %v4662
  %v4801 = vadd.f32 %v4447, %v4667
  %v4802 = vadd.f32 %v4448, %v4670
  %v4803 = vadd.f32 %v4449, %v4675
  %v4804 = vadd.f32 %v4450, %v4678
  %v4805 = vadd.f32 %v4451, %v4683
  %v4806 = vadd.f32 %v4452, %v4686
  %v4807 = vadd.f32 %v4453, %v4691
  %v4808 = vadd.f32 %v4454, %v4694
  %v4809 = vadd.f32 %v4455, %v4699
  %v4810 = vadd.f32 %v4456, %v4702
  %v4811 = vadd.f32 %v4457, %v4707
  %v4812 = vadd.f32 %v4458, %v4710
  %v4813 = vadd.f32 %v4459, %v4715
  %v4814 = vadd.f32 %v4460, %v4718
  %v4815 = vadd.f32 %v4461, %v4723
  %v4816 = vadd.f32 %v4462, %v4726
  %v4817 = vadd.f32 %v4463, %v4731
  %v4818 = vadd.f32 %v4464, %v4734
  %v4819 = vadd.f32 %v4465, %v4739
  %v4820 = vadd.f32 %v4466, %v4742
  %v4821 = vadd.f32 %v4467, %v4747
  %v4822 = vadd.f32 %v4468, %v4750
  %v4823 = vadd.f32 %v4469, %v4755
  %v4824 = vadd.f32 %v4470, %v4758
  %v4825 = vadd.f32 %v4471, %v4763
  %v4826 = vadd.f32 %v4472, %v4766
  %v4827 = vadd.f32 %v4473, %v4771
  %v4828 = vadd.f32 %v4474, %v4774
  %v4829 = vadd.f32 %v4475, %v4779
  %v4830 = vadd.f32 %v4476, %v4782
  %v4831 = vadd.f32 %v4477, %v4787
  %v4832 = vadd.f32 %v4478, %v4790
  %s4833 = sadd.s32 %s23, 17
  %s4834 = scalar_lea.vmem %s2, %s4833
  %v4835 = vld [vmem:[%s4834] sm:$0xff]
  %v4836 = vld [vmem:[%s4834 + $0x8] sm:$0xff]
  %v4837 = vld [vmem:[%s4834 + $0x10] sm:$0xff]
  %v4838 = vld [vmem:[%s4834 + $0x18] sm:$0xff]
  %v4839 = vld [vmem:[%s4834 + $0x20] sm:$0xff]
  %v4840 = vld [vmem:[%s4834 + $0x28] sm:$0xff]
  %v4841 = vld [vmem:[%s4834 + $0x30] sm:$0xff]
  %v4842 = vld [vmem:[%s4834 + $0x38] sm:$0xff]
  %v4843 = vld [vmem:[%s4834 + $0x40] sm:$0xff]
  %v4844 = vld [vmem:[%s4834 + $0x48] sm:$0xff]
  %v4845 = vld [vmem:[%s4834 + $0x50] sm:$0xff]
  %v4846 = vld [vmem:[%s4834 + $0x58] sm:$0xff]
  %v4847 = vld [vmem:[%s4834 + $0x60] sm:$0xff]
  %v4848 = vld [vmem:[%s4834 + $0x68] sm:$0xff]
  %v4849 = vld [vmem:[%s4834 + $0x70] sm:$0xff]
  %v4850 = vld [vmem:[%s4834 + $0x78] sm:$0xff]
  %v4851 = vld [vmem:[%s4834 + $0x80] sm:$0xff]
  %v4852 = vld [vmem:[%s4834 + $0x88] sm:$0xff]
  %v4853 = vld [vmem:[%s4834 + $0x90] sm:$0xff]
  %v4854 = vld [vmem:[%s4834 + $0x98] sm:$0xff]
  %v4855 = vld [vmem:[%s4834 + $0xa0] sm:$0xff]
  %v4856 = vld [vmem:[%s4834 + $0xa8] sm:$0xff]
  %v4857 = vld [vmem:[%s4834 + $0xb0] sm:$0xff]
  %v4858 = vld [vmem:[%s4834 + $0xb8] sm:$0xff]
  %v4859 = vld [vmem:[%s4834 + $0xc0] sm:$0xff]
  %v4860 = vld [vmem:[%s4834 + $0xc8] sm:$0xff]
  %v4861 = vld [vmem:[%s4834 + $0xd0] sm:$0xff]
  %v4862 = vld [vmem:[%s4834 + $0xd8] sm:$0xff]
  %v4863 = vld [vmem:[%s4834 + $0xe0] sm:$0xff]
  %v4864 = vld [vmem:[%s4834 + $0xe8] sm:$0xff]
  %v4865 = vld [vmem:[%s4834 + $0xf0] sm:$0xff]
  %v4866 = vld [vmem:[%s4834 + $0xf8] sm:$0xff]
  %v4867 = vld [vmem:[%s4834 + $0x100] sm:$0xff]
  %v4868 = vld [vmem:[%s4834 + $0x108] sm:$0xff]
  %v4869 = vld [vmem:[%s4834 + $0x110] sm:$0xff]
  %v4870 = vld [vmem:[%s4834 + $0x118] sm:$0xff]
  %v4871 = vld [vmem:[%s4834 + $0x120] sm:$0xff]
  %v4872 = vld [vmem:[%s4834 + $0x128] sm:$0xff]
  %v4873 = vld [vmem:[%s4834 + $0x130] sm:$0xff]
  %v4874 = vld [vmem:[%s4834 + $0x138] sm:$0xff]
  %4876 = vset.pattern.permute.xlu0 0
  %4877 = vperm.xlu0 %4876, %v4835
  %v4878 = vpop.permute.xlu0 %4877
  %4881 = vset.pattern.permute.xlu0 0
  %4882 = vperm.xlu0 %4881, %v4836
  %v4883 = vpop.permute.xlu0 %4882
  %4886 = vset.pattern.permute.xlu0 0
  %4887 = vperm.xlu0 %4886, %v4837
  %v4888 = vpop.permute.xlu0 %4887
  %4891 = vset.pattern.permute.xlu0 0
  %4892 = vperm.xlu0 %4891, %v4838
  %v4893 = vpop.permute.xlu0 %4892
  %4896 = vset.pattern.permute.xlu0 0
  %4897 = vperm.xlu0 %4896, %v4839
  %v4898 = vpop.permute.xlu0 %4897
  %4901 = vset.pattern.permute.xlu0 0
  %4902 = vperm.xlu0 %4901, %v4840
  %v4903 = vpop.permute.xlu0 %4902
  %4906 = vset.pattern.permute.xlu0 0
  %4907 = vperm.xlu0 %4906, %v4841
  %v4908 = vpop.permute.xlu0 %4907
  %4911 = vset.pattern.permute.xlu0 0
  %4912 = vperm.xlu0 %4911, %v4842
  %v4913 = vpop.permute.xlu0 %4912
  %4916 = vset.pattern.permute.xlu0 0
  %4917 = vperm.xlu0 %4916, %v4843
  %v4918 = vpop.permute.xlu0 %4917
  %4921 = vset.pattern.permute.xlu0 0
  %4922 = vperm.xlu0 %4921, %v4844
  %v4923 = vpop.permute.xlu0 %4922
  %4926 = vset.pattern.permute.xlu0 0
  %4927 = vperm.xlu0 %4926, %v4845
  %v4928 = vpop.permute.xlu0 %4927
  %4931 = vset.pattern.permute.xlu0 0
  %4932 = vperm.xlu0 %4931, %v4846
  %v4933 = vpop.permute.xlu0 %4932
  %4936 = vset.pattern.permute.xlu0 0
  %4937 = vperm.xlu0 %4936, %v4847
  %v4938 = vpop.permute.xlu0 %4937
  %4941 = vset.pattern.permute.xlu0 0
  %4942 = vperm.xlu0 %4941, %v4848
  %v4943 = vpop.permute.xlu0 %4942
  %4946 = vset.pattern.permute.xlu0 0
  %4947 = vperm.xlu0 %4946, %v4849
  %v4948 = vpop.permute.xlu0 %4947
  %4951 = vset.pattern.permute.xlu0 0
  %4952 = vperm.xlu0 %4951, %v4850
  %v4953 = vpop.permute.xlu0 %4952
  %4956 = vset.pattern.permute.xlu0 0
  %4957 = vperm.xlu0 %4956, %v4851
  %v4958 = vpop.permute.xlu0 %4957
  %4961 = vset.pattern.permute.xlu0 0
  %4962 = vperm.xlu0 %4961, %v4852
  %v4963 = vpop.permute.xlu0 %4962
  %4966 = vset.pattern.permute.xlu0 0
  %4967 = vperm.xlu0 %4966, %v4853
  %v4968 = vpop.permute.xlu0 %4967
  %4971 = vset.pattern.permute.xlu0 0
  %4972 = vperm.xlu0 %4971, %v4854
  %v4973 = vpop.permute.xlu0 %4972
  %4976 = vset.pattern.permute.xlu0 0
  %4977 = vperm.xlu0 %4976, %v4855
  %v4978 = vpop.permute.xlu0 %4977
  %4981 = vset.pattern.permute.xlu0 0
  %4982 = vperm.xlu0 %4981, %v4856
  %v4983 = vpop.permute.xlu0 %4982
  %4986 = vset.pattern.permute.xlu0 0
  %4987 = vperm.xlu0 %4986, %v4857
  %v4988 = vpop.permute.xlu0 %4987
  %4991 = vset.pattern.permute.xlu0 0
  %4992 = vperm.xlu0 %4991, %v4858
  %v4993 = vpop.permute.xlu0 %4992
  %4996 = vset.pattern.permute.xlu0 0
  %4997 = vperm.xlu0 %4996, %v4859
  %v4998 = vpop.permute.xlu0 %4997
  %5001 = vset.pattern.permute.xlu0 0
  %5002 = vperm.xlu0 %5001, %v4860
  %v5003 = vpop.permute.xlu0 %5002
  %5006 = vset.pattern.permute.xlu0 0
  %5007 = vperm.xlu0 %5006, %v4861
  %v5008 = vpop.permute.xlu0 %5007
  %5011 = vset.pattern.permute.xlu0 0
  %5012 = vperm.xlu0 %5011, %v4862
  %v5013 = vpop.permute.xlu0 %5012
  %5016 = vset.pattern.permute.xlu0 0
  %5017 = vperm.xlu0 %5016, %v4863
  %v5018 = vpop.permute.xlu0 %5017
  %5021 = vset.pattern.permute.xlu0 0
  %5022 = vperm.xlu0 %5021, %v4864
  %v5023 = vpop.permute.xlu0 %5022
  %5026 = vset.pattern.permute.xlu0 0
  %5027 = vperm.xlu0 %5026, %v4865
  %v5028 = vpop.permute.xlu0 %5027
  %5031 = vset.pattern.permute.xlu0 0
  %5032 = vperm.xlu0 %5031, %v4866
  %v5033 = vpop.permute.xlu0 %5032
  %5036 = vset.pattern.permute.xlu0 0
  %5037 = vperm.xlu0 %5036, %v4867
  %v5038 = vpop.permute.xlu0 %5037
  %5041 = vset.pattern.permute.xlu0 0
  %5042 = vperm.xlu0 %5041, %v4868
  %v5043 = vpop.permute.xlu0 %5042
  %5046 = vset.pattern.permute.xlu0 0
  %5047 = vperm.xlu0 %5046, %v4869
  %v5048 = vpop.permute.xlu0 %5047
  %5051 = vset.pattern.permute.xlu0 0
  %5052 = vperm.xlu0 %5051, %v4870
  %v5053 = vpop.permute.xlu0 %5052
  %5056 = vset.pattern.permute.xlu0 0
  %5057 = vperm.xlu0 %5056, %v4871
  %v5058 = vpop.permute.xlu0 %5057
  %5061 = vset.pattern.permute.xlu0 0
  %5062 = vperm.xlu0 %5061, %v4872
  %v5063 = vpop.permute.xlu0 %5062
  %5066 = vset.pattern.permute.xlu0 0
  %5067 = vperm.xlu0 %5066, %v4873
  %v5068 = vpop.permute.xlu0 %5067
  %5071 = vset.pattern.permute.xlu0 0
  %5072 = vperm.xlu0 %5071, %v4874
  %v5073 = vpop.permute.xlu0 %5072
  %v5075 = vmul.f32 %v4793, %v4878
  %v5076 = vmul.f32 %v4794, %v4883
  %v5077 = vmul.f32 %v4795, %v4888
  %v5078 = vmul.f32 %v4796, %v4893
  %v5079 = vmul.f32 %v4797, %v4898
  %v5080 = vmul.f32 %v4798, %v4903
  %v5081 = vmul.f32 %v4799, %v4908
  %v5082 = vmul.f32 %v4800, %v4913
  %v5083 = vmul.f32 %v4801, %v4918
  %v5084 = vmul.f32 %v4802, %v4923
  %v5085 = vmul.f32 %v4803, %v4928
  %v5086 = vmul.f32 %v4804, %v4933
  %v5087 = vmul.f32 %v4805, %v4938
  %v5088 = vmul.f32 %v4806, %v4943
  %v5089 = vmul.f32 %v4807, %v4948
  %v5090 = vmul.f32 %v4808, %v4953
  %v5091 = vmul.f32 %v4809, %v4958
  %v5092 = vmul.f32 %v4810, %v4963
  %v5093 = vmul.f32 %v4811, %v4968
  %v5094 = vmul.f32 %v4812, %v4973
  %v5095 = vmul.f32 %v4813, %v4978
  %v5096 = vmul.f32 %v4814, %v4983
  %v5097 = vmul.f32 %v4815, %v4988
  %v5098 = vmul.f32 %v4816, %v4993
  %v5099 = vmul.f32 %v4817, %v4998
  %v5100 = vmul.f32 %v4818, %v5003
  %v5101 = vmul.f32 %v4819, %v5008
  %v5102 = vmul.f32 %v4820, %v5013
  %v5103 = vmul.f32 %v4821, %v5018
  %v5104 = vmul.f32 %v4822, %v5023
  %v5105 = vmul.f32 %v4823, %v5028
  %v5106 = vmul.f32 %v4824, %v5033
  %v5107 = vmul.f32 %v4825, %v5038
  %v5108 = vmul.f32 %v4826, %v5043
  %v5109 = vmul.f32 %v4827, %v5048
  %v5110 = vmul.f32 %v4828, %v5053
  %v5111 = vmul.f32 %v4829, %v5058
  %v5112 = vmul.f32 %v4830, %v5063
  %v5113 = vmul.f32 %v4831, %v5068
  %v5114 = vmul.f32 %v4832, %v5073
  %v5115 = vsel %vm1139, %v5075, 0.0
  %v5116 = vsel %vm1139, %v5076, 0.0
  %v5117 = vadd.f32 %v5115, %v5116
  %v5118 = vsel %vm1139, %v5077, 0.0
  %v5119 = vadd.f32 %v5117, %v5118
  %v5120 = vsel %vm1139, %v5078, 0.0
  %v5121 = vadd.f32 %v5119, %v5120
  %v5122 = vsel %vm1139, %v5079, 0.0
  %v5123 = vadd.f32 %v5121, %v5122
  %v5124 = vsel %vm1139, %v5080, 0.0
  %v5125 = vadd.f32 %v5123, %v5124
  %v5126 = vsel %vm1139, %v5081, 0.0
  %v5127 = vadd.f32 %v5125, %v5126
  %v5128 = vsel %vm1139, %v5082, 0.0
  %v5129 = vadd.f32 %v5127, %v5128
  %v5130 = vsel %vm1139, %v5083, 0.0
  %v5131 = vadd.f32 %v5129, %v5130
  %v5132 = vsel %vm1139, %v5084, 0.0
  %v5133 = vadd.f32 %v5131, %v5132
  %v5134 = vsel %vm1139, %v5085, 0.0
  %v5135 = vadd.f32 %v5133, %v5134
  %v5136 = vsel %vm1139, %v5086, 0.0
  %v5137 = vadd.f32 %v5135, %v5136
  %v5138 = vsel %vm1139, %v5087, 0.0
  %v5139 = vadd.f32 %v5137, %v5138
  %v5140 = vsel %vm1139, %v5088, 0.0
  %v5141 = vadd.f32 %v5139, %v5140
  %v5142 = vsel %vm1139, %v5089, 0.0
  %v5143 = vadd.f32 %v5141, %v5142
  %v5144 = vsel %vm1139, %v5090, 0.0
  %v5145 = vadd.f32 %v5143, %v5144
  %v5146 = vsel %vm1139, %v5091, 0.0
  %v5147 = vadd.f32 %v5145, %v5146
  %v5148 = vsel %vm1139, %v5092, 0.0
  %v5149 = vadd.f32 %v5147, %v5148
  %v5150 = vsel %vm1139, %v5093, 0.0
  %v5151 = vadd.f32 %v5149, %v5150
  %v5152 = vsel %vm1139, %v5094, 0.0
  %v5153 = vadd.f32 %v5151, %v5152
  %v5154 = vsel %vm1139, %v5095, 0.0
  %v5155 = vadd.f32 %v5153, %v5154
  %v5156 = vsel %vm1139, %v5096, 0.0
  %v5157 = vadd.f32 %v5155, %v5156
  %v5158 = vsel %vm1139, %v5097, 0.0
  %v5159 = vadd.f32 %v5157, %v5158
  %v5160 = vsel %vm1139, %v5098, 0.0
  %v5161 = vadd.f32 %v5159, %v5160
  %v5162 = vsel %vm1139, %v5099, 0.0
  %v5163 = vadd.f32 %v5161, %v5162
  %v5164 = vsel %vm1139, %v5100, 0.0
  %v5165 = vadd.f32 %v5163, %v5164
  %v5166 = vsel %vm1139, %v5101, 0.0
  %v5167 = vadd.f32 %v5165, %v5166
  %v5168 = vsel %vm1139, %v5102, 0.0
  %v5169 = vadd.f32 %v5167, %v5168
  %v5170 = vsel %vm1139, %v5103, 0.0
  %v5171 = vadd.f32 %v5169, %v5170
  %v5172 = vsel %vm1139, %v5104, 0.0
  %v5173 = vadd.f32 %v5171, %v5172
  %v5174 = vsel %vm1139, %v5105, 0.0
  %v5175 = vadd.f32 %v5173, %v5174
  %v5176 = vsel %vm1139, %v5106, 0.0
  %v5177 = vadd.f32 %v5175, %v5176
  %v5178 = vsel %vm1139, %v5107, 0.0
  %v5179 = vadd.f32 %v5177, %v5178
  %v5180 = vsel %vm1139, %v5108, 0.0
  %v5181 = vadd.f32 %v5179, %v5180
  %v5182 = vsel %vm1139, %v5109, 0.0
  %v5183 = vadd.f32 %v5181, %v5182
  %v5184 = vsel %vm1139, %v5110, 0.0
  %v5185 = vadd.f32 %v5183, %v5184
  %v5186 = vsel %vm1139, %v5111, 0.0
  %v5187 = vadd.f32 %v5185, %v5186
  %v5188 = vsel %vm1139, %v5112, 0.0
  %v5189 = vadd.f32 %v5187, %v5188
  %v5190 = vsel %vm1139, %v5113, 0.0
  %v5191 = vadd.f32 %v5189, %v5190
  %v5192 = vsel %vm1139, %v5114, 0.0
  %v5193 = vadd.f32 %v5191, %v5192
  %v5194 = vrot.slane %v5193, 4
  %v5195 = vadd.f32 %v5193, %v5194
  %v5196 = vrot.slane %v5195, 2
  %v5197 = vadd.f32 %v5195, %v5196
  %v5198 = vrot.slane %v5197, 1
  %v5199 = vadd.f32 %v5197, %v5198
  %v5200 = vmul.f32 %v4793, %v4793
  %v5201 = vmul.f32 %v4794, %v4794
  %v5202 = vmul.f32 %v4795, %v4795
  %v5203 = vmul.f32 %v4796, %v4796
  %v5204 = vmul.f32 %v4797, %v4797
  %v5205 = vmul.f32 %v4798, %v4798
  %v5206 = vmul.f32 %v4799, %v4799
  %v5207 = vmul.f32 %v4800, %v4800
  %v5208 = vmul.f32 %v4801, %v4801
  %v5209 = vmul.f32 %v4802, %v4802
  %v5210 = vmul.f32 %v4803, %v4803
  %v5211 = vmul.f32 %v4804, %v4804
  %v5212 = vmul.f32 %v4805, %v4805
  %v5213 = vmul.f32 %v4806, %v4806
  %v5214 = vmul.f32 %v4807, %v4807
  %v5215 = vmul.f32 %v4808, %v4808
  %v5216 = vmul.f32 %v4809, %v4809
  %v5217 = vmul.f32 %v4810, %v4810
  %v5218 = vmul.f32 %v4811, %v4811
  %v5219 = vmul.f32 %v4812, %v4812
  %v5220 = vmul.f32 %v4813, %v4813
  %v5221 = vmul.f32 %v4814, %v4814
  %v5222 = vmul.f32 %v4815, %v4815
  %v5223 = vmul.f32 %v4816, %v4816
  %v5224 = vmul.f32 %v4817, %v4817
  %v5225 = vmul.f32 %v4818, %v4818
  %v5226 = vmul.f32 %v4819, %v4819
  %v5227 = vmul.f32 %v4820, %v4820
  %v5228 = vmul.f32 %v4821, %v4821
  %v5229 = vmul.f32 %v4822, %v4822
  %v5230 = vmul.f32 %v4823, %v4823
  %v5231 = vmul.f32 %v4824, %v4824
  %v5232 = vmul.f32 %v4825, %v4825
  %v5233 = vmul.f32 %v4826, %v4826
  %v5234 = vmul.f32 %v4827, %v4827
  %v5235 = vmul.f32 %v4828, %v4828
  %v5236 = vmul.f32 %v4829, %v4829
  %v5237 = vmul.f32 %v4830, %v4830
  %v5238 = vmul.f32 %v4831, %v4831
  %v5239 = vmul.f32 %v4832, %v4832
  %v5240 = vmul.f32 %v5200, %v4878
  %v5241 = vmul.f32 %v5201, %v4883
  %v5242 = vmul.f32 %v5202, %v4888
  %v5243 = vmul.f32 %v5203, %v4893
  %v5244 = vmul.f32 %v5204, %v4898
  %v5245 = vmul.f32 %v5205, %v4903
  %v5246 = vmul.f32 %v5206, %v4908
  %v5247 = vmul.f32 %v5207, %v4913
  %v5248 = vmul.f32 %v5208, %v4918
  %v5249 = vmul.f32 %v5209, %v4923
  %v5250 = vmul.f32 %v5210, %v4928
  %v5251 = vmul.f32 %v5211, %v4933
  %v5252 = vmul.f32 %v5212, %v4938
  %v5253 = vmul.f32 %v5213, %v4943
  %v5254 = vmul.f32 %v5214, %v4948
  %v5255 = vmul.f32 %v5215, %v4953
  %v5256 = vmul.f32 %v5216, %v4958
  %v5257 = vmul.f32 %v5217, %v4963
  %v5258 = vmul.f32 %v5218, %v4968
  %v5259 = vmul.f32 %v5219, %v4973
  %v5260 = vmul.f32 %v5220, %v4978
  %v5261 = vmul.f32 %v5221, %v4983
  %v5262 = vmul.f32 %v5222, %v4988
  %v5263 = vmul.f32 %v5223, %v4993
  %v5264 = vmul.f32 %v5224, %v4998
  %v5265 = vmul.f32 %v5225, %v5003
  %v5266 = vmul.f32 %v5226, %v5008
  %v5267 = vmul.f32 %v5227, %v5013
  %v5268 = vmul.f32 %v5228, %v5018
  %v5269 = vmul.f32 %v5229, %v5023
  %v5270 = vmul.f32 %v5230, %v5028
  %v5271 = vmul.f32 %v5231, %v5033
  %v5272 = vmul.f32 %v5232, %v5038
  %v5273 = vmul.f32 %v5233, %v5043
  %v5274 = vmul.f32 %v5234, %v5048
  %v5275 = vmul.f32 %v5235, %v5053
  %v5276 = vmul.f32 %v5236, %v5058
  %v5277 = vmul.f32 %v5237, %v5063
  %v5278 = vmul.f32 %v5238, %v5068
  %v5279 = vmul.f32 %v5239, %v5073
  %v5280 = vsel %vm1139, %v5240, 0.0
  %v5281 = vsel %vm1139, %v5241, 0.0
  %v5282 = vadd.f32 %v5280, %v5281
  %v5283 = vsel %vm1139, %v5242, 0.0
  %v5284 = vadd.f32 %v5282, %v5283
  %v5285 = vsel %vm1139, %v5243, 0.0
  %v5286 = vadd.f32 %v5284, %v5285
  %v5287 = vsel %vm1139, %v5244, 0.0
  %v5288 = vadd.f32 %v5286, %v5287
  %v5289 = vsel %vm1139, %v5245, 0.0
  %v5290 = vadd.f32 %v5288, %v5289
  %v5291 = vsel %vm1139, %v5246, 0.0
  %v5292 = vadd.f32 %v5290, %v5291
  %v5293 = vsel %vm1139, %v5247, 0.0
  %v5294 = vadd.f32 %v5292, %v5293
  %v5295 = vsel %vm1139, %v5248, 0.0
  %v5296 = vadd.f32 %v5294, %v5295
  %v5297 = vsel %vm1139, %v5249, 0.0
  %v5298 = vadd.f32 %v5296, %v5297
  %v5299 = vsel %vm1139, %v5250, 0.0
  %v5300 = vadd.f32 %v5298, %v5299
  %v5301 = vsel %vm1139, %v5251, 0.0
  %v5302 = vadd.f32 %v5300, %v5301
  %v5303 = vsel %vm1139, %v5252, 0.0
  %v5304 = vadd.f32 %v5302, %v5303
  %v5305 = vsel %vm1139, %v5253, 0.0
  %v5306 = vadd.f32 %v5304, %v5305
  %v5307 = vsel %vm1139, %v5254, 0.0
  %v5308 = vadd.f32 %v5306, %v5307
  %v5309 = vsel %vm1139, %v5255, 0.0
  %v5310 = vadd.f32 %v5308, %v5309
  %v5311 = vsel %vm1139, %v5256, 0.0
  %v5312 = vadd.f32 %v5310, %v5311
  %v5313 = vsel %vm1139, %v5257, 0.0
  %v5314 = vadd.f32 %v5312, %v5313
  %v5315 = vsel %vm1139, %v5258, 0.0
  %v5316 = vadd.f32 %v5314, %v5315
  %v5317 = vsel %vm1139, %v5259, 0.0
  %v5318 = vadd.f32 %v5316, %v5317
  %v5319 = vsel %vm1139, %v5260, 0.0
  %v5320 = vadd.f32 %v5318, %v5319
  %v5321 = vsel %vm1139, %v5261, 0.0
  %v5322 = vadd.f32 %v5320, %v5321
  %v5323 = vsel %vm1139, %v5262, 0.0
  %v5324 = vadd.f32 %v5322, %v5323
  %v5325 = vsel %vm1139, %v5263, 0.0
  %v5326 = vadd.f32 %v5324, %v5325
  %v5327 = vsel %vm1139, %v5264, 0.0
  %v5328 = vadd.f32 %v5326, %v5327
  %v5329 = vsel %vm1139, %v5265, 0.0
  %v5330 = vadd.f32 %v5328, %v5329
  %v5331 = vsel %vm1139, %v5266, 0.0
  %v5332 = vadd.f32 %v5330, %v5331
  %v5333 = vsel %vm1139, %v5267, 0.0
  %v5334 = vadd.f32 %v5332, %v5333
  %v5335 = vsel %vm1139, %v5268, 0.0
  %v5336 = vadd.f32 %v5334, %v5335
  %v5337 = vsel %vm1139, %v5269, 0.0
  %v5338 = vadd.f32 %v5336, %v5337
  %v5339 = vsel %vm1139, %v5270, 0.0
  %v5340 = vadd.f32 %v5338, %v5339
  %v5341 = vsel %vm1139, %v5271, 0.0
  %v5342 = vadd.f32 %v5340, %v5341
  %v5343 = vsel %vm1139, %v5272, 0.0
  %v5344 = vadd.f32 %v5342, %v5343
  %v5345 = vsel %vm1139, %v5273, 0.0
  %v5346 = vadd.f32 %v5344, %v5345
  %v5347 = vsel %vm1139, %v5274, 0.0
  %v5348 = vadd.f32 %v5346, %v5347
  %v5349 = vsel %vm1139, %v5275, 0.0
  %v5350 = vadd.f32 %v5348, %v5349
  %v5351 = vsel %vm1139, %v5276, 0.0
  %v5352 = vadd.f32 %v5350, %v5351
  %v5353 = vsel %vm1139, %v5277, 0.0
  %v5354 = vadd.f32 %v5352, %v5353
  %v5355 = vsel %vm1139, %v5278, 0.0
  %v5356 = vadd.f32 %v5354, %v5355
  %v5357 = vsel %vm1139, %v5279, 0.0
  %v5358 = vadd.f32 %v5356, %v5357
  %v5359 = vrot.slane %v5358, 4
  %v5360 = vadd.f32 %v5358, %v5359
  %v5361 = vrot.slane %v5360, 2
  %v5362 = vadd.f32 %v5360, %v5361
  %v5363 = vrot.slane %v5362, 1
  %v5364 = vadd.f32 %v5362, %v5363
  %vm5365 = vcmask 1040384
  %v5366 = vsel %vm5365, %v5199, %v5364
  %vm5367 = vcmask 254976
  %5368 = vst.msk [vmem:[%s6] sm:$0x3] %vm5367, %v5366
  %v5369 = vpack.c.bf16 %v4794, %v4793
  %v5370 = vpack.c.bf16 %v4796, %v4795
  %v5371 = vpack.c.bf16 %v4798, %v4797
  %v5372 = vpack.c.bf16 %v4800, %v4799
  %v5373 = vpack.c.bf16 %v4802, %v4801
  %v5374 = vpack.c.bf16 %v4804, %v4803
  %v5375 = vpack.c.bf16 %v4806, %v4805
  %v5376 = vpack.c.bf16 %v4808, %v4807
  %v5377 = vpack.c.bf16 %v4810, %v4809
  %v5378 = vpack.c.bf16 %v4812, %v4811
  %v5379 = vpack.c.bf16 %v4814, %v4813
  %v5380 = vpack.c.bf16 %v4816, %v4815
  %v5381 = vpack.c.bf16 %v4818, %v4817
  %v5382 = vpack.c.bf16 %v4820, %v4819
  %v5383 = vpack.c.bf16 %v4822, %v4821
  %v5384 = vpack.c.bf16 %v4824, %v4823
  %v5385 = vpack.c.bf16 %v4826, %v4825
  %v5386 = vpack.c.bf16 %v4828, %v4827
  %v5387 = vpack.c.bf16 %v4830, %v4829
  %v5388 = vpack.c.bf16 %v4832, %v4831
  %v5409 = vunpack.c.l.b16 %v5369
  %v5410 = vunpack.c.h.b16 %v5369
  %v5411 = vunpack.c.l.b16 %v5370
  %v5412 = vunpack.c.h.b16 %v5370
  %v5413 = vunpack.c.l.b16 %v5371
  %v5414 = vunpack.c.h.b16 %v5371
  %v5415 = vunpack.c.l.b16 %v5372
  %v5416 = vunpack.c.h.b16 %v5372
  %v5417 = vunpack.c.l.b16 %v5373
  %v5418 = vunpack.c.h.b16 %v5373
  %v5419 = vunpack.c.l.b16 %v5374
  %v5420 = vunpack.c.h.b16 %v5374
  %v5421 = vunpack.c.l.b16 %v5375
  %v5422 = vunpack.c.h.b16 %v5375
  %v5423 = vunpack.c.l.b16 %v5376
  %v5424 = vunpack.c.h.b16 %v5376
  %v5425 = vunpack.c.l.b16 %v5377
  %v5426 = vunpack.c.h.b16 %v5377
  %v5427 = vunpack.c.l.b16 %v5378
  %v5428 = vunpack.c.h.b16 %v5378
  %v5429 = vunpack.c.l.b16 %v5379
  %v5430 = vunpack.c.h.b16 %v5379
  %v5431 = vunpack.c.l.b16 %v5380
  %v5432 = vunpack.c.h.b16 %v5380
  %v5433 = vunpack.c.l.b16 %v5381
  %v5434 = vunpack.c.h.b16 %v5381
  %v5435 = vunpack.c.l.b16 %v5382
  %v5436 = vunpack.c.h.b16 %v5382
  %v5437 = vunpack.c.l.b16 %v5383
  %v5438 = vunpack.c.h.b16 %v5383
  %v5439 = vunpack.c.l.b16 %v5384
  %v5440 = vunpack.c.h.b16 %v5384
  %v5441 = vunpack.c.l.b16 %v5385
  %v5442 = vunpack.c.h.b16 %v5385
  %v5443 = vunpack.c.l.b16 %v5386
  %v5444 = vunpack.c.h.b16 %v5386
  %v5445 = vunpack.c.l.b16 %v5387
  %v5446 = vunpack.c.h.b16 %v5387
  %v5447 = vunpack.c.l.b16 %v5388
  %v5448 = vunpack.c.h.b16 %v5388
  %v5449 = vpack.c.b16 %v5409, %v5409
  %v5450 = vpack.c.b16 %v5410, %v5410
  %v5451 = vpack.c.b16 %v5411, %v5411
  %v5452 = vpack.c.b16 %v5412, %v5412
  %v5453 = vpack.c.b16 %v5413, %v5413
  %v5454 = vpack.c.b16 %v5414, %v5414
  %v5455 = vpack.c.b16 %v5415, %v5415
  %v5456 = vpack.c.b16 %v5416, %v5416
  %v5457 = vpack.c.b16 %v5417, %v5417
  %v5458 = vpack.c.b16 %v5418, %v5418
  %v5459 = vpack.c.b16 %v5419, %v5419
  %v5460 = vpack.c.b16 %v5420, %v5420
  %v5461 = vpack.c.b16 %v5421, %v5421
  %v5462 = vpack.c.b16 %v5422, %v5422
  %v5463 = vpack.c.b16 %v5423, %v5423
  %v5464 = vpack.c.b16 %v5424, %v5424
  %v5465 = vpack.c.b16 %v5425, %v5425
  %v5466 = vpack.c.b16 %v5426, %v5426
  %v5467 = vpack.c.b16 %v5427, %v5427
  %v5468 = vpack.c.b16 %v5428, %v5428
  %v5469 = vpack.c.b16 %v5429, %v5429
  %v5470 = vpack.c.b16 %v5430, %v5430
  %v5471 = vpack.c.b16 %v5431, %v5431
  %v5472 = vpack.c.b16 %v5432, %v5432
  %v5473 = vpack.c.b16 %v5433, %v5433
  %v5474 = vpack.c.b16 %v5434, %v5434
  %v5475 = vpack.c.b16 %v5435, %v5435
  %v5476 = vpack.c.b16 %v5436, %v5436
  %v5477 = vpack.c.b16 %v5437, %v5437
  %v5478 = vpack.c.b16 %v5438, %v5438
  %v5479 = vpack.c.b16 %v5439, %v5439
  %v5480 = vpack.c.b16 %v5440, %v5440
  %v5481 = vpack.c.b16 %v5441, %v5441
  %v5482 = vpack.c.b16 %v5442, %v5442
  %v5483 = vpack.c.b16 %v5443, %v5443
  %v5484 = vpack.c.b16 %v5444, %v5444
  %v5485 = vpack.c.b16 %v5445, %v5445
  %v5486 = vpack.c.b16 %v5446, %v5446
  %v5487 = vpack.c.b16 %v5447, %v5447
  %v5488 = vpack.c.b16 %v5448, %v5448
  %5529 = vst.msk [vmem:[%s5] sm:$0xf] %vm764, %v5449
  %5530 = vst.msk [vmem:[%s5 + $0x4] sm:$0xf] %vm764, %v5450
  %5531 = vst.msk [vmem:[%s5 + $0x8] sm:$0xf] %vm764, %v5451
  %5532 = vst.msk [vmem:[%s5 + $0xc] sm:$0xf] %vm764, %v5452
  %5533 = vst.msk [vmem:[%s5 + $0x10] sm:$0xf] %vm764, %v5453
  %5534 = vst.msk [vmem:[%s5 + $0x14] sm:$0xf] %vm764, %v5454
  %5535 = vst.msk [vmem:[%s5 + $0x18] sm:$0xf] %vm764, %v5455
  %5536 = vst.msk [vmem:[%s5 + $0x1c] sm:$0xf] %vm764, %v5456
  %5537 = vst.msk [vmem:[%s5 + $0x20] sm:$0xf] %vm764, %v5457
  %5538 = vst.msk [vmem:[%s5 + $0x24] sm:$0xf] %vm764, %v5458
  %5539 = vst.msk [vmem:[%s5 + $0x28] sm:$0xf] %vm764, %v5459
  %5540 = vst.msk [vmem:[%s5 + $0x2c] sm:$0xf] %vm764, %v5460
  %5541 = vst.msk [vmem:[%s5 + $0x30] sm:$0xf] %vm764, %v5461
  %5542 = vst.msk [vmem:[%s5 + $0x34] sm:$0xf] %vm764, %v5462
  %5543 = vst.msk [vmem:[%s5 + $0x38] sm:$0xf] %vm764, %v5463
  %5544 = vst.msk [vmem:[%s5 + $0x3c] sm:$0xf] %vm764, %v5464
  %5545 = vst.msk [vmem:[%s5 + $0x40] sm:$0xf] %vm764, %v5465
  %5546 = vst.msk [vmem:[%s5 + $0x44] sm:$0xf] %vm764, %v5466
  %5547 = vst.msk [vmem:[%s5 + $0x48] sm:$0xf] %vm764, %v5467
  %5548 = vst.msk [vmem:[%s5 + $0x4c] sm:$0xf] %vm764, %v5468
  %5549 = vst.msk [vmem:[%s5 + $0x50] sm:$0xf] %vm764, %v5469
  %5550 = vst.msk [vmem:[%s5 + $0x54] sm:$0xf] %vm764, %v5470
  %5551 = vst.msk [vmem:[%s5 + $0x58] sm:$0xf] %vm764, %v5471
  %5552 = vst.msk [vmem:[%s5 + $0x5c] sm:$0xf] %vm764, %v5472
  %5553 = vst.msk [vmem:[%s5 + $0x60] sm:$0xf] %vm764, %v5473
  %5554 = vst.msk [vmem:[%s5 + $0x64] sm:$0xf] %vm764, %v5474
  %5555 = vst.msk [vmem:[%s5 + $0x68] sm:$0xf] %vm764, %v5475
  %5556 = vst.msk [vmem:[%s5 + $0x6c] sm:$0xf] %vm764, %v5476
  %5557 = vst.msk [vmem:[%s5 + $0x70] sm:$0xf] %vm764, %v5477
  %5558 = vst.msk [vmem:[%s5 + $0x74] sm:$0xf] %vm764, %v5478
  %5559 = vst.msk [vmem:[%s5 + $0x78] sm:$0xf] %vm764, %v5479
  %5560 = vst.msk [vmem:[%s5 + $0x7c] sm:$0xf] %vm764, %v5480
  %5561 = vst.msk [vmem:[%s5 + $0x80] sm:$0xf] %vm764, %v5481
  %5562 = vst.msk [vmem:[%s5 + $0x84] sm:$0xf] %vm764, %v5482
  %5563 = vst.msk [vmem:[%s5 + $0x88] sm:$0xf] %vm764, %v5483
  %5564 = vst.msk [vmem:[%s5 + $0x8c] sm:$0xf] %vm764, %v5484
  %5565 = vst.msk [vmem:[%s5 + $0x90] sm:$0xf] %vm764, %v5485
  %5566 = vst.msk [vmem:[%s5 + $0x94] sm:$0xf] %vm764, %v5486
  %5567 = vst.msk [vmem:[%s5 + $0x98] sm:$0xf] %vm764, %v5487
  %5568 = vst.msk [vmem:[%s5 + $0x9c] sm:$0xf] %vm764, %v5488
  // Predicated region
  $region22: #{basic_block_forward.4} parent=0 // pred_check
    _
  $region23: #{basic_block_forward.4} parent=0 // pred_check_branch
    %5570 = sbr.rel (0) target = $region25
  $region24: #{basic_block_forward.4} parent=0 // pred_region
    _
  $region25: #{basic_block_forward.4} parent=0 // pred_fallthru
    _
  // Predicated region
  $region26: #{basic_block_forward.4} parent=0 // pred_check
    _
  $region27: #{basic_block_forward.4} parent=0 // pred_check_branch
    %5572 = sbr.rel (0) target = $region29
  $region28: #{basic_block_forward.4} parent=0 // pred_region
    _
  $region29: #{basic_block_forward.4} parent=0 // pred_fallthru
    _
  // Predicated region
  $region30: #{basic_block_forward.4} parent=0 // pred_check
    _
  $region31: #{basic_block_forward.4} parent=0 // pred_check_branch
    %5574 = sbr.rel (0) target = $region33
  $region32: #{basic_block_forward.4} parent=0 // pred_region
    _
  $region33: #{basic_block_forward.4} parent=0 // pred_fallthru
    _
  // Predicated region
  $region34: #{basic_block_forward.4} parent=0 // pred_check
    _
  $region35: #{basic_block_forward.4} parent=0 // pred_check_branch
    %5576 = sbr.rel (0) target = $region37
  $region36: #{basic_block_forward.4} parent=0 // pred_region
    _
  $region37: #{basic_block_forward.4} parent=0 // pred_fallthru
    _

</llo_original>
